<compile_context>
chip_gen: v7x
topology: tpu7x:2x2x1
jax: 0.10.0
libtpu: 0.0.40
codegen_flags: <defaults>
</compile_context>

<pallas_src>
import jax
import jax.numpy as jnp
from jax import lax
from jax.experimental import pallas as pl
from jax.experimental.pallas import tpu as pltpu

_EPS = 1e-5  # PyTorch GroupNorm default eps


# --------------------------------------------------------------------------
# Hardware-aware helpers
# --------------------------------------------------------------------------
def _vmem_capacity_bytes():
    try:
        return int(pltpu.get_tpu_info().vmem_capacity_bytes)
    except Exception:
        return 128 << 20


def _prefer_multi_step():
    """True on multi-TensorCore parts (keep >=2 grid steps for megacore)."""
    try:
        kind = jax.devices()[0].device_kind.lower()
    except Exception:
        return True
    single_tc = ("v5 lite" in kind or "v5e" in kind or
                 "v6 lite" in kind or "v6e" in kind)
    return not single_tc


_SINGLE_BUF = None


def _single_buffer_supported():
    """Probe once whether pipeline_mode=pl.Buffered(1) is accepted."""
    global _SINGLE_BUF
    if _SINGLE_BUF is None:
        try:
            def _k(x_ref, o_ref):
                o_ref[...] = x_ref[...]

            xp = jnp.zeros((8, 128), jnp.float32)
            r = pl.pallas_call(
                _k,
                out_shape=jax.ShapeDtypeStruct((8, 128), jnp.float32),
                grid=(2,),
                in_specs=[pl.BlockSpec((8, 128), lambda i: (0, 0),
                                       pipeline_mode=pl.Buffered(1))],
                out_specs=pl.BlockSpec((8, 128), lambda i: (0, 0)),
            )(xp)
            jax.block_until_ready(r)
            _SINGLE_BUF = True
        except Exception:
            _SINGLE_BUF = False
    return _SINGLE_BUF


def _pick_bgb(bg, cgp, hwp, hwc, *, prefer_multi_step, act_budget, const_budget):
    """How many (batch*group) images one grid step owns (lanes = bgb*hwp)."""
    fits = []
    for d in range(1, bg + 1):
        if bg % d:
            continue
        n = d * hwp
        npool = d * hwc
        # pool / expand / mask constants (single-buffered, lane/sublane padded)
        const_b = 4 * (n * max(npool, 128) + 2 * npool * n + 48 * n)
        # ~12 live f32 slabs + 9-tap stack + pipeline buffers, all (cgp, n) f32
        act_b = 4 * 24 * cgp * n
        if const_b <= const_budget and act_b <= act_budget:
            fits.append(d)
    if not fits:
        return 1
    if prefer_multi_step:
        multi = [d for d in fits if bg // d >= 2]
        if multi:
            return max(multi)
    return max(fits)


# --------------------------------------------------------------------------
# Kernel
# --------------------------------------------------------------------------
def _make_ema_kernel(img_w, n_lanes):
    """`img_w` fixes the static 3x3 lane shifts; `n_lanes` the roll modulus."""

    def kernel(x_ref, poolrc_ref, expr_ref, expc_ref, gmean_ref, gexp_ref,
               mask_ref, w1_ref, w3_ref, pvec_ref, out_ref):
        f32 = jnp.float32
        xf = x_ref[...].astype(f32)                      # (Cp, N)

        b1 = pvec_ref[:, 0:1]                            # (Cp, 1) conv1x1 bias
        b3 = pvec_ref[:, 1:2]                            # (Cp, 1) conv3x3 bias
        gnw = pvec_ref[:, 2:3]                           # (Cp, 1) GroupNorm weight
        gnb = pvec_ref[:, 3:4]                           # (Cp, 1) GroupNorm bias
        row_keep = pvec_ref[:, 4:5]                      # 0 real rows, -1e30 pad rows

        gmean = gmean_ref[...]                           # (G, N): valid-lane / (h*w)
        gexp = gexp_ref[...]                             # (G, N): 0/1 lane membership

        # ---- directional avg pools + shared 1x1 conv on concatenated [h|w] axis
        xpool = jnp.dot(xf, poolrc_ref[...], preferred_element_type=f32)        # (Cp, G*(h+w))
        gates = jax.nn.sigmoid(
            jnp.dot(w1_ref[...], xpool, preferred_element_type=f32) + b1)       # (Cp, G*(h+w))
        g_h = jnp.dot(gates, expr_ref[...], preferred_element_type=f32)         # (Cp, N)
        g_w = jnp.dot(gates, expc_ref[...], preferred_element_type=f32)         # (Cp, N)

        # ---- gated features + per-(image, channel) GroupNorm (groups == channels)
        xs = xf * g_h * g_w
        dn = (((1,), (1,)), ((), ()))                    # contract lanes: (Cp,N)x(G,N)->(Cp,G)
        mu = lax.dot_general(xs, gmean, dn, preferred_element_type=f32)
        cen = xs - jnp.dot(mu, gexp, preferred_element_type=f32)
        var = lax.dot_general(cen * cen, gmean, dn, preferred_element_type=f32)
        inv = lax.rsqrt(var + _EPS)
        x1 = cen * jnp.dot(inv, gexp, preferred_element_type=f32) * gnw + gnb   # (Cp, N)

        # ---- 3x3 SAME conv: 9 rolled+masked taps stacked along K, ONE MXU dot
        taps = []
        for k in range(9):
            dy, dx = k // 3 - 1, k % 3 - 1
            sh = (-(dy * img_w + dx)) % n_lanes          # out[p] = xf[p + dy*w + dx]
            t = xf if sh == 0 else pltpu.roll(xf, sh, axis=1)
            taps.append(t * mask_ref[k:k + 1, :])
        tcat = jnp.concatenate(taps, axis=0)                                     # (9*Cp, N)
        x2 = jnp.dot(w3_ref[...], tcat, preferred_element_type=f32) + b3         # (Cp, N)

        # ---- cross-branch attention: per-image softmax over the Cg channels
        m1 = lax.dot_general(x1, gmean, dn, preferred_element_type=f32) + row_keep
        m2 = lax.dot_general(x2, gmean, dn, preferred_element_type=f32) + row_keep
        e1 = jnp.exp(m1 - jnp.max(m1, axis=0, keepdims=True))    # exact per-group max
        e2 = jnp.exp(m2 - jnp.max(m2, axis=0, keepdims=True))
        s1 = e1 / jnp.sum(e1, axis=0, keepdims=True)
        s2 = e2 / jnp.sum(e2, axis=0, keepdims=True)
        s1f = jnp.dot(s1, gexp, preferred_element_type=f32)                      # (Cp, N)
        s2f = jnp.dot(s2, gexp, preferred_element_type=f32)
        wmap = jnp.sum(s1f * x2 + s2f * x1, axis=0, keepdims=True)               # (1, N)

        out_ref[...] = (xf * jax.nn.sigmoid(wmap)).astype(out_ref.dtype)

    return kernel


# --------------------------------------------------------------------------
# Wrapper
# --------------------------------------------------------------------------
def ema_forward(x, params, factor):
    b, c, h, w = x.shape
    g = int(factor)
    assert c % g == 0 and (c // g) > 0
    cg = c // g
    bg = b * g
    hw = h * w
    hwp = ((hw + 127) // 128) * 128                 # lane-dense spatial length per image
    cgp = ((cg + 7) // 8) * 8                       # sublane-aligned channel rows
    hwc = h + w
    f32 = jnp.float32

    # ---- activations: (channel-in-group, batch*group * padded-spatial) slab
    gx = x.reshape(bg, cg, hw).transpose(1, 0, 2)   # (cg, bg, hw)
    gx = jnp.pad(gx, ((0, cgp - cg), (0, 0), (0, hwp - hw)))
    xf = gx.reshape(cgp, bg * hwp)

    # ---- generation-aware block sizing & VMEM limit
    cap = _vmem_capacity_bytes()
    vmem_limit = int(min((cap * 3) // 4, 64 << 20))
    bgb = _pick_bgb(
        bg, cgp, hwp, hwc,
        prefer_multi_step=_prefer_multi_step(),
        act_budget=(12 << 20) if cap >= (96 << 20) else (8 << 20),
        const_budget=4 << 20)
    n = bgb * hwp
    npool = bgb * hwc
    grid = (bg // bgb,)

    # ---- per-image spatial helper matrices
    q = jnp.arange(hwp, dtype=jnp.int32)
    r_idx, c_idx = q // w, q % w
    valid = q < hw
    pool_h = ((r_idx[:, None] == jnp.arange(h)[None, :]) & valid[:, None]).astype(f32)  # (hwp, h)
    pool_w = ((c_idx[:, None] == jnp.arange(w)[None, :]) & valid[:, None]).astype(f32)  # (hwp, w)
    eye_b = jnp.eye(bgb, dtype=f32)

    # fused [row-pool | col-pool] means, block-diagonal over the images of one block
    poolrc = jnp.kron(eye_b, jnp.concatenate([pool_h / w, pool_w / h], axis=1))          # (n, npool)
    # sigmoid-gate expansions back to lanes (h-gate rows | 0) and (0 | w-gate rows)
    expr = jnp.kron(eye_b, jnp.concatenate([pool_h.T, jnp.zeros((w, hwp), f32)], axis=0))  # (npool, n)
    expc = jnp.kron(eye_b, jnp.concatenate([jnp.zeros((h, hwp), f32), pool_w.T], axis=0))  # (npool, n)
    # per-image GAP weights (true 1/hw, zero at padded lanes) and lane membership
    gmean = jnp.kron(eye_b, (valid.astype(f32) / hw)[None, :])                             # (bgb, n)
    gexp = jnp.kron(eye_b, jnp.ones((1, hwp), f32))                                        # (bgb, n)

    # 3x3 SAME-padding validity masks (also zero the padded lanes)
    masks = []
    for dy in (-1, 0, 1):
        for dx in (-1, 0, 1):
            ok = (valid & (r_idx + dy >= 0) & (r_idx + dy < h) &
                  (c_idx + dx >= 0) & (c_idx + dx < w))
            masks.append(ok)
    mask9 = jnp.tile(jnp.stack(masks).astype(f32), (1, bgb))                               # (9, n)

    # ---- learned weights: contraction K == cg (padded to cgp), no kron expansion
    w1 = jnp.zeros((cgp, cgp), f32).at[:cg, :cg].set(
        params["conv1x1_w"].astype(f32)[:, :, 0, 0])
    w3 = jnp.zeros((cgp, cgp, 3, 3), f32).at[:cg, :cg].set(params["conv3x3_w"].astype(f32))
    w3cat = jnp.transpose(w3, (0, 2, 3, 1)).reshape(cgp, 9 * cgp)   # K ordered (ky, kx, i)

    def _padded(v):
        return jnp.zeros((cgp,), f32).at[:cg].set(v.astype(f32))

    row_keep = jnp.where(jnp.arange(cgp) < cg, 0.0, -1e30).astype(f32)
    pvec = jnp.stack([_padded(params["conv1x1_b"]), _padded(params["conv3x3_b"]),
                      _padded(params["gn_w"]), _padded(params["gn_b"]), row_keep],
                     axis=1)                                                               # (cgp, 5)

    # ---- pallas call
    ckw = {"pipeline_mode": pl.Buffered(1)} if _single_buffer_supported() else {}
    c2 = lambda i: (0, 0)

    out = pl.pallas_call(
        _make_ema_kernel(w, n),
        out_shape=jax.ShapeDtypeStruct((cgp, bg * hwp), x.dtype),
        grid_spec=pltpu.PrefetchScalarGridSpec(
            num_scalar_prefetch=0,
            grid=grid,
            in_specs=[
                pl.BlockSpec((cgp, n), lambda i: (0, i)),        # activations (lane dense)
                pl.BlockSpec((n, npool), c2, **ckw),             # fused pool matrix
                pl.BlockSpec((npool, n), c2, **ckw),             # h-gate expand
                pl.BlockSpec((npool, n), c2, **ckw),             # w-gate expand
                pl.BlockSpec((bgb, n), c2, **ckw),               # per-image GAP weights
                pl.BlockSpec((bgb, n), c2, **ckw),               # per-image lane membership
                pl.BlockSpec((9, n), c2, **ckw),                 # 3x3 validity masks
                pl.BlockSpec((cgp, cgp), c2, **ckw),             # 1x1 conv weight
                pl.BlockSpec((cgp, 9 * cgp), c2, **ckw),         # 3x3 conv weight (concat-K)
                pl.BlockSpec((cgp, 5), c2, **ckw),               # packed per-channel params
            ],
            out_specs=pl.BlockSpec((cgp, n), lambda i: (0, i)),
        ),
        compiler_params=pltpu.CompilerParams(
            dimension_semantics=("parallel",),
            vmem_limit_bytes=vmem_limit),
    )(xf, poolrc, expr, expc, gmean, gexp, mask9, w1, w3cat, pvec)

    out = out.reshape(cgp, bg, hwp)[:cg, :, :hw]
    return out.transpose(1, 0, 2).reshape(b, c, h, w)


# --------------------------------------------------------------------------
# Pure-JAX reference (mirrors the PyTorch forward) for a sanity check
# --------------------------------------------------------------------------
def ema_reference(x, params, factor):
    b, c, h, w = x.shape
    g = factor
    cg = c // g
    bg = b * g
    hp = lax.Precision.HIGHEST
    gx = x.reshape(bg, cg, h, w).astype(jnp.float32)

    x_h = jnp.mean(gx, axis=3)
    x_w = jnp.mean(gx, axis=2)
    w1 = params["conv1x1_w"][:, :, 0, 0]
    b1 = params["conv1x1_b"]
    t_h = jnp.einsum("oi,bih->boh", w1, x_h, precision=hp) + b1[None, :, None]
    t_w = jnp.einsum("oi,biw->bow", w1, x_w, precision=hp) + b1[None, :, None]

    xs = gx * jax.nn.sigmoid(t_h)[..., None] * jax.nn.sigmoid(t_w)[:, :, None, :]
    mu = jnp.mean(xs, axis=(2, 3), keepdims=True)
    var = jnp.mean((xs - mu) ** 2, axis=(2, 3), keepdims=True)
    x1 = (xs - mu) / jnp.sqrt(var + _EPS)
    x1 = x1 * params["gn_w"][None, :, None, None] + params["gn_b"][None, :, None, None]

    x2 = lax.conv_general_dilated(
        gx, params["conv3x3_w"], window_strides=(1, 1), padding="SAME",
        dimension_numbers=("NCHW", "OIHW", "NCHW"), precision=hp)
    x2 = x2 + params["conv3x3_b"][None, :, None, None]

    s1 = jax.nn.softmax(jnp.mean(x1, axis=(2, 3)), axis=-1)
    s2 = jax.nn.softmax(jnp.mean(x2, axis=(2, 3)), axis=-1)
    wmap = (jnp.einsum("bc,bchw->bhw", s1, x2, precision=hp)
            + jnp.einsum("bc,bchw->bhw", s2, x1, precision=hp))[:, None, :, :]
    return (gx * jax.nn.sigmoid(wmap)).reshape(b, c, h, w)


if __name__ == "__main__":
    key = jax.random.PRNGKey(0)
    b, c, h, w = 2, 16, 16, 16
    factor = 4                       # groups; Cg = 16 // 4 = 4
    cg = c // factor

    k_x, k1, k2, k3, k4, k5, k6 = jax.random.split(key, 7)
    x = jax.random.normal(k_x, (b, c, h, w), dtype=jnp.float32)
    params = {
        "conv1x1_w": 0.3 * jax.random.normal(k1, (cg, cg, 1, 1), dtype=jnp.float32),
        "conv1x1_b": 0.1 * jax.random.normal(k2, (cg,), dtype=jnp.float32),
        "conv3x3_w": 0.2 * jax.random.normal(k3, (cg, cg, 3, 3), dtype=jnp.float32),
        "conv3x3_b": 0.1 * jax.random.normal(k4, (cg,), dtype=jnp.float32),
        "gn_w": 1.0 + 0.1 * jax.random.normal(k5, (cg,), dtype=jnp.float32),
        "gn_b": 0.1 * jax.random.normal(k6, (cg,), dtype=jnp.float32),
    }

    _single_buffer_supported()       # prime the Buffered(1) probe outside jit

    fwd = jax.jit(lambda xx: ema_forward(xx, params, factor))
    out = jax.block_until_ready(fwd(x))

    ref = ema_reference(x, params, factor)
    err = float(jnp.max(jnp.abs(out - ref)))
    assert out.shape == (b, c, h, w)
    # Kernel uses MXU dots; reference uses HIGHEST-precision einsums -> allow slack.
    assert err < 2e-2, f"max abs error {err}"
    print("KERNEL_OK")
</pallas_src>

<mosaic_0001>
module attributes {stable_mosaic.version = 11 : i64} {
  func.func @_k(%arg0: i32, %arg1: memref<8x128xf32, #tpu.memory_space<vmem>>, %arg2: memref<8x128xf32, #tpu.memory_space<vmem>>) attributes {dimension_semantics = [#tpu.dimension_semantics<arbitrary>], iteration_bounds = array<i64: 2>, scalar_prefetch = 0 : i64, scratch_operands = 0 : i64, tpu.core_type = #tpu.core_type<tc>, window_params = [{pipeline_mode = #tpu.pipeline_mode<synchronous>, transform_indices = @transform_0, window_bounds = array<i64: 8, 128>}, {pipeline_mode = #tpu.pipeline_mode<synchronous>, transform_indices = @transform_1, window_bounds = array<i64: 8, 128>}]} {
    %c0 = arith.constant 0 : index
    %c0_0 = arith.constant 0 : index
    %0 = vector.load %arg1[%c0, %c0_0] : memref<8x128xf32, #tpu.memory_space<vmem>>, vector<8x128xf32>
    %c0_1 = arith.constant 0 : index
    %c0_2 = arith.constant 0 : index
    %1 = vector.load %arg2[%c0_1, %c0_2] : memref<8x128xf32, #tpu.memory_space<vmem>>, vector<8x128xf32>
    tpu.vector_store %arg2[%c0_1, %c0_2], %0 {strides = array<i32>} : memref<8x128xf32, #tpu.memory_space<vmem>>, vector<8x128xf32>,
    return
  }
  func.func @transform_0(%arg0: i32) -> (i32, i32) {
    %c0_i32 = arith.constant 0 : i32
    %c0_i32_0 = arith.constant 0 : i32
    %c0_i32_1 = arith.constant 0 : i32
    return %c0_i32, %c0_i32_0 : i32, i32
  }
  func.func @transform_1(%arg0: i32) -> (i32, i32) {
    %c0_i32 = arith.constant 0 : i32
    %c0_i32_0 = arith.constant 0 : i32
    %c0_i32_1 = arith.constant 0 : i32
    return %c0_i32, %c0_i32_0 : i32, i32
  }
}

module attributes {stable_mosaic.version = 11 : i64} {
  func.func @kernel(%arg0: i32, %arg1: memref<8x1024xf32, #tpu.memory_space<vmem>>, %arg2: memref<1024x128xf32, #tpu.memory_space<vmem>>, %arg3: memref<128x1024xf32, #tpu.memory_space<vmem>>, %arg4: memref<128x1024xf32, #tpu.memory_space<vmem>>, %arg5: memref<4x1024xf32, #tpu.memory_space<vmem>>, %arg6: memref<4x1024xf32, #tpu.memory_space<vmem>>, %arg7: memref<9x1024xf32, #tpu.memory_space<vmem>>, %arg8: memref<8x8xf32, #tpu.memory_space<vmem>>, %arg9: memref<8x72xf32, #tpu.memory_space<vmem>>, %arg10: memref<8x5xf32, #tpu.memory_space<vmem>>, %arg11: memref<8x1024xf32, #tpu.memory_space<vmem>>) attributes {dimension_semantics = [#tpu.dimension_semantics<parallel>], iteration_bounds = array<i64: 2>, scalar_prefetch = 0 : i64, scratch_operands = 0 : i64, tpu.core_type = #tpu.core_type<tc>, window_params = [{transform_indices = @transform_0, window_bounds = array<i64: 8, 1024>}, {pipeline_mode = #tpu.pipeline_mode<synchronous>, transform_indices = @transform_1, window_bounds = array<i64: 1024, 128>}, {pipeline_mode = #tpu.pipeline_mode<synchronous>, transform_indices = @transform_2, window_bounds = array<i64: 128, 1024>}, {pipeline_mode = #tpu.pipeline_mode<synchronous>, transform_indices = @transform_3, window_bounds = array<i64: 128, 1024>}, {pipeline_mode = #tpu.pipeline_mode<synchronous>, transform_indices = @transform_4, window_bounds = array<i64: 4, 1024>}, {pipeline_mode = #tpu.pipeline_mode<synchronous>, transform_indices = @transform_5, window_bounds = array<i64: 4, 1024>}, {pipeline_mode = #tpu.pipeline_mode<synchronous>, transform_indices = @transform_6, window_bounds = array<i64: 9, 1024>}, {pipeline_mode = #tpu.pipeline_mode<synchronous>, transform_indices = @transform_7, window_bounds = array<i64: 8, 8>}, {pipeline_mode = #tpu.pipeline_mode<synchronous>, transform_indices = @transform_8, window_bounds = array<i64: 8, 72>}, {pipeline_mode = #tpu.pipeline_mode<synchronous>, transform_indices = @transform_9, window_bounds = array<i64: 8, 5>}, {transform_indices = @transform_10, window_bounds = array<i64: 8, 1024>}]} {
    %c0 = arith.constant 0 : index
    %c0_0 = arith.constant 0 : index
    %0 = vector.load %arg1[%c0, %c0_0] : memref<8x1024xf32, #tpu.memory_space<vmem>>, vector<8x1024xf32>
    %c0_1 = arith.constant 0 : index
    %c0_2 = arith.constant 0 : index
    %1 = vector.load %arg10[%c0_1, %c0_2] : memref<8x5xf32, #tpu.memory_space<vmem>>, vector<8x1xf32>
    %c0_3 = arith.constant 0 : index
    %c1 = arith.constant 1 : index
    %2 = vector.load %arg10[%c0_3, %c1] : memref<8x5xf32, #tpu.memory_space<vmem>>, vector<8x1xf32>
    %c0_4 = arith.constant 0 : index
    %c2 = arith.constant 2 : index
    %3 = vector.load %arg10[%c0_4, %c2] : memref<8x5xf32, #tpu.memory_space<vmem>>, vector<8x1xf32>
    %c0_5 = arith.constant 0 : index
    %c3 = arith.constant 3 : index
    %4 = vector.load %arg10[%c0_5, %c3] : memref<8x5xf32, #tpu.memory_space<vmem>>, vector<8x1xf32>
    %c0_6 = arith.constant 0 : index
    %c4 = arith.constant 4 : index
    %5 = vector.load %arg10[%c0_6, %c4] : memref<8x5xf32, #tpu.memory_space<vmem>>, vector<8x1xf32>
    %c0_7 = arith.constant 0 : index
    %c0_8 = arith.constant 0 : index
    %6 = vector.load %arg5[%c0_7, %c0_8] : memref<4x1024xf32, #tpu.memory_space<vmem>>, vector<4x1024xf32>
    %c0_9 = arith.constant 0 : index
    %c0_10 = arith.constant 0 : index
    %7 = vector.load %arg6[%c0_9, %c0_10] : memref<4x1024xf32, #tpu.memory_space<vmem>>, vector<4x1024xf32>
    %c0_11 = arith.constant 0 : index
    %c0_12 = arith.constant 0 : index
    %8 = vector.load %arg2[%c0_11, %c0_12] : memref<1024x128xf32, #tpu.memory_space<vmem>>, vector<1024x128xf32>
    %cst = arith.constant dense<0.000000e+00> : vector<8x128xf32>
    %9 = tpu.matmul %0, %8, %cst {dimension_numbers = #tpu.dot_dimension_numbers<[1], [0], [0], [1], [0, 0, 1, 1], [], []>} : vector<8x1024xf32>, vector<1024x128xf32>, vector<8x128xf32> -> vector<8x128xf32>
    %c0_13 = arith.constant 0 : index
    %c0_14 = arith.constant 0 : index
    %10 = vector.load %arg8[%c0_13, %c0_14] : memref<8x8xf32, #tpu.memory_space<vmem>>, vector<8x8xf32>
    %cst_15 = arith.constant dense<0.000000e+00> : vector<8x128xf32>
    %11 = tpu.matmul %10, %9, %cst_15 {dimension_numbers = #tpu.dot_dimension_numbers<[1], [0], [0], [1], [0, 0, 1, 1], [], []>} : vector<8x8xf32>, vector<8x128xf32>, vector<8x128xf32> -> vector<8x128xf32>
    %12 = vector.broadcast %1 : vector<8x1xf32> to vector<8x128xf32>
    %13 = arith.addf %11, %12 : vector<8x128xf32>
    %14 = arith.negf %13 : vector<8x128xf32>
    %15 = math.exp %14 : vector<8x128xf32>
    %cst_16 = arith.constant 1.000000e+00 : f32
    %16 = vector.broadcast %cst_16 : f32 to vector<8x128xf32>
    %17 = arith.addf %16, %15 : vector<8x128xf32>
    %18 = arith.divf %16, %17 : vector<8x128xf32>
    %c0_17 = arith.constant 0 : index
    %c0_18 = arith.constant 0 : index
    %19 = vector.load %arg3[%c0_17, %c0_18] : memref<128x1024xf32, #tpu.memory_space<vmem>>, vector<128x1024xf32>
    %cst_19 = arith.constant dense<0.000000e+00> : vector<8x1024xf32>
    %20 = tpu.matmul %18, %19, %cst_19 {dimension_numbers = #tpu.dot_dimension_numbers<[1], [0], [0], [1], [0, 0, 1, 1], [], []>} : vector<8x128xf32>, vector<128x1024xf32>, vector<8x1024xf32> -> vector<8x1024xf32>
    %c0_20 = arith.constant 0 : index
    %c0_21 = arith.constant 0 : index
    %21 = vector.load %arg4[%c0_20, %c0_21] : memref<128x1024xf32, #tpu.memory_space<vmem>>, vector<128x1024xf32>
    %cst_22 = arith.constant dense<0.000000e+00> : vector<8x1024xf32>
    %22 = tpu.matmul %18, %21, %cst_22 {dimension_numbers = #tpu.dot_dimension_numbers<[1], [0], [0], [1], [0, 0, 1, 1], [], []>} : vector<8x128xf32>, vector<128x1024xf32>, vector<8x1024xf32> -> vector<8x1024xf32>
    %23 = arith.mulf %0, %20 : vector<8x1024xf32>
    %24 = arith.mulf %23, %22 : vector<8x1024xf32>
    %cst_23 = arith.constant dense<0.000000e+00> : vector<8x4xf32>
    %25 = tpu.matmul %24, %6, %cst_23 {dimension_numbers = #tpu.dot_dimension_numbers<[1], [1], [0], [0], [0, 0, 1, 0], [], []>} : vector<8x1024xf32>, vector<4x1024xf32>, vector<8x4xf32> -> vector<8x4xf32>
    %cst_24 = arith.constant dense<0.000000e+00> : vector<8x1024xf32>
    %26 = tpu.matmul %25, %7, %cst_24 {dimension_numbers = #tpu.dot_dimension_numbers<[1], [0], [0], [1], [0, 0, 1, 1], [], []>} : vector<8x4xf32>, vector<4x1024xf32>, vector<8x1024xf32> -> vector<8x1024xf32>
    %27 = arith.subf %24, %26 : vector<8x1024xf32>
    %28 = arith.mulf %27, %27 : vector<8x1024xf32>
    %cst_25 = arith.constant dense<0.000000e+00> : vector<8x4xf32>
    %29 = tpu.matmul %28, %6, %cst_25 {dimension_numbers = #tpu.dot_dimension_numbers<[1], [1], [0], [0], [0, 0, 1, 0], [], []>} : vector<8x1024xf32>, vector<4x1024xf32>, vector<8x4xf32> -> vector<8x4xf32>
    %cst_26 = arith.constant 9.99999974E-6 : f32
    %30 = vector.broadcast %cst_26 : f32 to vector<8x4xf32>
    %31 = arith.addf %29, %30 : vector<8x4xf32>
    %32 = math.rsqrt %31 : vector<8x4xf32>
    %cst_27 = arith.constant dense<0.000000e+00> : vector<8x1024xf32>
    %33 = tpu.matmul %32, %7, %cst_27 {dimension_numbers = #tpu.dot_dimension_numbers<[1], [0], [0], [1], [0, 0, 1, 1], [], []>} : vector<8x4xf32>, vector<4x1024xf32>, vector<8x1024xf32> -> vector<8x1024xf32>
    %34 = arith.mulf %27, %33 : vector<8x1024xf32>
    %35 = vector.broadcast %3 : vector<8x1xf32> to vector<8x1024xf32>
    %36 = arith.mulf %34, %35 : vector<8x1024xf32>
    %37 = vector.broadcast %4 : vector<8x1xf32> to vector<8x1024xf32>
    %38 = arith.addf %36, %37 : vector<8x1024xf32>
    %c17_i32 = arith.constant 17 : i32
    %39 = tpu.dynamic_rotate %0 by %c17_i32 dim 1 : vector<8x1024xf32>, i32 -> vector<8x1024xf32>
    %c0_28 = arith.constant 0 : index
    %c0_29 = arith.constant 0 : index
    %40 = vector.load %arg7[%c0_28, %c0_29] : memref<9x1024xf32, #tpu.memory_space<vmem>>, vector<1x1024xf32>
    %41 = vector.broadcast %40 : vector<1x1024xf32> to vector<8x1024xf32>
    %42 = arith.mulf %39, %41 : vector<8x1024xf32>
    %c16_i32 = arith.constant 16 : i32
    %43 = tpu.dynamic_rotate %0 by %c16_i32 dim 1 : vector<8x1024xf32>, i32 -> vector<8x1024xf32>
    %c1_30 = arith.constant 1 : index
    %c0_31 = arith.constant 0 : index
    %44 = vector.load %arg7[%c1_30, %c0_31] : memref<9x1024xf32, #tpu.memory_space<vmem>>, vector<1x1024xf32>
    %45 = vector.broadcast %44 : vector<1x1024xf32> to vector<8x1024xf32>
    %46 = arith.mulf %43, %45 : vector<8x1024xf32>
    %c15_i32 = arith.constant 15 : i32
    %47 = tpu.dynamic_rotate %0 by %c15_i32 dim 1 : vector<8x1024xf32>, i32 -> vector<8x1024xf32>
    %c2_32 = arith.constant 2 : index
    %c0_33 = arith.constant 0 : index
    %48 = vector.load %arg7[%c2_32, %c0_33] : memref<9x1024xf32, #tpu.memory_space<vmem>>, vector<1x1024xf32>
    %49 = vector.broadcast %48 : vector<1x1024xf32> to vector<8x1024xf32>
    %50 = arith.mulf %47, %49 : vector<8x1024xf32>
    %c1_i32 = arith.constant 1 : i32
    %51 = tpu.dynamic_rotate %0 by %c1_i32 dim 1 : vector<8x1024xf32>, i32 -> vector<8x1024xf32>
    %c3_34 = arith.constant 3 : index
    %c0_35 = arith.constant 0 : index
    %52 = vector.load %arg7[%c3_34, %c0_35] : memref<9x1024xf32, #tpu.memory_space<vmem>>, vector<1x1024xf32>
    %53 = vector.broadcast %52 : vector<1x1024xf32> to vector<8x1024xf32>
    %54 = arith.mulf %51, %53 : vector<8x1024xf32>
    %c4_36 = arith.constant 4 : index
    %c0_37 = arith.constant 0 : index
    %55 = vector.load %arg7[%c4_36, %c0_37] : memref<9x1024xf32, #tpu.memory_space<vmem>>, vector<1x1024xf32>
    %56 = vector.broadcast %55 : vector<1x1024xf32> to vector<8x1024xf32>
    %57 = arith.mulf %0, %56 : vector<8x1024xf32>
    %c1023_i32 = arith.constant 1023 : i32
    %58 = tpu.dynamic_rotate %0 by %c1023_i32 dim 1 : vector<8x1024xf32>, i32 -> vector<8x1024xf32>
    %c5 = arith.constant 5 : index
    %c0_38 = arith.constant 0 : index
    %59 = vector.load %arg7[%c5, %c0_38] : memref<9x1024xf32, #tpu.memory_space<vmem>>, vector<1x1024xf32>
    %60 = vector.broadcast %59 : vector<1x1024xf32> to vector<8x1024xf32>
    %61 = arith.mulf %58, %60 : vector<8x1024xf32>
    %c1009_i32 = arith.constant 1009 : i32
    %62 = tpu.dynamic_rotate %0 by %c1009_i32 dim 1 : vector<8x1024xf32>, i32 -> vector<8x1024xf32>
    %c6 = arith.constant 6 : index
    %c0_39 = arith.constant 0 : index
    %63 = vector.load %arg7[%c6, %c0_39] : memref<9x1024xf32, #tpu.memory_space<vmem>>, vector<1x1024xf32>
    %64 = vector.broadcast %63 : vector<1x1024xf32> to vector<8x1024xf32>
    %65 = arith.mulf %62, %64 : vector<8x1024xf32>
    %c1008_i32 = arith.constant 1008 : i32
    %66 = tpu.dynamic_rotate %0 by %c1008_i32 dim 1 : vector<8x1024xf32>, i32 -> vector<8x1024xf32>
    %c7 = arith.constant 7 : index
    %c0_40 = arith.constant 0 : index
    %67 = vector.load %arg7[%c7, %c0_40] : memref<9x1024xf32, #tpu.memory_space<vmem>>, vector<1x1024xf32>
    %68 = vector.broadcast %67 : vector<1x1024xf32> to vector<8x1024xf32>
    %69 = arith.mulf %66, %68 : vector<8x1024xf32>
    %c1007_i32 = arith.constant 1007 : i32
    %70 = tpu.dynamic_rotate %0 by %c1007_i32 dim 1 : vector<8x1024xf32>, i32 -> vector<8x1024xf32>
    %c8 = arith.constant 8 : index
    %c0_41 = arith.constant 0 : index
    %71 = vector.load %arg7[%c8, %c0_41] : memref<9x1024xf32, #tpu.memory_space<vmem>>, vector<1x1024xf32>
    %72 = vector.broadcast %71 : vector<1x1024xf32> to vector<8x1024xf32>
    %73 = arith.mulf %70, %72 : vector<8x1024xf32>
    %74 = tpu.concatenate %42, %46, %50, %54, %57, %61, %65, %69, %73 in 0 : vector<8x1024xf32>, vector<8x1024xf32>, vector<8x1024xf32>, vector<8x1024xf32>, vector<8x1024xf32>, vector<8x1024xf32>, vector<8x1024xf32>, vector<8x1024xf32>, vector<8x1024xf32> -> vector<72x1024xf32>
    %c0_42 = arith.constant 0 : index
    %c0_43 = arith.constant 0 : index
    %75 = vector.load %arg9[%c0_42, %c0_43] : memref<8x72xf32, #tpu.memory_space<vmem>>, vector<8x72xf32>
    %cst_44 = arith.constant dense<0.000000e+00> : vector<8x1024xf32>
    %76 = tpu.matmul %75, %74, %cst_44 {dimension_numbers = #tpu.dot_dimension_numbers<[1], [0], [0], [1], [0, 0, 1, 1], [], []>} : vector<8x72xf32>, vector<72x1024xf32>, vector<8x1024xf32> -> vector<8x1024xf32>
    %77 = vector.broadcast %2 : vector<8x1xf32> to vector<8x1024xf32>
    %78 = arith.addf %76, %77 : vector<8x1024xf32>
    %cst_45 = arith.constant dense<0.000000e+00> : vector<8x4xf32>
    %79 = tpu.matmul %38, %6, %cst_45 {dimension_numbers = #tpu.dot_dimension_numbers<[1], [1], [0], [0], [0, 0, 1, 0], [], []>} : vector<8x1024xf32>, vector<4x1024xf32>, vector<8x4xf32> -> vector<8x4xf32>
    %80 = vector.broadcast %5 : vector<8x1xf32> to vector<8x4xf32>
    %81 = arith.addf %79, %80 : vector<8x4xf32>
    %cst_46 = arith.constant dense<0.000000e+00> : vector<8x4xf32>
    %82 = tpu.matmul %78, %6, %cst_46 {dimension_numbers = #tpu.dot_dimension_numbers<[1], [1], [0], [0], [0, 0, 1, 0], [], []>} : vector<8x1024xf32>, vector<4x1024xf32>, vector<8x4xf32> -> vector<8x4xf32>
    %83 = vector.broadcast %5 : vector<8x1xf32> to vector<8x4xf32>
    %84 = arith.addf %82, %83 : vector<8x4xf32>
    %cst_47 = arith.constant dense<0xFF800000> : vector<4xf32>
    %85 = vector.multi_reduction <maximumf>, %81, %cst_47 [0] : vector<8x4xf32> to vector<4xf32>
    %86 = vector.shape_cast %85 : vector<4xf32> to vector<1x4xf32>
    %87 = vector.broadcast %86 : vector<1x4xf32> to vector<8x4xf32>
    %88 = arith.subf %81, %87 : vector<8x4xf32>
    %89 = math.exp %88 : vector<8x4xf32>
    %cst_48 = arith.constant dense<0xFF800000> : vector<4xf32>
    %90 = vector.multi_reduction <maximumf>, %84, %cst_48 [0] : vector<8x4xf32> to vector<4xf32>
    %91 = vector.shape_cast %90 : vector<4xf32> to vector<1x4xf32>
    %92 = vector.broadcast %91 : vector<1x4xf32> to vector<8x4xf32>
    %93 = arith.subf %84, %92 : vector<8x4xf32>
    %94 = math.exp %93 : vector<8x4xf32>
    %cst_49 = arith.constant dense<0.000000e+00> : vector<4xf32>
    %95 = vector.multi_reduction <add>, %89, %cst_49 [0] : vector<8x4xf32> to vector<4xf32>
    %96 = vector.shape_cast %95 : vector<4xf32> to vector<1x4xf32>
    %97 = vector.broadcast %96 : vector<1x4xf32> to vector<8x4xf32>
    %98 = arith.divf %89, %97 : vector<8x4xf32>
    %cst_50 = arith.constant dense<0.000000e+00> : vector<4xf32>
    %99 = vector.multi_reduction <add>, %94, %cst_50 [0] : vector<8x4xf32> to vector<4xf32>
    %100 = vector.shape_cast %99 : vector<4xf32> to vector<1x4xf32>
    %101 = vector.broadcast %100 : vector<1x4xf32> to vector<8x4xf32>
    %102 = arith.divf %94, %101 : vector<8x4xf32>
    %cst_51 = arith.constant dense<0.000000e+00> : vector<8x1024xf32>
    %103 = tpu.matmul %98, %7, %cst_51 {dimension_numbers = #tpu.dot_dimension_numbers<[1], [0], [0], [1], [0, 0, 1, 1], [], []>} : vector<8x4xf32>, vector<4x1024xf32>, vector<8x1024xf32> -> vector<8x1024xf32>
    %cst_52 = arith.constant dense<0.000000e+00> : vector<8x1024xf32>
    %104 = tpu.matmul %102, %7, %cst_52 {dimension_numbers = #tpu.dot_dimension_numbers<[1], [0], [0], [1], [0, 0, 1, 1], [], []>} : vector<8x4xf32>, vector<4x1024xf32>, vector<8x1024xf32> -> vector<8x1024xf32>
    %105 = arith.mulf %103, %78 : vector<8x1024xf32>
    %106 = arith.mulf %104, %38 : vector<8x1024xf32>
    %107 = arith.addf %105, %106 : vector<8x1024xf32>
    %cst_53 = arith.constant dense<0.000000e+00> : vector<1024xf32>
    %108 = vector.multi_reduction <add>, %107, %cst_53 [0] : vector<8x1024xf32> to vector<1024xf32>
    %109 = vector.shape_cast %108 : vector<1024xf32> to vector<1x1024xf32>
    %110 = arith.negf %109 : vector<1x1024xf32>
    %111 = math.exp %110 : vector<1x1024xf32>
    %cst_54 = arith.constant 1.000000e+00 : f32
    %112 = vector.broadcast %cst_54 : f32 to vector<1x1024xf32>
    %113 = arith.addf %112, %111 : vector<1x1024xf32>
    %114 = arith.divf %112, %113 : vector<1x1024xf32>
    %115 = vector.broadcast %114 : vector<1x1024xf32> to vector<8x1024xf32>
    %116 = arith.mulf %0, %115 : vector<8x1024xf32>
    %c0_55 = arith.constant 0 : index
    %c0_56 = arith.constant 0 : index
    %117 = vector.load %arg11[%c0_55, %c0_56] : memref<8x1024xf32, #tpu.memory_space<vmem>>, vector<8x1024xf32>
    tpu.vector_store %arg11[%c0_55, %c0_56], %116 {strides = array<i32>} : memref<8x1024xf32, #tpu.memory_space<vmem>>, vector<8x1024xf32>,
    return
  }
  func.func @transform_0(%arg0: i32) -> (i32, i32) {
    %c0_i32 = arith.constant 0 : i32
    %c0_i32_0 = arith.constant 0 : i32
    return %c0_i32, %arg0 : i32, i32
  }
  func.func @transform_1(%arg0: i32) -> (i32, i32) {
    %c0_i32 = arith.constant 0 : i32
    %c0_i32_0 = arith.constant 0 : i32
    %c0_i32_1 = arith.constant 0 : i32
    return %c0_i32, %c0_i32_0 : i32, i32
  }
  func.func @transform_2(%arg0: i32) -> (i32, i32) {
    %c0_i32 = arith.constant 0 : i32
    %c0_i32_0 = arith.constant 0 : i32
    %c0_i32_1 = arith.constant 0 : i32
    return %c0_i32, %c0_i32_0 : i32, i32
  }
  func.func @transform_3(%arg0: i32) -> (i32, i32) {
    %c0_i32 = arith.constant 0 : i32
    %c0_i32_0 = arith.constant 0 : i32
    %c0_i32_1 = arith.constant 0 : i32
    return %c0_i32, %c0_i32_0 : i32, i32
  }
  func.func @transform_4(%arg0: i32) -> (i32, i32) {
    %c0_i32 = arith.constant 0 : i32
    %c0_i32_0 = arith.constant 0 : i32
    %c0_i32_1 = arith.constant 0 : i32
    return %c0_i32, %c0_i32_0 : i32, i32
  }
  func.func @transform_5(%arg0: i32) -> (i32, i32) {
    %c0_i32 = arith.constant 0 : i32
    %c0_i32_0 = arith.constant 0 : i32
    %c0_i32_1 = arith.constant 0 : i32
    return %c0_i32, %c0_i32_0 : i32, i32
  }
  func.func @transform_6(%arg0: i32) -> (i32, i32) {
    %c0_i32 = arith.constant 0 : i32
    %c0_i32_0 = arith.constant 0 : i32
    %c0_i32_1 = arith.constant 0 : i32
    return %c0_i32, %c0_i32_0 : i32, i32
  }
  func.func @transform_7(%arg0: i32) -> (i32, i32) {
    %c0_i32 = arith.constant 0 : i32
    %c0_i32_0 = arith.constant 0 : i32
    %c0_i32_1 = arith.constant 0 : i32
    return %c0_i32, %c0_i32_0 : i32, i32
  }
  func.func @transform_8(%arg0: i32) -> (i32, i32) {
    %c0_i32 = arith.constant 0 : i32
    %c0_i32_0 = arith.constant 0 : i32
    %c0_i32_1 = arith.constant 0 : i32
    return %c0_i32, %c0_i32_0 : i32, i32
  }
  func.func @transform_9(%arg0: i32) -> (i32, i32) {
    %c0_i32 = arith.constant 0 : i32
    %c0_i32_0 = arith.constant 0 : i32
    %c0_i32_1 = arith.constant 0 : i32
    return %c0_i32, %c0_i32_0 : i32, i32
  }
  func.func @transform_10(%arg0: i32) -> (i32, i32) {
    %c0_i32 = arith.constant 0 : i32
    %c0_i32_0 = arith.constant 0 : i32
    return %c0_i32, %arg0 : i32, i32
  }
}

</mosaic_0001>

<llo_original>
// kernel: tpu_custom_call.1
$region0: #{tpu_custom_call.1}
  #allocation0 [shape = 'u32[]', space=smem, size = 0x4, offset = 0x4, fixed_abs, tag = 'smem constant byte address 0x4 - core index']
  #allocation1 [shape = 'u32[144,128]{1,0:T(1,128)}', space=vmem, size = 0x12000, scoped, tag = 'internal scratch']
  %s0 = inlined_call_operand.hbm [shape: f32[8,128], index: 0, kind: input, shape index: {}]
  %s1 = inlined_call_operand.hbm [shape: f32[8,128], index: 1, kind: output, shape index: {}]
  %s2 = sld [smem:[#allocation0]]
  $region41: #{tpu_custom_call.1} parent=0
    _
  %s4 = ssub.s32 1, %s2
  %s5 = scalar_select 0, %s4, %s2
  $region1: #{tpu_custom_call.1} parent=0
    #allocation2 [shape = 'u8[4096]{0}', space=vmem, size = 0x1000, scoped, tag = 'input window, operand 0, single buffered']
    #allocation3 [shape = 's32[2]{0}', space=sflag, size = 0x8, scoped, tag = 'scoped memory for tpu_custom_call.1']
    #allocation4 [shape = 's32[2]{0}', space=sflag, size = 0x8, scoped, tag = 'scoped memory for tpu_custom_call.1']
    #allocation5 [shape = 'u8[4096]{0}', space=vmem, size = 0x1000, scoped, tag = 'output window, operand 0, single buffered']
    %6 = vsyncpa [#allocation3], 0
    %7 = vsyncpa [#allocation4], 0
    loop: start=0, step=1, limit=4
    $region2: #{tpu_custom_call.1} parent=1 // loop_pre_header
      _
    $region3: #{tpu_custom_call.1} parent=1 // loop_header
      %s9 = sphi 0, %s13
      %p10 = scmp.ge.s32.totalorder %s9, 4
      %s17 = sphi 0, %s17
      %s19 = sphi 0, %s17
      %s20 = sphi 0, %s19
      %s34 = sphi 0, %s20
      %s38 = sphi 0, %s38
      %s40 = sphi 0, %s38
      %s41 = sphi 0, %s40
      %s55 = sphi 0, %s41
    $region4: #{tpu_custom_call.1} parent=1 // loop_header_branch
      %12 = sbr.rel (%p10) target = $region8
    $region5: #{tpu_custom_call.1} parent=1 // loop_body
      %s14 = ssub.s32 %s9, 1
      %s15 = ssub.s32 %s9, 2
      %s16 = sadd.s32 %s9, 1
      %s18 = sadd.s32 %s17, 1
      %p21 = scmp.eq.s32.totalorder %s9, 1
      %p22 = scmp.ne.s32.totalorder %s17, %s19
      %p23 = scmp.eq.s32.totalorder %s9, 0
      %p24 = por %p22, %p23
      %p25 = scmp.ne.s32.totalorder %s17, %s19
      %p26 = scmp.eq.s32.totalorder %s14, 1
      %p27 = por %p25, %p26
      %p28 = scmp.ne.s32.totalorder %s19, %s20
      %p29 = scmp.eq.s32.totalorder %s14, 0
      %p30 = por %p28, %p29
      %p31 = scmp.ne.s32.totalorder %s19, %s20
      %p32 = scmp.eq.s32.totalorder %s15, 1
      %p33 = por %p31, %p32
      %p35 = scmp.ne.s32.totalorder %s20, %s34
      %p36 = scmp.eq.s32.totalorder %s15, 0
      %p37 = por %p35, %p36
      %s39 = sadd.s32 %s38, 1
      %p42 = scmp.eq.s32.totalorder %s9, 1
      %p43 = scmp.ne.s32.totalorder %s38, %s40
      %p44 = scmp.eq.s32.totalorder %s9, 0
      %p45 = por %p43, %p44
      %p46 = scmp.ne.s32.totalorder %s38, %s40
      %p47 = scmp.eq.s32.totalorder %s14, 1
      %p48 = por %p46, %p47
      %p49 = scmp.ne.s32.totalorder %s40, %s41
      %p50 = scmp.eq.s32.totalorder %s14, 0
      %p51 = por %p49, %p50
      %p52 = scmp.ne.s32.totalorder %s40, %s41
      %p53 = scmp.eq.s32.totalorder %s15, 1
      %p54 = por %p52, %p53
      %p56 = scmp.ne.s32.totalorder %s41, %s55
      %p57 = scmp.eq.s32.totalorder %s15, 0
      %p58 = por %p56, %p57
      %p59 = scmp.le.s32.totalorder 1, %s9
      %p60 = scmp.lt.s32.totalorder %s9, 3
      %p61 = pnand %p59, %p60
      %p62 = pneg %p61
      // Predicated region
      $region9: #{tpu_custom_call.1} parent=5 // pred_check
        _
      $region10: #{tpu_custom_call.1} parent=5 // pred_check_branch
        %64 = sbr.rel (%p61) target = $region12
      $region11: #{tpu_custom_call.1} parent=5 // pred_region
        %s65 = ssub.s32 %s9, 1
        // Predicated region
        $region13: #{tpu_custom_call.1} parent=11 // pred_check
          %p66 = pneg %p30
        $region14: #{tpu_custom_call.1} parent=11 // pred_check_branch
          %68 = sbr.rel (%p66) target = $region16
        $region15: #{tpu_custom_call.1} parent=11 // pred_region
          %s70 = ssub.s32 128, 128
          %71 = vsyncadd [#allocation3], %s70
          %s73 = sshll.u32 [#allocation2], 4
          %s74 = int_to_ptr.vmem [resolvable:$true] %s73
          %76 = dma.hbm_to_vmem [thread:$0]  %s0, 128, %s74, [#allocation3]
        $region16: #{tpu_custom_call.1} parent=11 // pred_fallthru
          _
      $region12: #{tpu_custom_call.1} parent=5 // pred_fallthru
        _
      %p77 = scmp.lt.s32.totalorder %s9, 2
      // Predicated region
      $region17: #{tpu_custom_call.1} parent=5 // pred_check
        %p78 = pneg %p77
      $region18: #{tpu_custom_call.1} parent=5 // pred_check_branch
        %80 = sbr.rel (%p78) target = $region20
      $region19: #{tpu_custom_call.1} parent=5 // pred_region
        _
      $region20: #{tpu_custom_call.1} parent=5 // pred_fallthru
        _
      %p81 = scmp.le.s32.totalorder 1, %s9
      %p82 = scmp.lt.s32.totalorder %s9, 3
      %p83 = pnand %p81, %p82
      %p84 = pneg %p83
      // Predicated region
      $region21: #{tpu_custom_call.1} parent=5 // pred_check
        _
      $region22: #{tpu_custom_call.1} parent=5 // pred_check_branch
        %86 = sbr.rel (%p83) target = $region24
      $region23: #{tpu_custom_call.1} parent=5 // pred_region
        %s87 = ssub.s32 %s9, 1
        // Predicated region
        $region25: #{tpu_custom_call.1} parent=23 // pred_check
          %p88 = pneg %p30
        $region26: #{tpu_custom_call.1} parent=23 // pred_check_branch
          %90 = sbr.rel (%p88) target = $region28
        $region27: #{tpu_custom_call.1} parent=23 // pred_region
          %91 = dma.done [#allocation3], 128
        $region28: #{tpu_custom_call.1} parent=23 // pred_fallthru
          _
        %p92 = pneg %p30
        %p93 = pneg %p27
        %p94 = pneg %p51
        %p95 = pneg %p48
        %v96 = vld [vmem:[#allocation2] sm:$0xff]
        %97 = vst [vmem:[#allocation5] sm:$0xff] %v96
        // Predicated region
        $region29: #{tpu_custom_call.1} parent=23 // pred_check
          %p98 = pneg %p48
        $region30: #{tpu_custom_call.1} parent=23 // pred_check_branch
          %100 = sbr.rel (%p98) target = $region32
        $region31: #{tpu_custom_call.1} parent=23 // pred_region
          %s102 = ssub.s32 128, 128
          %103 = vsyncadd [#allocation4], %s102
          %s105 = sshll.u32 [#allocation5], 4
          %s106 = int_to_ptr.vmem [resolvable:$true] %s105
          %108 = dma.vmem_to_hbm [thread:$0]  %s106, 128, %s1, [#allocation4]
        $region32: #{tpu_custom_call.1} parent=23 // pred_fallthru
          _
        // Predicated region
        $region33: #{tpu_custom_call.1} parent=23 // pred_check
          %p109 = pneg %p48
        $region34: #{tpu_custom_call.1} parent=23 // pred_check_branch
          %111 = sbr.rel (%p109) target = $region36
        $region35: #{tpu_custom_call.1} parent=23 // pred_region
          %112 = dma.done [#allocation4], 128
        $region36: #{tpu_custom_call.1} parent=23 // pred_fallthru
          _
      $region24: #{tpu_custom_call.1} parent=5 // pred_fallthru
        _
      %p113 = scmp.le.s32.totalorder 2, %s9
      // Predicated region
      $region37: #{tpu_custom_call.1} parent=5 // pred_check
        %p114 = pneg %p113
      $region38: #{tpu_custom_call.1} parent=5 // pred_check_branch
        %116 = sbr.rel (%p114) target = $region40
      $region39: #{tpu_custom_call.1} parent=5 // pred_region
        %s117 = ssub.s32 %s9, 2
      $region40: #{tpu_custom_call.1} parent=5 // pred_fallthru
        _
    $region6: #{tpu_custom_call.1} parent=1 // loop_footer
      %s13 = sadd.s32 1, %s9
    $region7: #{tpu_custom_call.1} parent=1 // loop_footer_branch
      %8 = sbr.rel target = $region3
    $region8: #{tpu_custom_call.1} parent=1 // loop_exit
      _
    %118 = vsyncpa [#allocation3], 1
    %s119 = scalar_lea.sflag [#allocation3], 1
    %120 = vsyncpa %s119, 1
    %121 = vsyncpa [#allocation4], 1
    %s122 = scalar_lea.sflag [#allocation4], 1
    %123 = vsyncpa %s122, 1

// kernel: _lambda_.1
$region0: #{_lambda_.1}
  #allocation0 [shape = 'u32[]', space=smem, size = 0x4, offset = 0x4, fixed_abs, tag = 'smem constant byte address 0x4 - core index']
  #allocation1 [shape = 'u32[144,128]{1,0:T(1,128)}', space=vmem, size = 0x12000, scoped, tag = 'internal scratch']
  %s0 = inlined_call_operand.hbm [shape: f32[8,2048], index: 0, kind: input, shape index: {}]
  %s1 = inlined_call_operand.hbm [shape: f32[1024,128], index: 1, kind: input, shape index: {}]
  %s2 = inlined_call_operand.hbm [shape: f32[128,1024], index: 2, kind: input, shape index: {}]
  %s3 = inlined_call_operand.hbm [shape: f32[128,1024], index: 3, kind: input, shape index: {}]
  %s4 = inlined_call_operand.hbm [shape: f32[4,1024], index: 4, kind: input, shape index: {}]
  %s5 = inlined_call_operand.hbm [shape: f32[4,1024], index: 5, kind: input, shape index: {}]
  %s6 = inlined_call_operand.hbm [shape: f32[9,1024], index: 6, kind: input, shape index: {}]
  %s7 = inlined_call_operand.hbm [shape: f32[8,8], index: 7, kind: input, shape index: {}]
  %s8 = inlined_call_operand.hbm [shape: f32[8,72], index: 8, kind: input, shape index: {}]
  %s9 = inlined_call_operand.hbm [shape: f32[8,5], index: 9, kind: input, shape index: {}]
  %s10 = inlined_call_operand.hbm [shape: f32[8,2048], index: 10, kind: output, shape index: {}]
  %s11 = sld [smem:[#allocation0]]
  $region113: #{_lambda_.1} parent=0
    _
  %s13 = ssub.s32 1, %s11
  %s14 = scalar_select 0, %s13, %s11
  $region1: #{_lambda_.1} parent=0
    #allocation2 [shape = 'u8[65536]{0}', space=vmem, size = 0x10000, scoped, tag = 'input window, operand 0']
    #allocation3 [shape = 's32[2]{0}', space=sflag, size = 0x8, scoped, tag = 'scoped memory for _lambda_.1']
    #allocation4 [shape = 's32[2]{0}', space=sflag, size = 0x8, scoped, tag = 'scoped memory for _lambda_.1']
    #allocation5 [shape = 'u8[524288]{0}', space=vmem, size = 0x80000, scoped, tag = 'input window, operand 1, single buffered']
    #allocation6 [shape = 's32[1]{0}', space=sflag, size = 0x4, scoped, tag = 'scoped memory for _lambda_.1']
    #allocation7 [shape = 'u8[524288]{0}', space=vmem, size = 0x80000, scoped, tag = 'input window, operand 2, single buffered']
    #allocation8 [shape = 'u8[524288]{0}', space=vmem, size = 0x80000, scoped, tag = 'input window, operand 3, single buffered']
    #allocation9 [shape = 's32[1]{0}', space=sflag, size = 0x4, scoped, tag = 'scoped memory for _lambda_.1']
    #allocation10 [shape = 'u8[16384]{0}', space=vmem, size = 0x4000, scoped, tag = 'input window, operand 4, single buffered']
    #allocation11 [shape = 'u8[16384]{0}', space=vmem, size = 0x4000, scoped, tag = 'input window, operand 5, single buffered']
    #allocation12 [shape = 's32[1]{0}', space=sflag, size = 0x4, scoped, tag = 'scoped memory for _lambda_.1']
    #allocation13 [shape = 'u8[65536]{0}', space=vmem, size = 0x10000, scoped, tag = 'input window, operand 6, single buffered']
    #allocation14 [shape = 'u8[4096]{0}', space=vmem, size = 0x1000, scoped, tag = 'input window, operand 7, single buffered']
    #allocation15 [shape = 's32[1]{0}', space=sflag, size = 0x4, scoped, tag = 'scoped memory for _lambda_.1']
    #allocation16 [shape = 'u8[4096]{0}', space=vmem, size = 0x1000, scoped, tag = 'input window, operand 8, single buffered']
    #allocation17 [shape = 'u8[4096]{0}', space=vmem, size = 0x1000, scoped, tag = 'input window, operand 9, single buffered']
    #allocation18 [shape = 's32[1]{0}', space=sflag, size = 0x4, scoped, tag = 'scoped memory for _lambda_.1']
    #allocation19 [shape = 'u8[65536]{0}', space=vmem, size = 0x10000, scoped, tag = 'output window, operand 0']
    %15 = vsyncpa [#allocation3], 0
    %s16 = scalar_lea.sflag [#allocation3], 1
    %17 = vsyncpa %s16, 0
    %18 = vsyncpa [#allocation6], 0
    %19 = vsyncpa [#allocation9], 0
    %20 = vsyncpa [#allocation12], 0
    %21 = vsyncpa [#allocation15], 0
    %22 = vsyncpa [#allocation18], 0
    %23 = vsyncpa [#allocation4], 0
    %s24 = scalar_lea.sflag [#allocation4], 1
    %25 = vsyncpa %s24, 0
    loop: start=0, step=1, limit=4
    $region2: #{_lambda_.1} parent=1 // loop_pre_header
      _
    $region3: #{_lambda_.1} parent=1 // loop_header
      %s27 = sphi 0, %s31
      %p28 = scmp.ge.s32.totalorder %s27, 4
      %s37 = sphi 0, %s39
      %s40 = sphi 0, %s37
      %s41 = sphi 0, %s40
      %s57 = sphi 0, %s41
      %s61 = sphi 0, %s61
      %s63 = sphi 0, %s61
      %s64 = sphi 0, %s63
      %s78 = sphi 0, %s64
      %s82 = sphi 0, %s82
      %s84 = sphi 0, %s82
      %s85 = sphi 0, %s84
      %s99 = sphi 0, %s85
      %s103 = sphi 0, %s103
      %s105 = sphi 0, %s103
      %s106 = sphi 0, %s105
      %s120 = sphi 0, %s106
      %s124 = sphi 0, %s124
      %s126 = sphi 0, %s124
      %s127 = sphi 0, %s126
      %s141 = sphi 0, %s127
      %s145 = sphi 0, %s145
      %s147 = sphi 0, %s145
      %s148 = sphi 0, %s147
      %s162 = sphi 0, %s148
      %s166 = sphi 0, %s166
      %s168 = sphi 0, %s166
      %s169 = sphi 0, %s168
      %s183 = sphi 0, %s169
      %s187 = sphi 0, %s187
      %s189 = sphi 0, %s187
      %s190 = sphi 0, %s189
      %s204 = sphi 0, %s190
      %s208 = sphi 0, %s208
      %s210 = sphi 0, %s208
      %s211 = sphi 0, %s210
      %s225 = sphi 0, %s211
      %s229 = sphi 0, %s229
      %s231 = sphi 0, %s229
      %s232 = sphi 0, %s231
      %s246 = sphi 0, %s232
      %s252 = sphi 0, %s254
      %s255 = sphi 0, %s252
      %s256 = sphi 0, %s255
      %s272 = sphi 0, %s256
    $region4: #{_lambda_.1} parent=1 // loop_header_branch
      %30 = sbr.rel (%p28) target = $region8
    $region5: #{_lambda_.1} parent=1 // loop_body
      %s32 = ssub.s32 %s27, 1
      %s33 = ssub.s32 %s27, 2
      %s34 = sadd.s32 %s27, 1
      %s35 = ssub.s32 %s27, %s34
      %p36 = scmp.eq.s32.totalorder %s35, 0
      %s38 = sadd.s32 %s37, 1
      %s39 = scalar_select %p36, %s37, %s38
      %p42 = pneg %p36
      %p43 = scmp.eq.s32.totalorder %s27, 1
      %p44 = por %p42, %p43
      %p45 = scmp.ne.s32.totalorder %s37, %s40
      %p46 = scmp.eq.s32.totalorder %s27, 0
      %p47 = por %p45, %p46
      %p48 = scmp.ne.s32.totalorder %s37, %s40
      %p49 = scmp.eq.s32.totalorder %s32, 1
      %p50 = por %p48, %p49
      %p51 = scmp.ne.s32.totalorder %s40, %s41
      %p52 = scmp.eq.s32.totalorder %s32, 0
      %p53 = por %p51, %p52
      %p54 = scmp.ne.s32.totalorder %s40, %s41
      %p55 = scmp.eq.s32.totalorder %s33, 1
      %p56 = por %p54, %p55
      %p58 = scmp.ne.s32.totalorder %s41, %s57
      %p59 = scmp.eq.s32.totalorder %s33, 0
      %p60 = por %p58, %p59
      %s62 = sadd.s32 %s61, 1
      %p65 = scmp.eq.s32.totalorder %s27, 1
      %p66 = scmp.ne.s32.totalorder %s61, %s63
      %p67 = scmp.eq.s32.totalorder %s27, 0
      %p68 = por %p66, %p67
      %p69 = scmp.ne.s32.totalorder %s61, %s63
      %p70 = scmp.eq.s32.totalorder %s32, 1
      %p71 = por %p69, %p70
      %p72 = scmp.ne.s32.totalorder %s63, %s64
      %p73 = scmp.eq.s32.totalorder %s32, 0
      %p74 = por %p72, %p73
      %p75 = scmp.ne.s32.totalorder %s63, %s64
      %p76 = scmp.eq.s32.totalorder %s33, 1
      %p77 = por %p75, %p76
      %p79 = scmp.ne.s32.totalorder %s64, %s78
      %p80 = scmp.eq.s32.totalorder %s33, 0
      %p81 = por %p79, %p80
      %s83 = sadd.s32 %s82, 1
      %p86 = scmp.eq.s32.totalorder %s27, 1
      %p87 = scmp.ne.s32.totalorder %s82, %s84
      %p88 = scmp.eq.s32.totalorder %s27, 0
      %p89 = por %p87, %p88
      %p90 = scmp.ne.s32.totalorder %s82, %s84
      %p91 = scmp.eq.s32.totalorder %s32, 1
      %p92 = por %p90, %p91
      %p93 = scmp.ne.s32.totalorder %s84, %s85
      %p94 = scmp.eq.s32.totalorder %s32, 0
      %p95 = por %p93, %p94
      %p96 = scmp.ne.s32.totalorder %s84, %s85
      %p97 = scmp.eq.s32.totalorder %s33, 1
      %p98 = por %p96, %p97
      %p100 = scmp.ne.s32.totalorder %s85, %s99
      %p101 = scmp.eq.s32.totalorder %s33, 0
      %p102 = por %p100, %p101
      %s104 = sadd.s32 %s103, 1
      %p107 = scmp.eq.s32.totalorder %s27, 1
      %p108 = scmp.ne.s32.totalorder %s103, %s105
      %p109 = scmp.eq.s32.totalorder %s27, 0
      %p110 = por %p108, %p109
      %p111 = scmp.ne.s32.totalorder %s103, %s105
      %p112 = scmp.eq.s32.totalorder %s32, 1
      %p113 = por %p111, %p112
      %p114 = scmp.ne.s32.totalorder %s105, %s106
      %p115 = scmp.eq.s32.totalorder %s32, 0
      %p116 = por %p114, %p115
      %p117 = scmp.ne.s32.totalorder %s105, %s106
      %p118 = scmp.eq.s32.totalorder %s33, 1
      %p119 = por %p117, %p118
      %p121 = scmp.ne.s32.totalorder %s106, %s120
      %p122 = scmp.eq.s32.totalorder %s33, 0
      %p123 = por %p121, %p122
      %s125 = sadd.s32 %s124, 1
      %p128 = scmp.eq.s32.totalorder %s27, 1
      %p129 = scmp.ne.s32.totalorder %s124, %s126
      %p130 = scmp.eq.s32.totalorder %s27, 0
      %p131 = por %p129, %p130
      %p132 = scmp.ne.s32.totalorder %s124, %s126
      %p133 = scmp.eq.s32.totalorder %s32, 1
      %p134 = por %p132, %p133
      %p135 = scmp.ne.s32.totalorder %s126, %s127
      %p136 = scmp.eq.s32.totalorder %s32, 0
      %p137 = por %p135, %p136
      %p138 = scmp.ne.s32.totalorder %s126, %s127
      %p139 = scmp.eq.s32.totalorder %s33, 1
      %p140 = por %p138, %p139
      %p142 = scmp.ne.s32.totalorder %s127, %s141
      %p143 = scmp.eq.s32.totalorder %s33, 0
      %p144 = por %p142, %p143
      %s146 = sadd.s32 %s145, 1
      %p149 = scmp.eq.s32.totalorder %s27, 1
      %p150 = scmp.ne.s32.totalorder %s145, %s147
      %p151 = scmp.eq.s32.totalorder %s27, 0
      %p152 = por %p150, %p151
      %p153 = scmp.ne.s32.totalorder %s145, %s147
      %p154 = scmp.eq.s32.totalorder %s32, 1
      %p155 = por %p153, %p154
      %p156 = scmp.ne.s32.totalorder %s147, %s148
      %p157 = scmp.eq.s32.totalorder %s32, 0
      %p158 = por %p156, %p157
      %p159 = scmp.ne.s32.totalorder %s147, %s148
      %p160 = scmp.eq.s32.totalorder %s33, 1
      %p161 = por %p159, %p160
      %p163 = scmp.ne.s32.totalorder %s148, %s162
      %p164 = scmp.eq.s32.totalorder %s33, 0
      %p165 = por %p163, %p164
      %s167 = sadd.s32 %s166, 1
      %p170 = scmp.eq.s32.totalorder %s27, 1
      %p171 = scmp.ne.s32.totalorder %s166, %s168
      %p172 = scmp.eq.s32.totalorder %s27, 0
      %p173 = por %p171, %p172
      %p174 = scmp.ne.s32.totalorder %s166, %s168
      %p175 = scmp.eq.s32.totalorder %s32, 1
      %p176 = por %p174, %p175
      %p177 = scmp.ne.s32.totalorder %s168, %s169
      %p178 = scmp.eq.s32.totalorder %s32, 0
      %p179 = por %p177, %p178
      %p180 = scmp.ne.s32.totalorder %s168, %s169
      %p181 = scmp.eq.s32.totalorder %s33, 1
      %p182 = por %p180, %p181
      %p184 = scmp.ne.s32.totalorder %s169, %s183
      %p185 = scmp.eq.s32.totalorder %s33, 0
      %p186 = por %p184, %p185
      %s188 = sadd.s32 %s187, 1
      %p191 = scmp.eq.s32.totalorder %s27, 1
      %p192 = scmp.ne.s32.totalorder %s187, %s189
      %p193 = scmp.eq.s32.totalorder %s27, 0
      %p194 = por %p192, %p193
      %p195 = scmp.ne.s32.totalorder %s187, %s189
      %p196 = scmp.eq.s32.totalorder %s32, 1
      %p197 = por %p195, %p196
      %p198 = scmp.ne.s32.totalorder %s189, %s190
      %p199 = scmp.eq.s32.totalorder %s32, 0
      %p200 = por %p198, %p199
      %p201 = scmp.ne.s32.totalorder %s189, %s190
      %p202 = scmp.eq.s32.totalorder %s33, 1
      %p203 = por %p201, %p202
      %p205 = scmp.ne.s32.totalorder %s190, %s204
      %p206 = scmp.eq.s32.totalorder %s33, 0
      %p207 = por %p205, %p206
      %s209 = sadd.s32 %s208, 1
      %p212 = scmp.eq.s32.totalorder %s27, 1
      %p213 = scmp.ne.s32.totalorder %s208, %s210
      %p214 = scmp.eq.s32.totalorder %s27, 0
      %p215 = por %p213, %p214
      %p216 = scmp.ne.s32.totalorder %s208, %s210
      %p217 = scmp.eq.s32.totalorder %s32, 1
      %p218 = por %p216, %p217
      %p219 = scmp.ne.s32.totalorder %s210, %s211
      %p220 = scmp.eq.s32.totalorder %s32, 0
      %p221 = por %p219, %p220
      %p222 = scmp.ne.s32.totalorder %s210, %s211
      %p223 = scmp.eq.s32.totalorder %s33, 1
      %p224 = por %p222, %p223
      %p226 = scmp.ne.s32.totalorder %s211, %s225
      %p227 = scmp.eq.s32.totalorder %s33, 0
      %p228 = por %p226, %p227
      %s230 = sadd.s32 %s229, 1
      %p233 = scmp.eq.s32.totalorder %s27, 1
      %p234 = scmp.ne.s32.totalorder %s229, %s231
      %p235 = scmp.eq.s32.totalorder %s27, 0
      %p236 = por %p234, %p235
      %p237 = scmp.ne.s32.totalorder %s229, %s231
      %p238 = scmp.eq.s32.totalorder %s32, 1
      %p239 = por %p237, %p238
      %p240 = scmp.ne.s32.totalorder %s231, %s232
      %p241 = scmp.eq.s32.totalorder %s32, 0
      %p242 = por %p240, %p241
      %p243 = scmp.ne.s32.totalorder %s231, %s232
      %p244 = scmp.eq.s32.totalorder %s33, 1
      %p245 = por %p243, %p244
      %p247 = scmp.ne.s32.totalorder %s232, %s246
      %p248 = scmp.eq.s32.totalorder %s33, 0
      %p249 = por %p247, %p248
      %s250 = ssub.s32 %s27, %s34
      %p251 = scmp.eq.s32.totalorder %s250, 0
      %s253 = sadd.s32 %s252, 1
      %s254 = scalar_select %p251, %s252, %s253
      %p257 = pneg %p251
      %p258 = scmp.eq.s32.totalorder %s27, 1
      %p259 = por %p257, %p258
      %p260 = scmp.ne.s32.totalorder %s252, %s255
      %p261 = scmp.eq.s32.totalorder %s27, 0
      %p262 = por %p260, %p261
      %p263 = scmp.ne.s32.totalorder %s252, %s255
      %p264 = scmp.eq.s32.totalorder %s32, 1
      %p265 = por %p263, %p264
      %p266 = scmp.ne.s32.totalorder %s255, %s256
      %p267 = scmp.eq.s32.totalorder %s32, 0
      %p268 = por %p266, %p267
      %p269 = scmp.ne.s32.totalorder %s255, %s256
      %p270 = scmp.eq.s32.totalorder %s33, 1
      %p271 = por %p269, %p270
      %p273 = scmp.ne.s32.totalorder %s256, %s272
      %p274 = scmp.eq.s32.totalorder %s33, 0
      %p275 = por %p273, %p274
      %p276 = scmp.le.s32.totalorder 1, %s27
      %p277 = scmp.lt.s32.totalorder %s27, 3
      %p278 = pnand %p276, %p277
      %p279 = pneg %p278
      // Predicated region
      $region9: #{_lambda_.1} parent=5 // pred_check
        _
      $region10: #{_lambda_.1} parent=5 // pred_check_branch
        %281 = sbr.rel (%p278) target = $region12
      $region11: #{_lambda_.1} parent=5 // pred_region
        %s282 = ssub.s32 %s27, 1
        // Predicated region
        $region13: #{_lambda_.1} parent=11 // pred_check
          %p283 = pneg %p74
        $region14: #{_lambda_.1} parent=11 // pred_check_branch
          %285 = sbr.rel (%p283) target = $region16
        $region15: #{_lambda_.1} parent=11 // pred_region
          %s287 = ssub.s32 16384, 16384
          %288 = vsyncadd [#allocation6], %s287
          %s289 = sshll.u32 [#allocation5], 4
          %s290 = int_to_ptr.vmem [resolvable:$true] %s289
          %295 = dma.hbm_to_vmem [thread:$0]  %s1, 16384, %s290, [#allocation6], 128, 128, 8
        $region16: #{_lambda_.1} parent=11 // pred_fallthru
          _
        // Predicated region
        $region17: #{_lambda_.1} parent=11 // pred_check
          %p296 = pneg %p95
        $region18: #{_lambda_.1} parent=11 // pred_check_branch
          %298 = sbr.rel (%p296) target = $region20
        $region19: #{_lambda_.1} parent=11 // pred_region
          %s300 = ssub.s32 16384, 16384
          %301 = vsyncadd [#allocation6], %s300
          %s302 = sshll.u32 [#allocation7], 4
          %s303 = int_to_ptr.vmem [resolvable:$true] %s302
          %308 = dma.hbm_to_vmem [thread:$0]  %s2, 16384, %s303, [#allocation6], 1024, 1024, 64
        $region20: #{_lambda_.1} parent=11 // pred_fallthru
          _
        // Predicated region
        $region21: #{_lambda_.1} parent=11 // pred_check
          %p309 = pneg %p116
        $region22: #{_lambda_.1} parent=11 // pred_check_branch
          %311 = sbr.rel (%p309) target = $region24
        $region23: #{_lambda_.1} parent=11 // pred_region
          %s313 = ssub.s32 16384, 16384
          %314 = vsyncadd [#allocation9], %s313
          %s315 = sshll.u32 [#allocation8], 4
          %s316 = int_to_ptr.vmem [resolvable:$true] %s315
          %321 = dma.hbm_to_vmem [thread:$0]  %s3, 16384, %s316, [#allocation9], 1024, 1024, 64
        $region24: #{_lambda_.1} parent=11 // pred_fallthru
          _
        // Predicated region
        $region25: #{_lambda_.1} parent=11 // pred_check
          %p322 = pneg %p137
        $region26: #{_lambda_.1} parent=11 // pred_check_branch
          %324 = sbr.rel (%p322) target = $region28
        $region27: #{_lambda_.1} parent=11 // pred_region
          %s326 = ssub.s32 512, 512
          %327 = vsyncadd [#allocation9], %s326
          %s329 = sshll.u32 [#allocation10], 4
          %s330 = int_to_ptr.vmem [resolvable:$true] %s329
          %332 = dma.hbm_to_vmem [thread:$0]  %s4, 512, %s330, [#allocation9]
        $region28: #{_lambda_.1} parent=11 // pred_fallthru
          _
        // Predicated region
        $region29: #{_lambda_.1} parent=11 // pred_check
          %p333 = pneg %p158
        $region30: #{_lambda_.1} parent=11 // pred_check_branch
          %335 = sbr.rel (%p333) target = $region32
        $region31: #{_lambda_.1} parent=11 // pred_region
          %s337 = ssub.s32 512, 512
          %338 = vsyncadd [#allocation12], %s337
          %s340 = sshll.u32 [#allocation11], 4
          %s341 = int_to_ptr.vmem [resolvable:$true] %s340
          %343 = dma.hbm_to_vmem [thread:$0]  %s5, 512, %s341, [#allocation12]
        $region32: #{_lambda_.1} parent=11 // pred_fallthru
          _
        // Predicated region
        $region33: #{_lambda_.1} parent=11 // pred_check
          %p344 = pneg %p179
        $region34: #{_lambda_.1} parent=11 // pred_check_branch
          %346 = sbr.rel (%p344) target = $region36
        $region35: #{_lambda_.1} parent=11 // pred_region
          %s348 = ssub.s32 2048, 2048
          %349 = vsyncadd [#allocation12], %s348
          %s350 = sshll.u32 [#allocation13], 4
          %s351 = int_to_ptr.vmem [resolvable:$true] %s350
          %356 = dma.hbm_to_vmem [thread:$0]  %s6, 2048, %s351, [#allocation12], 1024, 1024, 64
        $region36: #{_lambda_.1} parent=11 // pred_fallthru
          _
        // Predicated region
        $region37: #{_lambda_.1} parent=11 // pred_check
          %p357 = pneg %p200
        $region38: #{_lambda_.1} parent=11 // pred_check_branch
          %359 = sbr.rel (%p357) target = $region40
        $region39: #{_lambda_.1} parent=11 // pred_region
          %s361 = ssub.s32 128, 128
          %362 = vsyncadd [#allocation15], %s361
          %s364 = sshll.u32 [#allocation14], 4
          %s365 = int_to_ptr.vmem [resolvable:$true] %s364
          %367 = dma.hbm_to_vmem [thread:$0]  %s7, 128, %s365, [#allocation15]
        $region40: #{_lambda_.1} parent=11 // pred_fallthru
          _
        // Predicated region
        $region41: #{_lambda_.1} parent=11 // pred_check
          %p368 = pneg %p221
        $region42: #{_lambda_.1} parent=11 // pred_check_branch
          %370 = sbr.rel (%p368) target = $region44
        $region43: #{_lambda_.1} parent=11 // pred_region
          %s372 = ssub.s32 128, 128
          %373 = vsyncadd [#allocation15], %s372
          %s375 = sshll.u32 [#allocation16], 4
          %s376 = int_to_ptr.vmem [resolvable:$true] %s375
          %378 = dma.hbm_to_vmem [thread:$0]  %s8, 128, %s376, [#allocation15]
        $region44: #{_lambda_.1} parent=11 // pred_fallthru
          _
        // Predicated region
        $region45: #{_lambda_.1} parent=11 // pred_check
          %p379 = pneg %p242
        $region46: #{_lambda_.1} parent=11 // pred_check_branch
          %381 = sbr.rel (%p379) target = $region48
        $region47: #{_lambda_.1} parent=11 // pred_region
          %s383 = ssub.s32 128, 128
          %384 = vsyncadd [#allocation18], %s383
          %s386 = sshll.u32 [#allocation17], 4
          %s387 = int_to_ptr.vmem [resolvable:$true] %s386
          %389 = dma.hbm_to_vmem [thread:$0]  %s9, 128, %s387, [#allocation18]
        $region48: #{_lambda_.1} parent=11 // pred_fallthru
          _
      $region12: #{_lambda_.1} parent=5 // pred_fallthru
        _
      %p390 = scmp.lt.s32.totalorder %s27, 2
      // Predicated region
      $region49: #{_lambda_.1} parent=5 // pred_check
        %p391 = pneg %p390
      $region50: #{_lambda_.1} parent=5 // pred_check_branch
        %393 = sbr.rel (%p391) target = $region52
      $region51: #{_lambda_.1} parent=5 // pred_region
        // Predicated region
        $region53: #{_lambda_.1} parent=51 // pred_check
          %p394 = pneg %p47
        $region54: #{_lambda_.1} parent=51 // pred_check_branch
          %396 = sbr.rel (%p394) target = $region56
        $region55: #{_lambda_.1} parent=51 // pred_region
          %s397 = sand.u32 %s37, 1
          %s398 = scalar_lea.sflag [#allocation3], %s397
          %s399 = sand.u32 %s37, 1
          %s400 = smul.addr %s399, 64
          %s401 = scalar_lea.vmem [#allocation2], %s400
          %s402 = smul.u32 8, %s27
          %s404 = ssub.s32 1024, 1024
          %405 = vsyncadd %s398, %s404
          %s406 = smul.addr %s402, 128
          %s407 = scalar_lea.hbm %s0, %s406
          %s409 = sshll.u32 %s401, 4
          %s410 = int_to_ptr.vmem [resolvable:$true] %s409
          %412 = dma.hbm_to_vmem [thread:$0]  %s407, 1024, %s410, %s398
        $region56: #{_lambda_.1} parent=51 // pred_fallthru
          _
      $region52: #{_lambda_.1} parent=5 // pred_fallthru
        _
      %p413 = scmp.le.s32.totalorder 1, %s27
      %p414 = scmp.lt.s32.totalorder %s27, 3
      %p415 = pnand %p413, %p414
      %p416 = pneg %p415
      // Predicated region
      $region57: #{_lambda_.1} parent=5 // pred_check
        _
      $region58: #{_lambda_.1} parent=5 // pred_check_branch
        %418 = sbr.rel (%p415) target = $region60
      $region59: #{_lambda_.1} parent=5 // pred_region
        %s419 = ssub.s32 %s27, 1
        %s420 = sand.u32 %s40, 1
        %s421 = scalar_lea.sflag [#allocation3], %s420
        %s422 = sand.u32 %s40, 1
        %s423 = smul.addr %s422, 64
        %s424 = scalar_lea.vmem [#allocation2], %s423
        // Predicated region
        $region61: #{_lambda_.1} parent=59 // pred_check
          %p425 = pneg %p53
        $region62: #{_lambda_.1} parent=59 // pred_check_branch
          %427 = sbr.rel (%p425) target = $region64
        $region63: #{_lambda_.1} parent=59 // pred_region
          %428 = dma.done %s421, 1024
        $region64: #{_lambda_.1} parent=59 // pred_fallthru
          _
        // Predicated region
        $region65: #{_lambda_.1} parent=59 // pred_check
          %p429 = pneg %p74
        $region66: #{_lambda_.1} parent=59 // pred_check_branch
          %431 = sbr.rel (%p429) target = $region68
        $region67: #{_lambda_.1} parent=59 // pred_region
          %432 = dma.done [#allocation6], 16384
        $region68: #{_lambda_.1} parent=59 // pred_fallthru
          _
        // Predicated region
        $region69: #{_lambda_.1} parent=59 // pred_check
          %p433 = pneg %p95
        $region70: #{_lambda_.1} parent=59 // pred_check_branch
          %435 = sbr.rel (%p433) target = $region72
        $region71: #{_lambda_.1} parent=59 // pred_region
          %436 = dma.done [#allocation6], 16384
        $region72: #{_lambda_.1} parent=59 // pred_fallthru
          _
        // Predicated region
        $region73: #{_lambda_.1} parent=59 // pred_check
          %p437 = pneg %p116
        $region74: #{_lambda_.1} parent=59 // pred_check_branch
          %439 = sbr.rel (%p437) target = $region76
        $region75: #{_lambda_.1} parent=59 // pred_region
          %440 = dma.done [#allocation9], 16384
        $region76: #{_lambda_.1} parent=59 // pred_fallthru
          _
        // Predicated region
        $region77: #{_lambda_.1} parent=59 // pred_check
          %p441 = pneg %p137
        $region78: #{_lambda_.1} parent=59 // pred_check_branch
          %443 = sbr.rel (%p441) target = $region80
        $region79: #{_lambda_.1} parent=59 // pred_region
          %444 = dma.done [#allocation9], 512
        $region80: #{_lambda_.1} parent=59 // pred_fallthru
          _
        // Predicated region
        $region81: #{_lambda_.1} parent=59 // pred_check
          %p445 = pneg %p158
        $region82: #{_lambda_.1} parent=59 // pred_check_branch
          %447 = sbr.rel (%p445) target = $region84
        $region83: #{_lambda_.1} parent=59 // pred_region
          %448 = dma.done [#allocation12], 512
        $region84: #{_lambda_.1} parent=59 // pred_fallthru
          _
        // Predicated region
        $region85: #{_lambda_.1} parent=59 // pred_check
          %p449 = pneg %p179
        $region86: #{_lambda_.1} parent=59 // pred_check_branch
          %451 = sbr.rel (%p449) target = $region88
        $region87: #{_lambda_.1} parent=59 // pred_region
          %452 = dma.done [#allocation12], 2048
        $region88: #{_lambda_.1} parent=59 // pred_fallthru
          _
        // Predicated region
        $region89: #{_lambda_.1} parent=59 // pred_check
          %p453 = pneg %p200
        $region90: #{_lambda_.1} parent=59 // pred_check_branch
          %455 = sbr.rel (%p453) target = $region92
        $region91: #{_lambda_.1} parent=59 // pred_region
          %456 = dma.done [#allocation15], 128
        $region92: #{_lambda_.1} parent=59 // pred_fallthru
          _
        // Predicated region
        $region93: #{_lambda_.1} parent=59 // pred_check
          %p457 = pneg %p221
        $region94: #{_lambda_.1} parent=59 // pred_check_branch
          %459 = sbr.rel (%p457) target = $region96
        $region95: #{_lambda_.1} parent=59 // pred_region
          %460 = dma.done [#allocation15], 128
        $region96: #{_lambda_.1} parent=59 // pred_fallthru
          _
        // Predicated region
        $region97: #{_lambda_.1} parent=59 // pred_check
          %p461 = pneg %p242
        $region98: #{_lambda_.1} parent=59 // pred_check_branch
          %463 = sbr.rel (%p461) target = $region100
        $region99: #{_lambda_.1} parent=59 // pred_region
          %464 = dma.done [#allocation18], 128
        $region100: #{_lambda_.1} parent=59 // pred_fallthru
          _
        %s465 = sand.u32 %s40, 1
        %s466 = scalar_lea.sflag [#allocation3], %s465
        %s467 = sand.u32 %s40, 1
        %s468 = smul.addr %s467, 64
        %s469 = scalar_lea.vmem [#allocation2], %s468
        %p470 = pneg %p53
        %p471 = pneg %p50
        %p472 = pneg %p74
        %p473 = pneg %p71
        %p474 = pneg %p95
        %p475 = pneg %p92
        %p476 = pneg %p116
        %p477 = pneg %p113
        %p478 = pneg %p137
        %p479 = pneg %p134
        %p480 = pneg %p158
        %p481 = pneg %p155
        %p482 = pneg %p179
        %p483 = pneg %p176
        %p484 = pneg %p200
        %p485 = pneg %p197
        %p486 = pneg %p221
        %p487 = pneg %p218
        %p488 = pneg %p242
        %p489 = pneg %p239
        %p490 = pneg %p268
        %p491 = pneg %p265
        %s492 = sand.u32 %s255, 1
        %s493 = scalar_lea.sflag [#allocation4], %s492
        %s494 = sand.u32 %s255, 1
        %s495 = smul.addr %s494, 64
        %s496 = scalar_lea.vmem [#allocation19], %s495
        %s497 = smul.u32 8, %s32
        %s498 = smul.u32 8, %s32
        %v499 = vld [vmem:[%s424] sm:$0xff]
        %v500 = vld [vmem:[%s424 + $0x8] sm:$0xff]
        %v501 = vld [vmem:[%s424 + $0x10] sm:$0xff]
        %v502 = vld [vmem:[%s424 + $0x18] sm:$0xff]
        %v503 = vld [vmem:[%s424 + $0x20] sm:$0xff]
        %v504 = vld [vmem:[%s424 + $0x28] sm:$0xff]
        %v505 = vld [vmem:[%s424 + $0x30] sm:$0xff]
        %v506 = vld [vmem:[%s424 + $0x38] sm:$0xff]
        %v507 = vld [vmem:[#allocation17] sm:$0xff]
        %v508 = vld [vmem:[#allocation10] sm:$0xff]
        %v509 = vld [vmem:[#allocation10 + $0x8] sm:$0xff]
        %v510 = vld [vmem:[#allocation10 + $0x10] sm:$0xff]
        %v511 = vld [vmem:[#allocation10 + $0x18] sm:$0xff]
        %v512 = vld [vmem:[#allocation11] sm:$0xff]
        %v513 = vld [vmem:[#allocation11 + $0x8] sm:$0xff]
        %v514 = vld [vmem:[#allocation11 + $0x10] sm:$0xff]
        %v515 = vld [vmem:[#allocation11 + $0x18] sm:$0xff]
        %v516 = vld [vmem:[#allocation5] sm:$0xff]
        %v517 = vld [vmem:[#allocation5 + $0x8] sm:$0xff]
        %v518 = vld [vmem:[#allocation5 + $0x10] sm:$0xff]
        %v519 = vld [vmem:[#allocation5 + $0x18] sm:$0xff]
        %v520 = vld [vmem:[#allocation5 + $0x20] sm:$0xff]
        %v521 = vld [vmem:[#allocation5 + $0x28] sm:$0xff]
        %v522 = vld [vmem:[#allocation5 + $0x30] sm:$0xff]
        %v523 = vld [vmem:[#allocation5 + $0x38] sm:$0xff]
        %v524 = vld [vmem:[#allocation5 + $0x40] sm:$0xff]
        %v525 = vld [vmem:[#allocation5 + $0x48] sm:$0xff]
        %v526 = vld [vmem:[#allocation5 + $0x50] sm:$0xff]
        %v527 = vld [vmem:[#allocation5 + $0x58] sm:$0xff]
        %v528 = vld [vmem:[#allocation5 + $0x60] sm:$0xff]
        %v529 = vld [vmem:[#allocation5 + $0x68] sm:$0xff]
        %v530 = vld [vmem:[#allocation5 + $0x70] sm:$0xff]
        %v531 = vld [vmem:[#allocation5 + $0x78] sm:$0xff]
        %v532 = vld [vmem:[#allocation5 + $0x80] sm:$0xff]
        %v533 = vld [vmem:[#allocation5 + $0x88] sm:$0xff]
        %v534 = vld [vmem:[#allocation5 + $0x90] sm:$0xff]
        %v535 = vld [vmem:[#allocation5 + $0x98] sm:$0xff]
        %v536 = vld [vmem:[#allocation5 + $0xa0] sm:$0xff]
        %v537 = vld [vmem:[#allocation5 + $0xa8] sm:$0xff]
        %v538 = vld [vmem:[#allocation5 + $0xb0] sm:$0xff]
        %v539 = vld [vmem:[#allocation5 + $0xb8] sm:$0xff]
        %v540 = vld [vmem:[#allocation5 + $0xc0] sm:$0xff]
        %v541 = vld [vmem:[#allocation5 + $0xc8] sm:$0xff]
        %v542 = vld [vmem:[#allocation5 + $0xd0] sm:$0xff]
        %v543 = vld [vmem:[#allocation5 + $0xd8] sm:$0xff]
        %v544 = vld [vmem:[#allocation5 + $0xe0] sm:$0xff]
        %v545 = vld [vmem:[#allocation5 + $0xe8] sm:$0xff]
        %v546 = vld [vmem:[#allocation5 + $0xf0] sm:$0xff]
        %v547 = vld [vmem:[#allocation5 + $0xf8] sm:$0xff]
        %v548 = vld [vmem:[#allocation5 + $0x100] sm:$0xff]
        %v549 = vld [vmem:[#allocation5 + $0x108] sm:$0xff]
        %v550 = vld [vmem:[#allocation5 + $0x110] sm:$0xff]
        %v551 = vld [vmem:[#allocation5 + $0x118] sm:$0xff]
        %v552 = vld [vmem:[#allocation5 + $0x120] sm:$0xff]
        %v553 = vld [vmem:[#allocation5 + $0x128] sm:$0xff]
        %v554 = vld [vmem:[#allocation5 + $0x130] sm:$0xff]
        %v555 = vld [vmem:[#allocation5 + $0x138] sm:$0xff]
        %v556 = vld [vmem:[#allocation5 + $0x140] sm:$0xff]
        %v557 = vld [vmem:[#allocation5 + $0x148] sm:$0xff]
        %v558 = vld [vmem:[#allocation5 + $0x150] sm:$0xff]
        %v559 = vld [vmem:[#allocation5 + $0x158] sm:$0xff]
        %v560 = vld [vmem:[#allocation5 + $0x160] sm:$0xff]
        %v561 = vld [vmem:[#allocation5 + $0x168] sm:$0xff]
        %v562 = vld [vmem:[#allocation5 + $0x170] sm:$0xff]
        %v563 = vld [vmem:[#allocation5 + $0x178] sm:$0xff]
        %v564 = vld [vmem:[#allocation5 + $0x180] sm:$0xff]
        %v565 = vld [vmem:[#allocation5 + $0x188] sm:$0xff]
        %v566 = vld [vmem:[#allocation5 + $0x190] sm:$0xff]
        %v567 = vld [vmem:[#allocation5 + $0x198] sm:$0xff]
        %v568 = vld [vmem:[#allocation5 + $0x1a0] sm:$0xff]
        %v569 = vld [vmem:[#allocation5 + $0x1a8] sm:$0xff]
        %v570 = vld [vmem:[#allocation5 + $0x1b0] sm:$0xff]
        %v571 = vld [vmem:[#allocation5 + $0x1b8] sm:$0xff]
        %v572 = vld [vmem:[#allocation5 + $0x1c0] sm:$0xff]
        %v573 = vld [vmem:[#allocation5 + $0x1c8] sm:$0xff]
        %v574 = vld [vmem:[#allocation5 + $0x1d0] sm:$0xff]
        %v575 = vld [vmem:[#allocation5 + $0x1d8] sm:$0xff]
        %v576 = vld [vmem:[#allocation5 + $0x1e0] sm:$0xff]
        %v577 = vld [vmem:[#allocation5 + $0x1e8] sm:$0xff]
        %v578 = vld [vmem:[#allocation5 + $0x1f0] sm:$0xff]
        %v579 = vld [vmem:[#allocation5 + $0x1f8] sm:$0xff]
        %v580 = vld [vmem:[#allocation5 + $0x200] sm:$0xff]
        %v581 = vld [vmem:[#allocation5 + $0x208] sm:$0xff]
        %v582 = vld [vmem:[#allocation5 + $0x210] sm:$0xff]
        %v583 = vld [vmem:[#allocation5 + $0x218] sm:$0xff]
        %v584 = vld [vmem:[#allocation5 + $0x220] sm:$0xff]
        %v585 = vld [vmem:[#allocation5 + $0x228] sm:$0xff]
        %v586 = vld [vmem:[#allocation5 + $0x230] sm:$0xff]
        %v587 = vld [vmem:[#allocation5 + $0x238] sm:$0xff]
        %v588 = vld [vmem:[#allocation5 + $0x240] sm:$0xff]
        %v589 = vld [vmem:[#allocation5 + $0x248] sm:$0xff]
        %v590 = vld [vmem:[#allocation5 + $0x250] sm:$0xff]
        %v591 = vld [vmem:[#allocation5 + $0x258] sm:$0xff]
        %v592 = vld [vmem:[#allocation5 + $0x260] sm:$0xff]
        %v593 = vld [vmem:[#allocation5 + $0x268] sm:$0xff]
        %v594 = vld [vmem:[#allocation5 + $0x270] sm:$0xff]
        %v595 = vld [vmem:[#allocation5 + $0x278] sm:$0xff]
        %v596 = vld [vmem:[#allocation5 + $0x280] sm:$0xff]
        %v597 = vld [vmem:[#allocation5 + $0x288] sm:$0xff]
        %v598 = vld [vmem:[#allocation5 + $0x290] sm:$0xff]
        %v599 = vld [vmem:[#allocation5 + $0x298] sm:$0xff]
        %v600 = vld [vmem:[#allocation5 + $0x2a0] sm:$0xff]
        %v601 = vld [vmem:[#allocation5 + $0x2a8] sm:$0xff]
        %v602 = vld [vmem:[#allocation5 + $0x2b0] sm:$0xff]
        %v603 = vld [vmem:[#allocation5 + $0x2b8] sm:$0xff]
        %v604 = vld [vmem:[#allocation5 + $0x2c0] sm:$0xff]
        %v605 = vld [vmem:[#allocation5 + $0x2c8] sm:$0xff]
        %v606 = vld [vmem:[#allocation5 + $0x2d0] sm:$0xff]
        %v607 = vld [vmem:[#allocation5 + $0x2d8] sm:$0xff]
        %v608 = vld [vmem:[#allocation5 + $0x2e0] sm:$0xff]
        %v609 = vld [vmem:[#allocation5 + $0x2e8] sm:$0xff]
        %v610 = vld [vmem:[#allocation5 + $0x2f0] sm:$0xff]
        %v611 = vld [vmem:[#allocation5 + $0x2f8] sm:$0xff]
        %v612 = vld [vmem:[#allocation5 + $0x300] sm:$0xff]
        %v613 = vld [vmem:[#allocation5 + $0x308] sm:$0xff]
        %v614 = vld [vmem:[#allocation5 + $0x310] sm:$0xff]
        %v615 = vld [vmem:[#allocation5 + $0x318] sm:$0xff]
        %v616 = vld [vmem:[#allocation5 + $0x320] sm:$0xff]
        %v617 = vld [vmem:[#allocation5 + $0x328] sm:$0xff]
        %v618 = vld [vmem:[#allocation5 + $0x330] sm:$0xff]
        %v619 = vld [vmem:[#allocation5 + $0x338] sm:$0xff]
        %v620 = vld [vmem:[#allocation5 + $0x340] sm:$0xff]
        %v621 = vld [vmem:[#allocation5 + $0x348] sm:$0xff]
        %v622 = vld [vmem:[#allocation5 + $0x350] sm:$0xff]
        %v623 = vld [vmem:[#allocation5 + $0x358] sm:$0xff]
        %v624 = vld [vmem:[#allocation5 + $0x360] sm:$0xff]
        %v625 = vld [vmem:[#allocation5 + $0x368] sm:$0xff]
        %v626 = vld [vmem:[#allocation5 + $0x370] sm:$0xff]
        %v627 = vld [vmem:[#allocation5 + $0x378] sm:$0xff]
        %v628 = vld [vmem:[#allocation5 + $0x380] sm:$0xff]
        %v629 = vld [vmem:[#allocation5 + $0x388] sm:$0xff]
        %v630 = vld [vmem:[#allocation5 + $0x390] sm:$0xff]
        %v631 = vld [vmem:[#allocation5 + $0x398] sm:$0xff]
        %v632 = vld [vmem:[#allocation5 + $0x3a0] sm:$0xff]
        %v633 = vld [vmem:[#allocation5 + $0x3a8] sm:$0xff]
        %v634 = vld [vmem:[#allocation5 + $0x3b0] sm:$0xff]
        %v635 = vld [vmem:[#allocation5 + $0x3b8] sm:$0xff]
        %v636 = vld [vmem:[#allocation5 + $0x3c0] sm:$0xff]
        %v637 = vld [vmem:[#allocation5 + $0x3c8] sm:$0xff]
        %v638 = vld [vmem:[#allocation5 + $0x3d0] sm:$0xff]
        %v639 = vld [vmem:[#allocation5 + $0x3d8] sm:$0xff]
        %v640 = vld [vmem:[#allocation5 + $0x3e0] sm:$0xff]
        %v641 = vld [vmem:[#allocation5 + $0x3e8] sm:$0xff]
        %v642 = vld [vmem:[#allocation5 + $0x3f0] sm:$0xff]
        %v643 = vld [vmem:[#allocation5 + $0x3f8] sm:$0xff]
        %644 = vmatprep.subr.mxu0 0.0
        %645 = vmatpush1.msra.mxu0 %v516
        %646 = vmatprep.subr.mxu0 0.0
        %647 = vmatpush1.msra.mxu0 %v517
        %648 = vmatprep.subr.mxu0 0.0
        %649 = vmatpush1.msra.mxu0 %v518
        %650 = vmatprep.subr.mxu0 0.0
        %651 = vmatpush1.msra.mxu0 %v519
        %652 = vmatprep.subr.mxu0 0.0
        %653 = vmatpush1.msra.mxu0 %v520
        %654 = vmatprep.subr.mxu0 0.0
        %655 = vmatpush1.msra.mxu0 %v521
        %656 = vmatprep.subr.mxu0 0.0
        %657 = vmatpush1.msra.mxu0 %v522
        %658 = vmatprep.subr.mxu0 0.0
        %659 = vmatpush1.msra.mxu0 %v523
        %660 = vmatprep.subr.mxu0 0.0
        %661 = vmatpush1.msra.mxu0 %v524
        %662 = vmatprep.subr.mxu0 0.0
        %663 = vmatpush1.msra.mxu0 %v525
        %664 = vmatprep.subr.mxu0 0.0
        %665 = vmatpush1.msra.mxu0 %v526
        %666 = vmatprep.subr.mxu0 0.0
        %667 = vmatpush1.msra.mxu0 %v527
        %668 = vmatprep.subr.mxu0 0.0
        %669 = vmatpush1.msra.mxu0 %v528
        %670 = vmatprep.subr.mxu0 0.0
        %671 = vmatpush1.msra.mxu0 %v529
        %672 = vmatprep.subr.mxu0 0.0
        %673 = vmatpush1.msra.mxu0 %v530
        %674 = vmatprep.subr.mxu0 0.0
        %675 = vmatpush1.msra.mxu0 %v531
        %676 = vmatprep.subr.mxu0 0.0
        %677 = vmatpush1.msra.mxu0 %v532
        %678 = vmatprep.subr.mxu0 0.0
        %679 = vmatpush1.msra.mxu0 %v533
        %680 = vmatprep.subr.mxu0 0.0
        %681 = vmatpush1.msra.mxu0 %v534
        %682 = vmatprep.subr.mxu0 0.0
        %683 = vmatpush1.msra.mxu0 %v535
        %684 = vmatprep.subr.mxu0 0.0
        %685 = vmatpush1.msra.mxu0 %v536
        %686 = vmatprep.subr.mxu0 0.0
        %687 = vmatpush1.msra.mxu0 %v537
        %688 = vmatprep.subr.mxu0 0.0
        %689 = vmatpush1.msra.mxu0 %v538
        %690 = vmatprep.subr.mxu0 0.0
        %691 = vmatpush1.msra.mxu0 %v539
        %692 = vmatprep.subr.mxu0 0.0
        %693 = vmatpush1.msra.mxu0 %v540
        %694 = vmatprep.subr.mxu0 0.0
        %695 = vmatpush1.msra.mxu0 %v541
        %696 = vmatprep.subr.mxu0 0.0
        %697 = vmatpush1.msra.mxu0 %v542
        %698 = vmatprep.subr.mxu0 0.0
        %699 = vmatpush1.msra.mxu0 %v543
        %700 = vmatprep.subr.mxu0 0.0
        %701 = vmatpush1.msra.mxu0 %v544
        %702 = vmatprep.subr.mxu0 0.0
        %703 = vmatpush1.msra.mxu0 %v545
        %704 = vmatprep.subr.mxu0 0.0
        %705 = vmatpush1.msra.mxu0 %v546
        %706 = vmatprep.subr.mxu0 0.0
        %707 = vmatpush1.msra.mxu0 %v547
        %708 = vmatprep.mubr.f32.mxu0 %v500
        %709 = vmatmul.mubr.f32.gmra.mrb[0].mxu0 %v499
        %v710 = vpop.f32.mrb[0].mxu0
        %v711 = vadd.f32 0.0, %v710
        %v712 = vpop.f32.mrb[0].mxu0
        %713 = vdwg.mxu0
        %714 = vmatprep.subr.mxu0 0.0
        %715 = vmatpush1.msra.mxu0 %v548
        %716 = vmatprep.subr.mxu0 0.0
        %717 = vmatpush1.msra.mxu0 %v549
        %718 = vmatprep.subr.mxu0 0.0
        %719 = vmatpush1.msra.mxu0 %v550
        %720 = vmatprep.subr.mxu0 0.0
        %721 = vmatpush1.msra.mxu0 %v551
        %722 = vmatprep.subr.mxu0 0.0
        %723 = vmatpush1.msra.mxu0 %v552
        %724 = vmatprep.subr.mxu0 0.0
        %725 = vmatpush1.msra.mxu0 %v553
        %726 = vmatprep.subr.mxu0 0.0
        %727 = vmatpush1.msra.mxu0 %v554
        %728 = vmatprep.subr.mxu0 0.0
        %729 = vmatpush1.msra.mxu0 %v555
        %730 = vmatprep.subr.mxu0 0.0
        %731 = vmatpush1.msra.mxu0 %v556
        %732 = vmatprep.subr.mxu0 0.0
        %733 = vmatpush1.msra.mxu0 %v557
        %734 = vmatprep.subr.mxu0 0.0
        %735 = vmatpush1.msra.mxu0 %v558
        %736 = vmatprep.subr.mxu0 0.0
        %737 = vmatpush1.msra.mxu0 %v559
        %738 = vmatprep.subr.mxu0 0.0
        %739 = vmatpush1.msra.mxu0 %v560
        %740 = vmatprep.subr.mxu0 0.0
        %741 = vmatpush1.msra.mxu0 %v561
        %742 = vmatprep.subr.mxu0 0.0
        %743 = vmatpush1.msra.mxu0 %v562
        %744 = vmatprep.subr.mxu0 0.0
        %745 = vmatpush1.msra.mxu0 %v563
        %746 = vmatprep.subr.mxu0 0.0
        %747 = vmatpush1.msra.mxu0 %v564
        %748 = vmatprep.subr.mxu0 0.0
        %749 = vmatpush1.msra.mxu0 %v565
        %750 = vmatprep.subr.mxu0 0.0
        %751 = vmatpush1.msra.mxu0 %v566
        %752 = vmatprep.subr.mxu0 0.0
        %753 = vmatpush1.msra.mxu0 %v567
        %754 = vmatprep.subr.mxu0 0.0
        %755 = vmatpush1.msra.mxu0 %v568
        %756 = vmatprep.subr.mxu0 0.0
        %757 = vmatpush1.msra.mxu0 %v569
        %758 = vmatprep.subr.mxu0 0.0
        %759 = vmatpush1.msra.mxu0 %v570
        %760 = vmatprep.subr.mxu0 0.0
        %761 = vmatpush1.msra.mxu0 %v571
        %762 = vmatprep.subr.mxu0 0.0
        %763 = vmatpush1.msra.mxu0 %v572
        %764 = vmatprep.subr.mxu0 0.0
        %765 = vmatpush1.msra.mxu0 %v573
        %766 = vmatprep.subr.mxu0 0.0
        %767 = vmatpush1.msra.mxu0 %v574
        %768 = vmatprep.subr.mxu0 0.0
        %769 = vmatpush1.msra.mxu0 %v575
        %770 = vmatprep.subr.mxu0 0.0
        %771 = vmatpush1.msra.mxu0 %v576
        %772 = vmatprep.subr.mxu0 0.0
        %773 = vmatpush1.msra.mxu0 %v577
        %774 = vmatprep.subr.mxu0 0.0
        %775 = vmatpush1.msra.mxu0 %v578
        %776 = vmatprep.subr.mxu0 0.0
        %777 = vmatpush1.msra.mxu0 %v579
        %778 = vmatprep.mubr.f32.mxu0 %v502
        %779 = vmatmul.mubr.f32.gmra.mrb[0].mxu0 %v501
        %v780 = vpop.f32.mrb[0].mxu0
        %v781 = vadd.f32 %v711, %v780
        %v782 = vpop.f32.mrb[0].mxu0
        %783 = vdwg.mxu0
        %784 = vmatprep.subr.mxu0 0.0
        %785 = vmatpush1.msra.mxu0 %v580
        %786 = vmatprep.subr.mxu0 0.0
        %787 = vmatpush1.msra.mxu0 %v581
        %788 = vmatprep.subr.mxu0 0.0
        %789 = vmatpush1.msra.mxu0 %v582
        %790 = vmatprep.subr.mxu0 0.0
        %791 = vmatpush1.msra.mxu0 %v583
        %792 = vmatprep.subr.mxu0 0.0
        %793 = vmatpush1.msra.mxu0 %v584
        %794 = vmatprep.subr.mxu0 0.0
        %795 = vmatpush1.msra.mxu0 %v585
        %796 = vmatprep.subr.mxu0 0.0
        %797 = vmatpush1.msra.mxu0 %v586
        %798 = vmatprep.subr.mxu0 0.0
        %799 = vmatpush1.msra.mxu0 %v587
        %800 = vmatprep.subr.mxu0 0.0
        %801 = vmatpush1.msra.mxu0 %v588
        %802 = vmatprep.subr.mxu0 0.0
        %803 = vmatpush1.msra.mxu0 %v589
        %804 = vmatprep.subr.mxu0 0.0
        %805 = vmatpush1.msra.mxu0 %v590
        %806 = vmatprep.subr.mxu0 0.0
        %807 = vmatpush1.msra.mxu0 %v591
        %808 = vmatprep.subr.mxu0 0.0
        %809 = vmatpush1.msra.mxu0 %v592
        %810 = vmatprep.subr.mxu0 0.0
        %811 = vmatpush1.msra.mxu0 %v593
        %812 = vmatprep.subr.mxu0 0.0
        %813 = vmatpush1.msra.mxu0 %v594
        %814 = vmatprep.subr.mxu0 0.0
        %815 = vmatpush1.msra.mxu0 %v595
        %816 = vmatprep.subr.mxu0 0.0
        %817 = vmatpush1.msra.mxu0 %v596
        %818 = vmatprep.subr.mxu0 0.0
        %819 = vmatpush1.msra.mxu0 %v597
        %820 = vmatprep.subr.mxu0 0.0
        %821 = vmatpush1.msra.mxu0 %v598
        %822 = vmatprep.subr.mxu0 0.0
        %823 = vmatpush1.msra.mxu0 %v599
        %824 = vmatprep.subr.mxu0 0.0
        %825 = vmatpush1.msra.mxu0 %v600
        %826 = vmatprep.subr.mxu0 0.0
        %827 = vmatpush1.msra.mxu0 %v601
        %828 = vmatprep.subr.mxu0 0.0
        %829 = vmatpush1.msra.mxu0 %v602
        %830 = vmatprep.subr.mxu0 0.0
        %831 = vmatpush1.msra.mxu0 %v603
        %832 = vmatprep.subr.mxu0 0.0
        %833 = vmatpush1.msra.mxu0 %v604
        %834 = vmatprep.subr.mxu0 0.0
        %835 = vmatpush1.msra.mxu0 %v605
        %836 = vmatprep.subr.mxu0 0.0
        %837 = vmatpush1.msra.mxu0 %v606
        %838 = vmatprep.subr.mxu0 0.0
        %839 = vmatpush1.msra.mxu0 %v607
        %840 = vmatprep.subr.mxu0 0.0
        %841 = vmatpush1.msra.mxu0 %v608
        %842 = vmatprep.subr.mxu0 0.0
        %843 = vmatpush1.msra.mxu0 %v609
        %844 = vmatprep.subr.mxu0 0.0
        %845 = vmatpush1.msra.mxu0 %v610
        %846 = vmatprep.subr.mxu0 0.0
        %847 = vmatpush1.msra.mxu0 %v611
        %848 = vmatprep.mubr.f32.mxu0 %v504
        %849 = vmatmul.mubr.f32.gmra.mrb[0].mxu0 %v503
        %v850 = vpop.f32.mrb[0].mxu0
        %v851 = vadd.f32 %v781, %v850
        %v852 = vpop.f32.mrb[0].mxu0
        %853 = vdwg.mxu0
        %854 = vmatprep.subr.mxu0 0.0
        %855 = vmatpush1.msra.mxu0 %v612
        %856 = vmatprep.subr.mxu0 0.0
        %857 = vmatpush1.msra.mxu0 %v613
        %858 = vmatprep.subr.mxu0 0.0
        %859 = vmatpush1.msra.mxu0 %v614
        %860 = vmatprep.subr.mxu0 0.0
        %861 = vmatpush1.msra.mxu0 %v615
        %862 = vmatprep.subr.mxu0 0.0
        %863 = vmatpush1.msra.mxu0 %v616
        %864 = vmatprep.subr.mxu0 0.0
        %865 = vmatpush1.msra.mxu0 %v617
        %866 = vmatprep.subr.mxu0 0.0
        %867 = vmatpush1.msra.mxu0 %v618
        %868 = vmatprep.subr.mxu0 0.0
        %869 = vmatpush1.msra.mxu0 %v619
        %870 = vmatprep.subr.mxu0 0.0
        %871 = vmatpush1.msra.mxu0 %v620
        %872 = vmatprep.subr.mxu0 0.0
        %873 = vmatpush1.msra.mxu0 %v621
        %874 = vmatprep.subr.mxu0 0.0
        %875 = vmatpush1.msra.mxu0 %v622
        %876 = vmatprep.subr.mxu0 0.0
        %877 = vmatpush1.msra.mxu0 %v623
        %878 = vmatprep.subr.mxu0 0.0
        %879 = vmatpush1.msra.mxu0 %v624
        %880 = vmatprep.subr.mxu0 0.0
        %881 = vmatpush1.msra.mxu0 %v625
        %882 = vmatprep.subr.mxu0 0.0
        %883 = vmatpush1.msra.mxu0 %v626
        %884 = vmatprep.subr.mxu0 0.0
        %885 = vmatpush1.msra.mxu0 %v627
        %886 = vmatprep.subr.mxu0 0.0
        %887 = vmatpush1.msra.mxu0 %v628
        %888 = vmatprep.subr.mxu0 0.0
        %889 = vmatpush1.msra.mxu0 %v629
        %890 = vmatprep.subr.mxu0 0.0
        %891 = vmatpush1.msra.mxu0 %v630
        %892 = vmatprep.subr.mxu0 0.0
        %893 = vmatpush1.msra.mxu0 %v631
        %894 = vmatprep.subr.mxu0 0.0
        %895 = vmatpush1.msra.mxu0 %v632
        %896 = vmatprep.subr.mxu0 0.0
        %897 = vmatpush1.msra.mxu0 %v633
        %898 = vmatprep.subr.mxu0 0.0
        %899 = vmatpush1.msra.mxu0 %v634
        %900 = vmatprep.subr.mxu0 0.0
        %901 = vmatpush1.msra.mxu0 %v635
        %902 = vmatprep.subr.mxu0 0.0
        %903 = vmatpush1.msra.mxu0 %v636
        %904 = vmatprep.subr.mxu0 0.0
        %905 = vmatpush1.msra.mxu0 %v637
        %906 = vmatprep.subr.mxu0 0.0
        %907 = vmatpush1.msra.mxu0 %v638
        %908 = vmatprep.subr.mxu0 0.0
        %909 = vmatpush1.msra.mxu0 %v639
        %910 = vmatprep.subr.mxu0 0.0
        %911 = vmatpush1.msra.mxu0 %v640
        %912 = vmatprep.subr.mxu0 0.0
        %913 = vmatpush1.msra.mxu0 %v641
        %914 = vmatprep.subr.mxu0 0.0
        %915 = vmatpush1.msra.mxu0 %v642
        %916 = vmatprep.subr.mxu0 0.0
        %917 = vmatpush1.msra.mxu0 %v643
        %918 = vmatprep.mubr.f32.mxu0 %v506
        %919 = vmatmul.mubr.f32.gmra.mrb[0].mxu0 %v505
        %v920 = vpop.f32.mrb[0].mxu0
        %v921 = vadd.f32 %v851, %v920
        %v922 = vpop.f32.mrb[0].mxu0
        %923 = vdwg.mxu0
        %v924 = vld [vmem:[#allocation14] sm:$0xff]
        %926 = vset.pattern.permute.xlu0 0
        %927 = vperm.xlu0 %926, %v507
        %v928 = vpop.permute.xlu0 %927
        %vm930 = vcmask 64512
        %v932 = vsel %vm930, %v924, 0
        %934 = vmatprep.subr.mxu0 0.0
        %935 = vmatpush1.msra.mxu0 %v921
        %936 = vmatprep.subr.mxu0 0.0
        %937 = vmatpush1.msra.mxu0 0.0
        %938 = vmatprep.subr.mxu0 0.0
        %939 = vmatpush1.msra.mxu0 0.0
        %940 = vmatprep.subr.mxu0 0.0
        %941 = vmatpush1.msra.mxu0 0.0
        %942 = vmatprep.subr.mxu0 0.0
        %943 = vmatpush1.msra.mxu0 0.0
        %944 = vmatprep.subr.mxu0 0.0
        %945 = vmatpush1.msra.mxu0 0.0
        %946 = vmatprep.subr.mxu0 0.0
        %947 = vmatpush1.msra.mxu0 0.0
        %948 = vmatprep.subr.mxu0 0.0
        %949 = vmatpush1.msra.mxu0 0.0
        %950 = vmatprep.subr.mxu0 0.0
        %951 = vmatpush1.msra.mxu0 0.0
        %952 = vmatprep.subr.mxu0 0.0
        %953 = vmatpush1.msra.mxu0 0.0
        %954 = vmatprep.subr.mxu0 0.0
        %955 = vmatpush1.msra.mxu0 0.0
        %956 = vmatprep.subr.mxu0 0.0
        %957 = vmatpush1.msra.mxu0 0.0
        %958 = vmatprep.subr.mxu0 0.0
        %959 = vmatpush1.msra.mxu0 0.0
        %960 = vmatprep.subr.mxu0 0.0
        %961 = vmatpush1.msra.mxu0 0.0
        %962 = vmatprep.subr.mxu0 0.0
        %963 = vmatpush1.msra.mxu0 0.0
        %964 = vmatprep.subr.mxu0 0.0
        %965 = vmatpush1.msra.mxu0 0.0
        %966 = vmatprep.subr.mxu0 0.0
        %967 = vmatpush1.msra.mxu0 0.0
        %968 = vmatprep.subr.mxu0 0.0
        %969 = vmatpush1.msra.mxu0 0.0
        %970 = vmatprep.subr.mxu0 0.0
        %971 = vmatpush1.msra.mxu0 0.0
        %972 = vmatprep.subr.mxu0 0.0
        %973 = vmatpush1.msra.mxu0 0.0
        %974 = vmatprep.subr.mxu0 0.0
        %975 = vmatpush1.msra.mxu0 0.0
        %976 = vmatprep.subr.mxu0 0.0
        %977 = vmatpush1.msra.mxu0 0.0
        %978 = vmatprep.subr.mxu0 0.0
        %979 = vmatpush1.msra.mxu0 0.0
        %980 = vmatprep.subr.mxu0 0.0
        %981 = vmatpush1.msra.mxu0 0.0
        %982 = vmatprep.subr.mxu0 0.0
        %983 = vmatpush1.msra.mxu0 0.0
        %984 = vmatprep.subr.mxu0 0.0
        %985 = vmatpush1.msra.mxu0 0.0
        %986 = vmatprep.subr.mxu0 0.0
        %987 = vmatpush1.msra.mxu0 0.0
        %988 = vmatprep.subr.mxu0 0.0
        %989 = vmatpush1.msra.mxu0 0.0
        %990 = vmatprep.subr.mxu0 0.0
        %991 = vmatpush1.msra.mxu0 0.0
        %992 = vmatprep.subr.mxu0 0.0
        %993 = vmatpush1.msra.mxu0 0.0
        %994 = vmatprep.subr.mxu0 0.0
        %995 = vmatpush1.msra.mxu0 0.0
        %996 = vmatprep.subr.mxu0 0.0
        %997 = vmatpush1.msra.mxu0 0.0
        %998 = vmatprep.mubr.f32.mxu0 0.0
        %999 = vmatmul.mubr.f32.gmra.mrb[0].mxu0 %v932
        %v1000 = vpop.f32.mrb[0].mxu0
        %v1001 = vadd.f32 %v928, %v1000
        %v1002 = vpop.f32.mrb[0].mxu0
        %1003 = vdwg.mxu0
        %v1004 = vxor.u32 %v1001, 2147483648
        %v1005 = vmul.f32 %v1004, 1.442695
        %v1006 = vpow.pop %v1005
        %v1007 = vadd.f32 %v1006, 1.0
        %v1008 = vrcp.pop %v1007
        %v1009 = vmul.f32 1.0, %v1008
        %v1010 = vld [vmem:[#allocation7] sm:$0xff]
        %v1011 = vld [vmem:[#allocation7 + $0x8] sm:$0xff]
        %v1012 = vld [vmem:[#allocation7 + $0x10] sm:$0xff]
        %v1013 = vld [vmem:[#allocation7 + $0x18] sm:$0xff]
        %v1014 = vld [vmem:[#allocation7 + $0x20] sm:$0xff]
        %v1015 = vld [vmem:[#allocation7 + $0x28] sm:$0xff]
        %v1016 = vld [vmem:[#allocation7 + $0x30] sm:$0xff]
        %v1017 = vld [vmem:[#allocation7 + $0x38] sm:$0xff]
        %v1018 = vld [vmem:[#allocation7 + $0x40] sm:$0xff]
        %v1019 = vld [vmem:[#allocation7 + $0x48] sm:$0xff]
        %v1020 = vld [vmem:[#allocation7 + $0x50] sm:$0xff]
        %v1021 = vld [vmem:[#allocation7 + $0x58] sm:$0xff]
        %v1022 = vld [vmem:[#allocation7 + $0x60] sm:$0xff]
        %v1023 = vld [vmem:[#allocation7 + $0x68] sm:$0xff]
        %v1024 = vld [vmem:[#allocation7 + $0x70] sm:$0xff]
        %v1025 = vld [vmem:[#allocation7 + $0x78] sm:$0xff]
        %v1026 = vld [vmem:[#allocation7 + $0x80] sm:$0xff]
        %v1027 = vld [vmem:[#allocation7 + $0x88] sm:$0xff]
        %v1028 = vld [vmem:[#allocation7 + $0x90] sm:$0xff]
        %v1029 = vld [vmem:[#allocation7 + $0x98] sm:$0xff]
        %v1030 = vld [vmem:[#allocation7 + $0xa0] sm:$0xff]
        %v1031 = vld [vmem:[#allocation7 + $0xa8] sm:$0xff]
        %v1032 = vld [vmem:[#allocation7 + $0xb0] sm:$0xff]
        %v1033 = vld [vmem:[#allocation7 + $0xb8] sm:$0xff]
        %v1034 = vld [vmem:[#allocation7 + $0xc0] sm:$0xff]
        %v1035 = vld [vmem:[#allocation7 + $0xc8] sm:$0xff]
        %v1036 = vld [vmem:[#allocation7 + $0xd0] sm:$0xff]
        %v1037 = vld [vmem:[#allocation7 + $0xd8] sm:$0xff]
        %v1038 = vld [vmem:[#allocation7 + $0xe0] sm:$0xff]
        %v1039 = vld [vmem:[#allocation7 + $0xe8] sm:$0xff]
        %v1040 = vld [vmem:[#allocation7 + $0xf0] sm:$0xff]
        %v1041 = vld [vmem:[#allocation7 + $0xf8] sm:$0xff]
        %v1042 = vld [vmem:[#allocation7 + $0x100] sm:$0xff]
        %v1043 = vld [vmem:[#allocation7 + $0x108] sm:$0xff]
        %v1044 = vld [vmem:[#allocation7 + $0x110] sm:$0xff]
        %v1045 = vld [vmem:[#allocation7 + $0x118] sm:$0xff]
        %v1046 = vld [vmem:[#allocation7 + $0x120] sm:$0xff]
        %v1047 = vld [vmem:[#allocation7 + $0x128] sm:$0xff]
        %v1048 = vld [vmem:[#allocation7 + $0x130] sm:$0xff]
        %v1049 = vld [vmem:[#allocation7 + $0x138] sm:$0xff]
        %v1050 = vld [vmem:[#allocation7 + $0x140] sm:$0xff]
        %v1051 = vld [vmem:[#allocation7 + $0x148] sm:$0xff]
        %v1052 = vld [vmem:[#allocation7 + $0x150] sm:$0xff]
        %v1053 = vld [vmem:[#allocation7 + $0x158] sm:$0xff]
        %v1054 = vld [vmem:[#allocation7 + $0x160] sm:$0xff]
        %v1055 = vld [vmem:[#allocation7 + $0x168] sm:$0xff]
        %v1056 = vld [vmem:[#allocation7 + $0x170] sm:$0xff]
        %v1057 = vld [vmem:[#allocation7 + $0x178] sm:$0xff]
        %v1058 = vld [vmem:[#allocation7 + $0x180] sm:$0xff]
        %v1059 = vld [vmem:[#allocation7 + $0x188] sm:$0xff]
        %v1060 = vld [vmem:[#allocation7 + $0x190] sm:$0xff]
        %v1061 = vld [vmem:[#allocation7 + $0x198] sm:$0xff]
        %v1062 = vld [vmem:[#allocation7 + $0x1a0] sm:$0xff]
        %v1063 = vld [vmem:[#allocation7 + $0x1a8] sm:$0xff]
        %v1064 = vld [vmem:[#allocation7 + $0x1b0] sm:$0xff]
        %v1065 = vld [vmem:[#allocation7 + $0x1b8] sm:$0xff]
        %v1066 = vld [vmem:[#allocation7 + $0x1c0] sm:$0xff]
        %v1067 = vld [vmem:[#allocation7 + $0x1c8] sm:$0xff]
        %v1068 = vld [vmem:[#allocation7 + $0x1d0] sm:$0xff]
        %v1069 = vld [vmem:[#allocation7 + $0x1d8] sm:$0xff]
        %v1070 = vld [vmem:[#allocation7 + $0x1e0] sm:$0xff]
        %v1071 = vld [vmem:[#allocation7 + $0x1e8] sm:$0xff]
        %v1072 = vld [vmem:[#allocation7 + $0x1f0] sm:$0xff]
        %v1073 = vld [vmem:[#allocation7 + $0x1f8] sm:$0xff]
        %v1074 = vld [vmem:[#allocation7 + $0x200] sm:$0xff]
        %v1075 = vld [vmem:[#allocation7 + $0x208] sm:$0xff]
        %v1076 = vld [vmem:[#allocation7 + $0x210] sm:$0xff]
        %v1077 = vld [vmem:[#allocation7 + $0x218] sm:$0xff]
        %v1078 = vld [vmem:[#allocation7 + $0x220] sm:$0xff]
        %v1079 = vld [vmem:[#allocation7 + $0x228] sm:$0xff]
        %v1080 = vld [vmem:[#allocation7 + $0x230] sm:$0xff]
        %v1081 = vld [vmem:[#allocation7 + $0x238] sm:$0xff]
        %v1082 = vld [vmem:[#allocation7 + $0x240] sm:$0xff]
        %v1083 = vld [vmem:[#allocation7 + $0x248] sm:$0xff]
        %v1084 = vld [vmem:[#allocation7 + $0x250] sm:$0xff]
        %v1085 = vld [vmem:[#allocation7 + $0x258] sm:$0xff]
        %v1086 = vld [vmem:[#allocation7 + $0x260] sm:$0xff]
        %v1087 = vld [vmem:[#allocation7 + $0x268] sm:$0xff]
        %v1088 = vld [vmem:[#allocation7 + $0x270] sm:$0xff]
        %v1089 = vld [vmem:[#allocation7 + $0x278] sm:$0xff]
        %v1090 = vld [vmem:[#allocation7 + $0x280] sm:$0xff]
        %v1091 = vld [vmem:[#allocation7 + $0x288] sm:$0xff]
        %v1092 = vld [vmem:[#allocation7 + $0x290] sm:$0xff]
        %v1093 = vld [vmem:[#allocation7 + $0x298] sm:$0xff]
        %v1094 = vld [vmem:[#allocation7 + $0x2a0] sm:$0xff]
        %v1095 = vld [vmem:[#allocation7 + $0x2a8] sm:$0xff]
        %v1096 = vld [vmem:[#allocation7 + $0x2b0] sm:$0xff]
        %v1097 = vld [vmem:[#allocation7 + $0x2b8] sm:$0xff]
        %v1098 = vld [vmem:[#allocation7 + $0x2c0] sm:$0xff]
        %v1099 = vld [vmem:[#allocation7 + $0x2c8] sm:$0xff]
        %v1100 = vld [vmem:[#allocation7 + $0x2d0] sm:$0xff]
        %v1101 = vld [vmem:[#allocation7 + $0x2d8] sm:$0xff]
        %v1102 = vld [vmem:[#allocation7 + $0x2e0] sm:$0xff]
        %v1103 = vld [vmem:[#allocation7 + $0x2e8] sm:$0xff]
        %v1104 = vld [vmem:[#allocation7 + $0x2f0] sm:$0xff]
        %v1105 = vld [vmem:[#allocation7 + $0x2f8] sm:$0xff]
        %v1106 = vld [vmem:[#allocation7 + $0x300] sm:$0xff]
        %v1107 = vld [vmem:[#allocation7 + $0x308] sm:$0xff]
        %v1108 = vld [vmem:[#allocation7 + $0x310] sm:$0xff]
        %v1109 = vld [vmem:[#allocation7 + $0x318] sm:$0xff]
        %v1110 = vld [vmem:[#allocation7 + $0x320] sm:$0xff]
        %v1111 = vld [vmem:[#allocation7 + $0x328] sm:$0xff]
        %v1112 = vld [vmem:[#allocation7 + $0x330] sm:$0xff]
        %v1113 = vld [vmem:[#allocation7 + $0x338] sm:$0xff]
        %v1114 = vld [vmem:[#allocation7 + $0x340] sm:$0xff]
        %v1115 = vld [vmem:[#allocation7 + $0x348] sm:$0xff]
        %v1116 = vld [vmem:[#allocation7 + $0x350] sm:$0xff]
        %v1117 = vld [vmem:[#allocation7 + $0x358] sm:$0xff]
        %v1118 = vld [vmem:[#allocation7 + $0x360] sm:$0xff]
        %v1119 = vld [vmem:[#allocation7 + $0x368] sm:$0xff]
        %v1120 = vld [vmem:[#allocation7 + $0x370] sm:$0xff]
        %v1121 = vld [vmem:[#allocation7 + $0x378] sm:$0xff]
        %v1122 = vld [vmem:[#allocation7 + $0x380] sm:$0xff]
        %v1123 = vld [vmem:[#allocation7 + $0x388] sm:$0xff]
        %v1124 = vld [vmem:[#allocation7 + $0x390] sm:$0xff]
        %v1125 = vld [vmem:[#allocation7 + $0x398] sm:$0xff]
        %v1126 = vld [vmem:[#allocation7 + $0x3a0] sm:$0xff]
        %v1127 = vld [vmem:[#allocation7 + $0x3a8] sm:$0xff]
        %v1128 = vld [vmem:[#allocation7 + $0x3b0] sm:$0xff]
        %v1129 = vld [vmem:[#allocation7 + $0x3b8] sm:$0xff]
        %v1130 = vld [vmem:[#allocation7 + $0x3c0] sm:$0xff]
        %v1131 = vld [vmem:[#allocation7 + $0x3c8] sm:$0xff]
        %v1132 = vld [vmem:[#allocation7 + $0x3d0] sm:$0xff]
        %v1133 = vld [vmem:[#allocation7 + $0x3d8] sm:$0xff]
        %v1134 = vld [vmem:[#allocation7 + $0x3e0] sm:$0xff]
        %v1135 = vld [vmem:[#allocation7 + $0x3e8] sm:$0xff]
        %v1136 = vld [vmem:[#allocation7 + $0x3f0] sm:$0xff]
        %v1137 = vld [vmem:[#allocation7 + $0x3f8] sm:$0xff]
        %1138 = vmatprep.subr.mxu0 %v1011
        %1139 = vmatpush1.msra.mxu0 %v1010
        %1140 = vmatprep.subr.mxu0 %v1019
        %1141 = vmatpush1.msra.mxu0 %v1018
        %1142 = vmatprep.subr.mxu0 %v1027
        %1143 = vmatpush1.msra.mxu0 %v1026
        %1144 = vmatprep.subr.mxu0 %v1035
        %1145 = vmatpush1.msra.mxu0 %v1034
        %1146 = vmatprep.subr.mxu0 %v1043
        %1147 = vmatpush1.msra.mxu0 %v1042
        %1148 = vmatprep.subr.mxu0 %v1051
        %1149 = vmatpush1.msra.mxu0 %v1050
        %1150 = vmatprep.subr.mxu0 %v1059
        %1151 = vmatpush1.msra.mxu0 %v1058
        %1152 = vmatprep.subr.mxu0 %v1067
        %1153 = vmatpush1.msra.mxu0 %v1066
        %1154 = vmatprep.subr.mxu0 %v1075
        %1155 = vmatpush1.msra.mxu0 %v1074
        %1156 = vmatprep.subr.mxu0 %v1083
        %1157 = vmatpush1.msra.mxu0 %v1082
        %1158 = vmatprep.subr.mxu0 %v1091
        %1159 = vmatpush1.msra.mxu0 %v1090
        %1160 = vmatprep.subr.mxu0 %v1099
        %1161 = vmatpush1.msra.mxu0 %v1098
        %1162 = vmatprep.subr.mxu0 %v1107
        %1163 = vmatpush1.msra.mxu0 %v1106
        %1164 = vmatprep.subr.mxu0 %v1115
        %1165 = vmatpush1.msra.mxu0 %v1114
        %1166 = vmatprep.subr.mxu0 %v1123
        %1167 = vmatpush1.msra.mxu0 %v1122
        %1168 = vmatprep.subr.mxu0 %v1131
        %1169 = vmatpush1.msra.mxu0 %v1130
        %1170 = vmatprep.subr.mxu0 0.0
        %1171 = vmatpush1.msra.mxu0 0.0
        %1172 = vmatprep.subr.mxu0 0.0
        %1173 = vmatpush1.msra.mxu0 0.0
        %1174 = vmatprep.subr.mxu0 0.0
        %1175 = vmatpush1.msra.mxu0 0.0
        %1176 = vmatprep.subr.mxu0 0.0
        %1177 = vmatpush1.msra.mxu0 0.0
        %1178 = vmatprep.subr.mxu0 0.0
        %1179 = vmatpush1.msra.mxu0 0.0
        %1180 = vmatprep.subr.mxu0 0.0
        %1181 = vmatpush1.msra.mxu0 0.0
        %1182 = vmatprep.subr.mxu0 0.0
        %1183 = vmatpush1.msra.mxu0 0.0
        %1184 = vmatprep.subr.mxu0 0.0
        %1185 = vmatpush1.msra.mxu0 0.0
        %1186 = vmatprep.subr.mxu0 0.0
        %1187 = vmatpush1.msra.mxu0 0.0
        %1188 = vmatprep.subr.mxu0 0.0
        %1189 = vmatpush1.msra.mxu0 0.0
        %1190 = vmatprep.subr.mxu0 0.0
        %1191 = vmatpush1.msra.mxu0 0.0
        %1192 = vmatprep.subr.mxu0 0.0
        %1193 = vmatpush1.msra.mxu0 0.0
        %1194 = vmatprep.subr.mxu0 0.0
        %1195 = vmatpush1.msra.mxu0 0.0
        %1196 = vmatprep.subr.mxu0 0.0
        %1197 = vmatpush1.msra.mxu0 0.0
        %1198 = vmatprep.subr.mxu0 0.0
        %1199 = vmatpush1.msra.mxu0 0.0
        %1200 = vmatprep.subr.mxu0 0.0
        %1201 = vmatpush1.msra.mxu0 0.0
        %1202 = vmatprep.mubr.f32.mxu0 0.0
        %1203 = vmatmul.mubr.f32.gmra.mrb[0].mxu0 %v1009
        %v1204 = vpop.f32.mrb[0].mxu0
        %v1205 = vadd.f32 0.0, %v1204
        %v1206 = vpop.f32.mrb[0].mxu0
        %v1207 = vadd.f32 0.0, %v1206
        %1208 = vdwg.mxu0
        %1209 = vmatprep.subr.mxu0 %v1013
        %1210 = vmatpush1.msra.mxu0 %v1012
        %1211 = vmatprep.subr.mxu0 %v1021
        %1212 = vmatpush1.msra.mxu0 %v1020
        %1213 = vmatprep.subr.mxu0 %v1029
        %1214 = vmatpush1.msra.mxu0 %v1028
        %1215 = vmatprep.subr.mxu0 %v1037
        %1216 = vmatpush1.msra.mxu0 %v1036
        %1217 = vmatprep.subr.mxu0 %v1045
        %1218 = vmatpush1.msra.mxu0 %v1044
        %1219 = vmatprep.subr.mxu0 %v1053
        %1220 = vmatpush1.msra.mxu0 %v1052
        %1221 = vmatprep.subr.mxu0 %v1061
        %1222 = vmatpush1.msra.mxu0 %v1060
        %1223 = vmatprep.subr.mxu0 %v1069
        %1224 = vmatpush1.msra.mxu0 %v1068
        %1225 = vmatprep.subr.mxu0 %v1077
        %1226 = vmatpush1.msra.mxu0 %v1076
        %1227 = vmatprep.subr.mxu0 %v1085
        %1228 = vmatpush1.msra.mxu0 %v1084
        %1229 = vmatprep.subr.mxu0 %v1093
        %1230 = vmatpush1.msra.mxu0 %v1092
        %1231 = vmatprep.subr.mxu0 %v1101
        %1232 = vmatpush1.msra.mxu0 %v1100
        %1233 = vmatprep.subr.mxu0 %v1109
        %1234 = vmatpush1.msra.mxu0 %v1108
        %1235 = vmatprep.subr.mxu0 %v1117
        %1236 = vmatpush1.msra.mxu0 %v1116
        %1237 = vmatprep.subr.mxu0 %v1125
        %1238 = vmatpush1.msra.mxu0 %v1124
        %1239 = vmatprep.subr.mxu0 %v1133
        %1240 = vmatpush1.msra.mxu0 %v1132
        %1241 = vmatprep.subr.mxu0 0.0
        %1242 = vmatpush1.msra.mxu0 0.0
        %1243 = vmatprep.subr.mxu0 0.0
        %1244 = vmatpush1.msra.mxu0 0.0
        %1245 = vmatprep.subr.mxu0 0.0
        %1246 = vmatpush1.msra.mxu0 0.0
        %1247 = vmatprep.subr.mxu0 0.0
        %1248 = vmatpush1.msra.mxu0 0.0
        %1249 = vmatprep.subr.mxu0 0.0
        %1250 = vmatpush1.msra.mxu0 0.0
        %1251 = vmatprep.subr.mxu0 0.0
        %1252 = vmatpush1.msra.mxu0 0.0
        %1253 = vmatprep.subr.mxu0 0.0
        %1254 = vmatpush1.msra.mxu0 0.0
        %1255 = vmatprep.subr.mxu0 0.0
        %1256 = vmatpush1.msra.mxu0 0.0
        %1257 = vmatprep.subr.mxu0 0.0
        %1258 = vmatpush1.msra.mxu0 0.0
        %1259 = vmatprep.subr.mxu0 0.0
        %1260 = vmatpush1.msra.mxu0 0.0
        %1261 = vmatprep.subr.mxu0 0.0
        %1262 = vmatpush1.msra.mxu0 0.0
        %1263 = vmatprep.subr.mxu0 0.0
        %1264 = vmatpush1.msra.mxu0 0.0
        %1265 = vmatprep.subr.mxu0 0.0
        %1266 = vmatpush1.msra.mxu0 0.0
        %1267 = vmatprep.subr.mxu0 0.0
        %1268 = vmatpush1.msra.mxu0 0.0
        %1269 = vmatprep.subr.mxu0 0.0
        %1270 = vmatpush1.msra.mxu0 0.0
        %1271 = vmatprep.subr.mxu0 0.0
        %1272 = vmatpush1.msra.mxu0 0.0
        %1273 = vmatprep.mubr.f32.mxu0 0.0
        %1274 = vmatmul.mubr.f32.gmra.mrb[0].mxu0 %v1009
        %v1275 = vpop.f32.mrb[0].mxu0
        %v1276 = vadd.f32 0.0, %v1275
        %v1277 = vpop.f32.mrb[0].mxu0
        %v1278 = vadd.f32 0.0, %v1277
        %1279 = vdwg.mxu0
        %1280 = vmatprep.subr.mxu0 %v1015
        %1281 = vmatpush1.msra.mxu0 %v1014
        %1282 = vmatprep.subr.mxu0 %v1023
        %1283 = vmatpush1.msra.mxu0 %v1022
        %1284 = vmatprep.subr.mxu0 %v1031
        %1285 = vmatpush1.msra.mxu0 %v1030
        %1286 = vmatprep.subr.mxu0 %v1039
        %1287 = vmatpush1.msra.mxu0 %v1038
        %1288 = vmatprep.subr.mxu0 %v1047
        %1289 = vmatpush1.msra.mxu0 %v1046
        %1290 = vmatprep.subr.mxu0 %v1055
        %1291 = vmatpush1.msra.mxu0 %v1054
        %1292 = vmatprep.subr.mxu0 %v1063
        %1293 = vmatpush1.msra.mxu0 %v1062
        %1294 = vmatprep.subr.mxu0 %v1071
        %1295 = vmatpush1.msra.mxu0 %v1070
        %1296 = vmatprep.subr.mxu0 %v1079
        %1297 = vmatpush1.msra.mxu0 %v1078
        %1298 = vmatprep.subr.mxu0 %v1087
        %1299 = vmatpush1.msra.mxu0 %v1086
        %1300 = vmatprep.subr.mxu0 %v1095
        %1301 = vmatpush1.msra.mxu0 %v1094
        %1302 = vmatprep.subr.mxu0 %v1103
        %1303 = vmatpush1.msra.mxu0 %v1102
        %1304 = vmatprep.subr.mxu0 %v1111
        %1305 = vmatpush1.msra.mxu0 %v1110
        %1306 = vmatprep.subr.mxu0 %v1119
        %1307 = vmatpush1.msra.mxu0 %v1118
        %1308 = vmatprep.subr.mxu0 %v1127
        %1309 = vmatpush1.msra.mxu0 %v1126
        %1310 = vmatprep.subr.mxu0 %v1135
        %1311 = vmatpush1.msra.mxu0 %v1134
        %1312 = vmatprep.subr.mxu0 0.0
        %1313 = vmatpush1.msra.mxu0 0.0
        %1314 = vmatprep.subr.mxu0 0.0
        %1315 = vmatpush1.msra.mxu0 0.0
        %1316 = vmatprep.subr.mxu0 0.0
        %1317 = vmatpush1.msra.mxu0 0.0
        %1318 = vmatprep.subr.mxu0 0.0
        %1319 = vmatpush1.msra.mxu0 0.0
        %1320 = vmatprep.subr.mxu0 0.0
        %1321 = vmatpush1.msra.mxu0 0.0
        %1322 = vmatprep.subr.mxu0 0.0
        %1323 = vmatpush1.msra.mxu0 0.0
        %1324 = vmatprep.subr.mxu0 0.0
        %1325 = vmatpush1.msra.mxu0 0.0
        %1326 = vmatprep.subr.mxu0 0.0
        %1327 = vmatpush1.msra.mxu0 0.0
        %1328 = vmatprep.subr.mxu0 0.0
        %1329 = vmatpush1.msra.mxu0 0.0
        %1330 = vmatprep.subr.mxu0 0.0
        %1331 = vmatpush1.msra.mxu0 0.0
        %1332 = vmatprep.subr.mxu0 0.0
        %1333 = vmatpush1.msra.mxu0 0.0
        %1334 = vmatprep.subr.mxu0 0.0
        %1335 = vmatpush1.msra.mxu0 0.0
        %1336 = vmatprep.subr.mxu0 0.0
        %1337 = vmatpush1.msra.mxu0 0.0
        %1338 = vmatprep.subr.mxu0 0.0
        %1339 = vmatpush1.msra.mxu0 0.0
        %1340 = vmatprep.subr.mxu0 0.0
        %1341 = vmatpush1.msra.mxu0 0.0
        %1342 = vmatprep.subr.mxu0 0.0
        %1343 = vmatpush1.msra.mxu0 0.0
        %1344 = vmatprep.mubr.f32.mxu0 0.0
        %1345 = vmatmul.mubr.f32.gmra.mrb[0].mxu0 %v1009
        %v1346 = vpop.f32.mrb[0].mxu0
        %v1347 = vadd.f32 0.0, %v1346
        %v1348 = vpop.f32.mrb[0].mxu0
        %v1349 = vadd.f32 0.0, %v1348
        %1350 = vdwg.mxu0
        %1351 = vmatprep.subr.mxu0 %v1017
        %1352 = vmatpush1.msra.mxu0 %v1016
        %1353 = vmatprep.subr.mxu0 %v1025
        %1354 = vmatpush1.msra.mxu0 %v1024
        %1355 = vmatprep.subr.mxu0 %v1033
        %1356 = vmatpush1.msra.mxu0 %v1032
        %1357 = vmatprep.subr.mxu0 %v1041
        %1358 = vmatpush1.msra.mxu0 %v1040
        %1359 = vmatprep.subr.mxu0 %v1049
        %1360 = vmatpush1.msra.mxu0 %v1048
        %1361 = vmatprep.subr.mxu0 %v1057
        %1362 = vmatpush1.msra.mxu0 %v1056
        %1363 = vmatprep.subr.mxu0 %v1065
        %1364 = vmatpush1.msra.mxu0 %v1064
        %1365 = vmatprep.subr.mxu0 %v1073
        %1366 = vmatpush1.msra.mxu0 %v1072
        %1367 = vmatprep.subr.mxu0 %v1081
        %1368 = vmatpush1.msra.mxu0 %v1080
        %1369 = vmatprep.subr.mxu0 %v1089
        %1370 = vmatpush1.msra.mxu0 %v1088
        %1371 = vmatprep.subr.mxu0 %v1097
        %1372 = vmatpush1.msra.mxu0 %v1096
        %1373 = vmatprep.subr.mxu0 %v1105
        %1374 = vmatpush1.msra.mxu0 %v1104
        %1375 = vmatprep.subr.mxu0 %v1113
        %1376 = vmatpush1.msra.mxu0 %v1112
        %1377 = vmatprep.subr.mxu0 %v1121
        %1378 = vmatpush1.msra.mxu0 %v1120
        %1379 = vmatprep.subr.mxu0 %v1129
        %1380 = vmatpush1.msra.mxu0 %v1128
        %1381 = vmatprep.subr.mxu0 %v1137
        %1382 = vmatpush1.msra.mxu0 %v1136
        %1383 = vmatprep.subr.mxu0 0.0
        %1384 = vmatpush1.msra.mxu0 0.0
        %1385 = vmatprep.subr.mxu0 0.0
        %1386 = vmatpush1.msra.mxu0 0.0
        %1387 = vmatprep.subr.mxu0 0.0
        %1388 = vmatpush1.msra.mxu0 0.0
        %1389 = vmatprep.subr.mxu0 0.0
        %1390 = vmatpush1.msra.mxu0 0.0
        %1391 = vmatprep.subr.mxu0 0.0
        %1392 = vmatpush1.msra.mxu0 0.0
        %1393 = vmatprep.subr.mxu0 0.0
        %1394 = vmatpush1.msra.mxu0 0.0
        %1395 = vmatprep.subr.mxu0 0.0
        %1396 = vmatpush1.msra.mxu0 0.0
        %1397 = vmatprep.subr.mxu0 0.0
        %1398 = vmatpush1.msra.mxu0 0.0
        %1399 = vmatprep.subr.mxu0 0.0
        %1400 = vmatpush1.msra.mxu0 0.0
        %1401 = vmatprep.subr.mxu0 0.0
        %1402 = vmatpush1.msra.mxu0 0.0
        %1403 = vmatprep.subr.mxu0 0.0
        %1404 = vmatpush1.msra.mxu0 0.0
        %1405 = vmatprep.subr.mxu0 0.0
        %1406 = vmatpush1.msra.mxu0 0.0
        %1407 = vmatprep.subr.mxu0 0.0
        %1408 = vmatpush1.msra.mxu0 0.0
        %1409 = vmatprep.subr.mxu0 0.0
        %1410 = vmatpush1.msra.mxu0 0.0
        %1411 = vmatprep.subr.mxu0 0.0
        %1412 = vmatpush1.msra.mxu0 0.0
        %1413 = vmatprep.subr.mxu0 0.0
        %1414 = vmatpush1.msra.mxu0 0.0
        %1415 = vmatprep.mubr.f32.mxu0 0.0
        %1416 = vmatmul.mubr.f32.gmra.mrb[0].mxu0 %v1009
        %v1417 = vpop.f32.mrb[0].mxu0
        %v1418 = vadd.f32 0.0, %v1417
        %v1419 = vpop.f32.mrb[0].mxu0
        %v1420 = vadd.f32 0.0, %v1419
        %1421 = vdwg.mxu0
        %v1422 = vld [vmem:[#allocation8] sm:$0xff]
        %v1423 = vld [vmem:[#allocation8 + $0x8] sm:$0xff]
        %v1424 = vld [vmem:[#allocation8 + $0x10] sm:$0xff]
        %v1425 = vld [vmem:[#allocation8 + $0x18] sm:$0xff]
        %v1426 = vld [vmem:[#allocation8 + $0x20] sm:$0xff]
        %v1427 = vld [vmem:[#allocation8 + $0x28] sm:$0xff]
        %v1428 = vld [vmem:[#allocation8 + $0x30] sm:$0xff]
        %v1429 = vld [vmem:[#allocation8 + $0x38] sm:$0xff]
        %v1430 = vld [vmem:[#allocation8 + $0x40] sm:$0xff]
        %v1431 = vld [vmem:[#allocation8 + $0x48] sm:$0xff]
        %v1432 = vld [vmem:[#allocation8 + $0x50] sm:$0xff]
        %v1433 = vld [vmem:[#allocation8 + $0x58] sm:$0xff]
        %v1434 = vld [vmem:[#allocation8 + $0x60] sm:$0xff]
        %v1435 = vld [vmem:[#allocation8 + $0x68] sm:$0xff]
        %v1436 = vld [vmem:[#allocation8 + $0x70] sm:$0xff]
        %v1437 = vld [vmem:[#allocation8 + $0x78] sm:$0xff]
        %v1438 = vld [vmem:[#allocation8 + $0x80] sm:$0xff]
        %v1439 = vld [vmem:[#allocation8 + $0x88] sm:$0xff]
        %v1440 = vld [vmem:[#allocation8 + $0x90] sm:$0xff]
        %v1441 = vld [vmem:[#allocation8 + $0x98] sm:$0xff]
        %v1442 = vld [vmem:[#allocation8 + $0xa0] sm:$0xff]
        %v1443 = vld [vmem:[#allocation8 + $0xa8] sm:$0xff]
        %v1444 = vld [vmem:[#allocation8 + $0xb0] sm:$0xff]
        %v1445 = vld [vmem:[#allocation8 + $0xb8] sm:$0xff]
        %v1446 = vld [vmem:[#allocation8 + $0xc0] sm:$0xff]
        %v1447 = vld [vmem:[#allocation8 + $0xc8] sm:$0xff]
        %v1448 = vld [vmem:[#allocation8 + $0xd0] sm:$0xff]
        %v1449 = vld [vmem:[#allocation8 + $0xd8] sm:$0xff]
        %v1450 = vld [vmem:[#allocation8 + $0xe0] sm:$0xff]
        %v1451 = vld [vmem:[#allocation8 + $0xe8] sm:$0xff]
        %v1452 = vld [vmem:[#allocation8 + $0xf0] sm:$0xff]
        %v1453 = vld [vmem:[#allocation8 + $0xf8] sm:$0xff]
        %v1454 = vld [vmem:[#allocation8 + $0x100] sm:$0xff]
        %v1455 = vld [vmem:[#allocation8 + $0x108] sm:$0xff]
        %v1456 = vld [vmem:[#allocation8 + $0x110] sm:$0xff]
        %v1457 = vld [vmem:[#allocation8 + $0x118] sm:$0xff]
        %v1458 = vld [vmem:[#allocation8 + $0x120] sm:$0xff]
        %v1459 = vld [vmem:[#allocation8 + $0x128] sm:$0xff]
        %v1460 = vld [vmem:[#allocation8 + $0x130] sm:$0xff]
        %v1461 = vld [vmem:[#allocation8 + $0x138] sm:$0xff]
        %v1462 = vld [vmem:[#allocation8 + $0x140] sm:$0xff]
        %v1463 = vld [vmem:[#allocation8 + $0x148] sm:$0xff]
        %v1464 = vld [vmem:[#allocation8 + $0x150] sm:$0xff]
        %v1465 = vld [vmem:[#allocation8 + $0x158] sm:$0xff]
        %v1466 = vld [vmem:[#allocation8 + $0x160] sm:$0xff]
        %v1467 = vld [vmem:[#allocation8 + $0x168] sm:$0xff]
        %v1468 = vld [vmem:[#allocation8 + $0x170] sm:$0xff]
        %v1469 = vld [vmem:[#allocation8 + $0x178] sm:$0xff]
        %v1470 = vld [vmem:[#allocation8 + $0x180] sm:$0xff]
        %v1471 = vld [vmem:[#allocation8 + $0x188] sm:$0xff]
        %v1472 = vld [vmem:[#allocation8 + $0x190] sm:$0xff]
        %v1473 = vld [vmem:[#allocation8 + $0x198] sm:$0xff]
        %v1474 = vld [vmem:[#allocation8 + $0x1a0] sm:$0xff]
        %v1475 = vld [vmem:[#allocation8 + $0x1a8] sm:$0xff]
        %v1476 = vld [vmem:[#allocation8 + $0x1b0] sm:$0xff]
        %v1477 = vld [vmem:[#allocation8 + $0x1b8] sm:$0xff]
        %v1478 = vld [vmem:[#allocation8 + $0x1c0] sm:$0xff]
        %v1479 = vld [vmem:[#allocation8 + $0x1c8] sm:$0xff]
        %v1480 = vld [vmem:[#allocation8 + $0x1d0] sm:$0xff]
        %v1481 = vld [vmem:[#allocation8 + $0x1d8] sm:$0xff]
        %v1482 = vld [vmem:[#allocation8 + $0x1e0] sm:$0xff]
        %v1483 = vld [vmem:[#allocation8 + $0x1e8] sm:$0xff]
        %v1484 = vld [vmem:[#allocation8 + $0x1f0] sm:$0xff]
        %v1485 = vld [vmem:[#allocation8 + $0x1f8] sm:$0xff]
        %v1486 = vld [vmem:[#allocation8 + $0x200] sm:$0xff]
        %v1487 = vld [vmem:[#allocation8 + $0x208] sm:$0xff]
        %v1488 = vld [vmem:[#allocation8 + $0x210] sm:$0xff]
        %v1489 = vld [vmem:[#allocation8 + $0x218] sm:$0xff]
        %v1490 = vld [vmem:[#allocation8 + $0x220] sm:$0xff]
        %v1491 = vld [vmem:[#allocation8 + $0x228] sm:$0xff]
        %v1492 = vld [vmem:[#allocation8 + $0x230] sm:$0xff]
        %v1493 = vld [vmem:[#allocation8 + $0x238] sm:$0xff]
        %v1494 = vld [vmem:[#allocation8 + $0x240] sm:$0xff]
        %v1495 = vld [vmem:[#allocation8 + $0x248] sm:$0xff]
        %v1496 = vld [vmem:[#allocation8 + $0x250] sm:$0xff]
        %v1497 = vld [vmem:[#allocation8 + $0x258] sm:$0xff]
        %v1498 = vld [vmem:[#allocation8 + $0x260] sm:$0xff]
        %v1499 = vld [vmem:[#allocation8 + $0x268] sm:$0xff]
        %v1500 = vld [vmem:[#allocation8 + $0x270] sm:$0xff]
        %v1501 = vld [vmem:[#allocation8 + $0x278] sm:$0xff]
        %v1502 = vld [vmem:[#allocation8 + $0x280] sm:$0xff]
        %v1503 = vld [vmem:[#allocation8 + $0x288] sm:$0xff]
        %v1504 = vld [vmem:[#allocation8 + $0x290] sm:$0xff]
        %v1505 = vld [vmem:[#allocation8 + $0x298] sm:$0xff]
        %v1506 = vld [vmem:[#allocation8 + $0x2a0] sm:$0xff]
        %v1507 = vld [vmem:[#allocation8 + $0x2a8] sm:$0xff]
        %v1508 = vld [vmem:[#allocation8 + $0x2b0] sm:$0xff]
        %v1509 = vld [vmem:[#allocation8 + $0x2b8] sm:$0xff]
        %v1510 = vld [vmem:[#allocation8 + $0x2c0] sm:$0xff]
        %v1511 = vld [vmem:[#allocation8 + $0x2c8] sm:$0xff]
        %v1512 = vld [vmem:[#allocation8 + $0x2d0] sm:$0xff]
        %v1513 = vld [vmem:[#allocation8 + $0x2d8] sm:$0xff]
        %v1514 = vld [vmem:[#allocation8 + $0x2e0] sm:$0xff]
        %v1515 = vld [vmem:[#allocation8 + $0x2e8] sm:$0xff]
        %v1516 = vld [vmem:[#allocation8 + $0x2f0] sm:$0xff]
        %v1517 = vld [vmem:[#allocation8 + $0x2f8] sm:$0xff]
        %v1518 = vld [vmem:[#allocation8 + $0x300] sm:$0xff]
        %v1519 = vld [vmem:[#allocation8 + $0x308] sm:$0xff]
        %v1520 = vld [vmem:[#allocation8 + $0x310] sm:$0xff]
        %v1521 = vld [vmem:[#allocation8 + $0x318] sm:$0xff]
        %v1522 = vld [vmem:[#allocation8 + $0x320] sm:$0xff]
        %v1523 = vld [vmem:[#allocation8 + $0x328] sm:$0xff]
        %v1524 = vld [vmem:[#allocation8 + $0x330] sm:$0xff]
        %v1525 = vld [vmem:[#allocation8 + $0x338] sm:$0xff]
        %v1526 = vld [vmem:[#allocation8 + $0x340] sm:$0xff]
        %v1527 = vld [vmem:[#allocation8 + $0x348] sm:$0xff]
        %v1528 = vld [vmem:[#allocation8 + $0x350] sm:$0xff]
        %v1529 = vld [vmem:[#allocation8 + $0x358] sm:$0xff]
        %v1530 = vld [vmem:[#allocation8 + $0x360] sm:$0xff]
        %v1531 = vld [vmem:[#allocation8 + $0x368] sm:$0xff]
        %v1532 = vld [vmem:[#allocation8 + $0x370] sm:$0xff]
        %v1533 = vld [vmem:[#allocation8 + $0x378] sm:$0xff]
        %v1534 = vld [vmem:[#allocation8 + $0x380] sm:$0xff]
        %v1535 = vld [vmem:[#allocation8 + $0x388] sm:$0xff]
        %v1536 = vld [vmem:[#allocation8 + $0x390] sm:$0xff]
        %v1537 = vld [vmem:[#allocation8 + $0x398] sm:$0xff]
        %v1538 = vld [vmem:[#allocation8 + $0x3a0] sm:$0xff]
        %v1539 = vld [vmem:[#allocation8 + $0x3a8] sm:$0xff]
        %v1540 = vld [vmem:[#allocation8 + $0x3b0] sm:$0xff]
        %v1541 = vld [vmem:[#allocation8 + $0x3b8] sm:$0xff]
        %v1542 = vld [vmem:[#allocation8 + $0x3c0] sm:$0xff]
        %v1543 = vld [vmem:[#allocation8 + $0x3c8] sm:$0xff]
        %v1544 = vld [vmem:[#allocation8 + $0x3d0] sm:$0xff]
        %v1545 = vld [vmem:[#allocation8 + $0x3d8] sm:$0xff]
        %v1546 = vld [vmem:[#allocation8 + $0x3e0] sm:$0xff]
        %v1547 = vld [vmem:[#allocation8 + $0x3e8] sm:$0xff]
        %v1548 = vld [vmem:[#allocation8 + $0x3f0] sm:$0xff]
        %v1549 = vld [vmem:[#allocation8 + $0x3f8] sm:$0xff]
        %1550 = vmatprep.subr.mxu0 %v1423
        %1551 = vmatpush1.msra.mxu0 %v1422
        %1552 = vmatprep.subr.mxu0 %v1431
        %1553 = vmatpush1.msra.mxu0 %v1430
        %1554 = vmatprep.subr.mxu0 %v1439
        %1555 = vmatpush1.msra.mxu0 %v1438
        %1556 = vmatprep.subr.mxu0 %v1447
        %1557 = vmatpush1.msra.mxu0 %v1446
        %1558 = vmatprep.subr.mxu0 %v1455
        %1559 = vmatpush1.msra.mxu0 %v1454
        %1560 = vmatprep.subr.mxu0 %v1463
        %1561 = vmatpush1.msra.mxu0 %v1462
        %1562 = vmatprep.subr.mxu0 %v1471
        %1563 = vmatpush1.msra.mxu0 %v1470
        %1564 = vmatprep.subr.mxu0 %v1479
        %1565 = vmatpush1.msra.mxu0 %v1478
        %1566 = vmatprep.subr.mxu0 %v1487
        %1567 = vmatpush1.msra.mxu0 %v1486
        %1568 = vmatprep.subr.mxu0 %v1495
        %1569 = vmatpush1.msra.mxu0 %v1494
        %1570 = vmatprep.subr.mxu0 %v1503
        %1571 = vmatpush1.msra.mxu0 %v1502
        %1572 = vmatprep.subr.mxu0 %v1511
        %1573 = vmatpush1.msra.mxu0 %v1510
        %1574 = vmatprep.subr.mxu0 %v1519
        %1575 = vmatpush1.msra.mxu0 %v1518
        %1576 = vmatprep.subr.mxu0 %v1527
        %1577 = vmatpush1.msra.mxu0 %v1526
        %1578 = vmatprep.subr.mxu0 %v1535
        %1579 = vmatpush1.msra.mxu0 %v1534
        %1580 = vmatprep.subr.mxu0 %v1543
        %1581 = vmatpush1.msra.mxu0 %v1542
        %1582 = vmatprep.subr.mxu0 0.0
        %1583 = vmatpush1.msra.mxu0 0.0
        %1584 = vmatprep.subr.mxu0 0.0
        %1585 = vmatpush1.msra.mxu0 0.0
        %1586 = vmatprep.subr.mxu0 0.0
        %1587 = vmatpush1.msra.mxu0 0.0
        %1588 = vmatprep.subr.mxu0 0.0
        %1589 = vmatpush1.msra.mxu0 0.0
        %1590 = vmatprep.subr.mxu0 0.0
        %1591 = vmatpush1.msra.mxu0 0.0
        %1592 = vmatprep.subr.mxu0 0.0
        %1593 = vmatpush1.msra.mxu0 0.0
        %1594 = vmatprep.subr.mxu0 0.0
        %1595 = vmatpush1.msra.mxu0 0.0
        %1596 = vmatprep.subr.mxu0 0.0
        %1597 = vmatpush1.msra.mxu0 0.0
        %1598 = vmatprep.subr.mxu0 0.0
        %1599 = vmatpush1.msra.mxu0 0.0
        %1600 = vmatprep.subr.mxu0 0.0
        %1601 = vmatpush1.msra.mxu0 0.0
        %1602 = vmatprep.subr.mxu0 0.0
        %1603 = vmatpush1.msra.mxu0 0.0
        %1604 = vmatprep.subr.mxu0 0.0
        %1605 = vmatpush1.msra.mxu0 0.0
        %1606 = vmatprep.subr.mxu0 0.0
        %1607 = vmatpush1.msra.mxu0 0.0
        %1608 = vmatprep.subr.mxu0 0.0
        %1609 = vmatpush1.msra.mxu0 0.0
        %1610 = vmatprep.subr.mxu0 0.0
        %1611 = vmatpush1.msra.mxu0 0.0
        %1612 = vmatprep.subr.mxu0 0.0
        %1613 = vmatpush1.msra.mxu0 0.0
        %1614 = vmatprep.mubr.f32.mxu0 0.0
        %1615 = vmatmul.mubr.f32.gmra.mrb[0].mxu0 %v1009
        %v1616 = vpop.f32.mrb[0].mxu0
        %v1617 = vadd.f32 0.0, %v1616
        %v1618 = vpop.f32.mrb[0].mxu0
        %v1619 = vadd.f32 0.0, %v1618
        %1620 = vdwg.mxu0
        %1621 = vmatprep.subr.mxu0 %v1425
        %1622 = vmatpush1.msra.mxu0 %v1424
        %1623 = vmatprep.subr.mxu0 %v1433
        %1624 = vmatpush1.msra.mxu0 %v1432
        %1625 = vmatprep.subr.mxu0 %v1441
        %1626 = vmatpush1.msra.mxu0 %v1440
        %1627 = vmatprep.subr.mxu0 %v1449
        %1628 = vmatpush1.msra.mxu0 %v1448
        %1629 = vmatprep.subr.mxu0 %v1457
        %1630 = vmatpush1.msra.mxu0 %v1456
        %1631 = vmatprep.subr.mxu0 %v1465
        %1632 = vmatpush1.msra.mxu0 %v1464
        %1633 = vmatprep.subr.mxu0 %v1473
        %1634 = vmatpush1.msra.mxu0 %v1472
        %1635 = vmatprep.subr.mxu0 %v1481
        %1636 = vmatpush1.msra.mxu0 %v1480
        %1637 = vmatprep.subr.mxu0 %v1489
        %1638 = vmatpush1.msra.mxu0 %v1488
        %1639 = vmatprep.subr.mxu0 %v1497
        %1640 = vmatpush1.msra.mxu0 %v1496
        %1641 = vmatprep.subr.mxu0 %v1505
        %1642 = vmatpush1.msra.mxu0 %v1504
        %1643 = vmatprep.subr.mxu0 %v1513
        %1644 = vmatpush1.msra.mxu0 %v1512
        %1645 = vmatprep.subr.mxu0 %v1521
        %1646 = vmatpush1.msra.mxu0 %v1520
        %1647 = vmatprep.subr.mxu0 %v1529
        %1648 = vmatpush1.msra.mxu0 %v1528
        %1649 = vmatprep.subr.mxu0 %v1537
        %1650 = vmatpush1.msra.mxu0 %v1536
        %1651 = vmatprep.subr.mxu0 %v1545
        %1652 = vmatpush1.msra.mxu0 %v1544
        %1653 = vmatprep.subr.mxu0 0.0
        %1654 = vmatpush1.msra.mxu0 0.0
        %1655 = vmatprep.subr.mxu0 0.0
        %1656 = vmatpush1.msra.mxu0 0.0
        %1657 = vmatprep.subr.mxu0 0.0
        %1658 = vmatpush1.msra.mxu0 0.0
        %1659 = vmatprep.subr.mxu0 0.0
        %1660 = vmatpush1.msra.mxu0 0.0
        %1661 = vmatprep.subr.mxu0 0.0
        %1662 = vmatpush1.msra.mxu0 0.0
        %1663 = vmatprep.subr.mxu0 0.0
        %1664 = vmatpush1.msra.mxu0 0.0
        %1665 = vmatprep.subr.mxu0 0.0
        %1666 = vmatpush1.msra.mxu0 0.0
        %1667 = vmatprep.subr.mxu0 0.0
        %1668 = vmatpush1.msra.mxu0 0.0
        %1669 = vmatprep.subr.mxu0 0.0
        %1670 = vmatpush1.msra.mxu0 0.0
        %1671 = vmatprep.subr.mxu0 0.0
        %1672 = vmatpush1.msra.mxu0 0.0
        %1673 = vmatprep.subr.mxu0 0.0
        %1674 = vmatpush1.msra.mxu0 0.0
        %1675 = vmatprep.subr.mxu0 0.0
        %1676 = vmatpush1.msra.mxu0 0.0
        %1677 = vmatprep.subr.mxu0 0.0
        %1678 = vmatpush1.msra.mxu0 0.0
        %1679 = vmatprep.subr.mxu0 0.0
        %1680 = vmatpush1.msra.mxu0 0.0
        %1681 = vmatprep.subr.mxu0 0.0
        %1682 = vmatpush1.msra.mxu0 0.0
        %1683 = vmatprep.subr.mxu0 0.0
        %1684 = vmatpush1.msra.mxu0 0.0
        %1685 = vmatprep.mubr.f32.mxu0 0.0
        %1686 = vmatmul.mubr.f32.gmra.mrb[0].mxu0 %v1009
        %v1687 = vpop.f32.mrb[0].mxu0
        %v1688 = vadd.f32 0.0, %v1687
        %v1689 = vpop.f32.mrb[0].mxu0
        %v1690 = vadd.f32 0.0, %v1689
        %1691 = vdwg.mxu0
        %1692 = vmatprep.subr.mxu0 %v1427
        %1693 = vmatpush1.msra.mxu0 %v1426
        %1694 = vmatprep.subr.mxu0 %v1435
        %1695 = vmatpush1.msra.mxu0 %v1434
        %1696 = vmatprep.subr.mxu0 %v1443
        %1697 = vmatpush1.msra.mxu0 %v1442
        %1698 = vmatprep.subr.mxu0 %v1451
        %1699 = vmatpush1.msra.mxu0 %v1450
        %1700 = vmatprep.subr.mxu0 %v1459
        %1701 = vmatpush1.msra.mxu0 %v1458
        %1702 = vmatprep.subr.mxu0 %v1467
        %1703 = vmatpush1.msra.mxu0 %v1466
        %1704 = vmatprep.subr.mxu0 %v1475
        %1705 = vmatpush1.msra.mxu0 %v1474
        %1706 = vmatprep.subr.mxu0 %v1483
        %1707 = vmatpush1.msra.mxu0 %v1482
        %1708 = vmatprep.subr.mxu0 %v1491
        %1709 = vmatpush1.msra.mxu0 %v1490
        %1710 = vmatprep.subr.mxu0 %v1499
        %1711 = vmatpush1.msra.mxu0 %v1498
        %1712 = vmatprep.subr.mxu0 %v1507
        %1713 = vmatpush1.msra.mxu0 %v1506
        %1714 = vmatprep.subr.mxu0 %v1515
        %1715 = vmatpush1.msra.mxu0 %v1514
        %1716 = vmatprep.subr.mxu0 %v1523
        %1717 = vmatpush1.msra.mxu0 %v1522
        %1718 = vmatprep.subr.mxu0 %v1531
        %1719 = vmatpush1.msra.mxu0 %v1530
        %1720 = vmatprep.subr.mxu0 %v1539
        %1721 = vmatpush1.msra.mxu0 %v1538
        %1722 = vmatprep.subr.mxu0 %v1547
        %1723 = vmatpush1.msra.mxu0 %v1546
        %1724 = vmatprep.subr.mxu0 0.0
        %1725 = vmatpush1.msra.mxu0 0.0
        %1726 = vmatprep.subr.mxu0 0.0
        %1727 = vmatpush1.msra.mxu0 0.0
        %1728 = vmatprep.subr.mxu0 0.0
        %1729 = vmatpush1.msra.mxu0 0.0
        %1730 = vmatprep.subr.mxu0 0.0
        %1731 = vmatpush1.msra.mxu0 0.0
        %1732 = vmatprep.subr.mxu0 0.0
        %1733 = vmatpush1.msra.mxu0 0.0
        %1734 = vmatprep.subr.mxu0 0.0
        %1735 = vmatpush1.msra.mxu0 0.0
        %1736 = vmatprep.subr.mxu0 0.0
        %1737 = vmatpush1.msra.mxu0 0.0
        %1738 = vmatprep.subr.mxu0 0.0
        %1739 = vmatpush1.msra.mxu0 0.0
        %1740 = vmatprep.subr.mxu0 0.0
        %1741 = vmatpush1.msra.mxu0 0.0
        %1742 = vmatprep.subr.mxu0 0.0
        %1743 = vmatpush1.msra.mxu0 0.0
        %1744 = vmatprep.subr.mxu0 0.0
        %1745 = vmatpush1.msra.mxu0 0.0
        %1746 = vmatprep.subr.mxu0 0.0
        %1747 = vmatpush1.msra.mxu0 0.0
        %1748 = vmatprep.subr.mxu0 0.0
        %1749 = vmatpush1.msra.mxu0 0.0
        %1750 = vmatprep.subr.mxu0 0.0
        %1751 = vmatpush1.msra.mxu0 0.0
        %1752 = vmatprep.subr.mxu0 0.0
        %1753 = vmatpush1.msra.mxu0 0.0
        %1754 = vmatprep.subr.mxu0 0.0
        %1755 = vmatpush1.msra.mxu0 0.0
        %1756 = vmatprep.mubr.f32.mxu0 0.0
        %1757 = vmatmul.mubr.f32.gmra.mrb[0].mxu0 %v1009
        %v1758 = vpop.f32.mrb[0].mxu0
        %v1759 = vadd.f32 0.0, %v1758
        %v1760 = vpop.f32.mrb[0].mxu0
        %v1761 = vadd.f32 0.0, %v1760
        %1762 = vdwg.mxu0
        %1763 = vmatprep.subr.mxu0 %v1429
        %1764 = vmatpush1.msra.mxu0 %v1428
        %1765 = vmatprep.subr.mxu0 %v1437
        %1766 = vmatpush1.msra.mxu0 %v1436
        %1767 = vmatprep.subr.mxu0 %v1445
        %1768 = vmatpush1.msra.mxu0 %v1444
        %1769 = vmatprep.subr.mxu0 %v1453
        %1770 = vmatpush1.msra.mxu0 %v1452
        %1771 = vmatprep.subr.mxu0 %v1461
        %1772 = vmatpush1.msra.mxu0 %v1460
        %1773 = vmatprep.subr.mxu0 %v1469
        %1774 = vmatpush1.msra.mxu0 %v1468
        %1775 = vmatprep.subr.mxu0 %v1477
        %1776 = vmatpush1.msra.mxu0 %v1476
        %1777 = vmatprep.subr.mxu0 %v1485
        %1778 = vmatpush1.msra.mxu0 %v1484
        %1779 = vmatprep.subr.mxu0 %v1493
        %1780 = vmatpush1.msra.mxu0 %v1492
        %1781 = vmatprep.subr.mxu0 %v1501
        %1782 = vmatpush1.msra.mxu0 %v1500
        %1783 = vmatprep.subr.mxu0 %v1509
        %1784 = vmatpush1.msra.mxu0 %v1508
        %1785 = vmatprep.subr.mxu0 %v1517
        %1786 = vmatpush1.msra.mxu0 %v1516
        %1787 = vmatprep.subr.mxu0 %v1525
        %1788 = vmatpush1.msra.mxu0 %v1524
        %1789 = vmatprep.subr.mxu0 %v1533
        %1790 = vmatpush1.msra.mxu0 %v1532
        %1791 = vmatprep.subr.mxu0 %v1541
        %1792 = vmatpush1.msra.mxu0 %v1540
        %1793 = vmatprep.subr.mxu0 %v1549
        %1794 = vmatpush1.msra.mxu0 %v1548
        %1795 = vmatprep.subr.mxu0 0.0
        %1796 = vmatpush1.msra.mxu0 0.0
        %1797 = vmatprep.subr.mxu0 0.0
        %1798 = vmatpush1.msra.mxu0 0.0
        %1799 = vmatprep.subr.mxu0 0.0
        %1800 = vmatpush1.msra.mxu0 0.0
        %1801 = vmatprep.subr.mxu0 0.0
        %1802 = vmatpush1.msra.mxu0 0.0
        %1803 = vmatprep.subr.mxu0 0.0
        %1804 = vmatpush1.msra.mxu0 0.0
        %1805 = vmatprep.subr.mxu0 0.0
        %1806 = vmatpush1.msra.mxu0 0.0
        %1807 = vmatprep.subr.mxu0 0.0
        %1808 = vmatpush1.msra.mxu0 0.0
        %1809 = vmatprep.subr.mxu0 0.0
        %1810 = vmatpush1.msra.mxu0 0.0
        %1811 = vmatprep.subr.mxu0 0.0
        %1812 = vmatpush1.msra.mxu0 0.0
        %1813 = vmatprep.subr.mxu0 0.0
        %1814 = vmatpush1.msra.mxu0 0.0
        %1815 = vmatprep.subr.mxu0 0.0
        %1816 = vmatpush1.msra.mxu0 0.0
        %1817 = vmatprep.subr.mxu0 0.0
        %1818 = vmatpush1.msra.mxu0 0.0
        %1819 = vmatprep.subr.mxu0 0.0
        %1820 = vmatpush1.msra.mxu0 0.0
        %1821 = vmatprep.subr.mxu0 0.0
        %1822 = vmatpush1.msra.mxu0 0.0
        %1823 = vmatprep.subr.mxu0 0.0
        %1824 = vmatpush1.msra.mxu0 0.0
        %1825 = vmatprep.subr.mxu0 0.0
        %1826 = vmatpush1.msra.mxu0 0.0
        %1827 = vmatprep.mubr.f32.mxu0 0.0
        %1828 = vmatmul.mubr.f32.gmra.mrb[0].mxu0 %v1009
        %v1829 = vpop.f32.mrb[0].mxu0
        %v1830 = vadd.f32 0.0, %v1829
        %v1831 = vpop.f32.mrb[0].mxu0
        %v1832 = vadd.f32 0.0, %v1831
        %1833 = vdwg.mxu0
        %v1834 = vmul.f32 %v499, %v1205
        %v1835 = vmul.f32 %v500, %v1207
        %v1836 = vmul.f32 %v501, %v1276
        %v1837 = vmul.f32 %v502, %v1278
        %v1838 = vmul.f32 %v503, %v1347
        %v1839 = vmul.f32 %v504, %v1349
        %v1840 = vmul.f32 %v505, %v1418
        %v1841 = vmul.f32 %v506, %v1420
        %v1842 = vmul.f32 %v1834, %v1617
        %v1843 = vmul.f32 %v1835, %v1619
        %v1844 = vmul.f32 %v1836, %v1688
        %v1845 = vmul.f32 %v1837, %v1690
        %v1846 = vmul.f32 %v1838, %v1759
        %v1847 = vmul.f32 %v1839, %v1761
        %v1848 = vmul.f32 %v1840, %v1830
        %v1849 = vmul.f32 %v1841, %v1832
        %v1854 = vcombine.high %v508, %v508
        %v1855 = vcombine.high %v509, %v509
        %v1856 = vcombine.high %v510, %v510
        %v1857 = vcombine.high %v511, %v511
        %1862 = vmatprep.subr.mxu0 %v1854
        %1863 = vmatpush1.xpose.msra.mxu0 %v508
        %1864 = vmatprep.subr.mxu0 0.0
        %1865 = vmatpush1.xpose.msra.mxu0 0.0
        %1866 = vmatprep.subr.mxu0 0.0
        %1867 = vmatpush1.xpose.msra.mxu0 0.0
        %1868 = vmatprep.subr.mxu0 0.0
        %1869 = vmatpush1.xpose.msra.mxu0 0.0
        %1870 = vmatprep.subr.mxu0 0.0
        %1871 = vmatpush1.xpose.msra.mxu0 0.0
        %1872 = vmatprep.subr.mxu0 0.0
        %1873 = vmatpush1.xpose.msra.mxu0 0.0
        %1874 = vmatprep.subr.mxu0 0.0
        %1875 = vmatpush1.xpose.msra.mxu0 0.0
        %1876 = vmatprep.subr.mxu0 0.0
        %1877 = vmatpush1.xpose.msra.mxu0 0.0
        %1878 = vmatprep.subr.mxu0 0.0
        %1879 = vmatpush1.xpose.msra.mxu0 0.0
        %1880 = vmatprep.subr.mxu0 0.0
        %1881 = vmatpush1.xpose.msra.mxu0 0.0
        %1882 = vmatprep.subr.mxu0 0.0
        %1883 = vmatpush1.xpose.msra.mxu0 0.0
        %1884 = vmatprep.subr.mxu0 0.0
        %1885 = vmatpush1.xpose.msra.mxu0 0.0
        %1886 = vmatprep.subr.mxu0 0.0
        %1887 = vmatpush1.xpose.msra.mxu0 0.0
        %1888 = vmatprep.subr.mxu0 0.0
        %1889 = vmatpush1.xpose.msra.mxu0 0.0
        %1890 = vmatprep.subr.mxu0 0.0
        %1891 = vmatpush1.xpose.msra.mxu0 0.0
        %1892 = vmatprep.subr.mxu0 0.0
        %1893 = vmatpush1.xpose.msra.mxu0 0.0
        %1894 = vmatprep.subr.mxu0 0.0
        %1895 = vmatpush1.xpose.msra.mxu0 0.0
        %1896 = vmatprep.subr.mxu0 0.0
        %1897 = vmatpush1.xpose.msra.mxu0 0.0
        %1898 = vmatprep.subr.mxu0 0.0
        %1899 = vmatpush1.xpose.msra.mxu0 0.0
        %1900 = vmatprep.subr.mxu0 0.0
        %1901 = vmatpush1.xpose.msra.mxu0 0.0
        %1902 = vmatprep.subr.mxu0 0.0
        %1903 = vmatpush1.xpose.msra.mxu0 0.0
        %1904 = vmatprep.subr.mxu0 0.0
        %1905 = vmatpush1.xpose.msra.mxu0 0.0
        %1906 = vmatprep.subr.mxu0 0.0
        %1907 = vmatpush1.xpose.msra.mxu0 0.0
        %1908 = vmatprep.subr.mxu0 0.0
        %1909 = vmatpush1.xpose.msra.mxu0 0.0
        %1910 = vmatprep.subr.mxu0 0.0
        %1911 = vmatpush1.xpose.msra.mxu0 0.0
        %1912 = vmatprep.subr.mxu0 0.0
        %1913 = vmatpush1.xpose.msra.mxu0 0.0
        %1914 = vmatprep.subr.mxu0 0.0
        %1915 = vmatpush1.xpose.msra.mxu0 0.0
        %1916 = vmatprep.subr.mxu0 0.0
        %1917 = vmatpush1.xpose.msra.mxu0 0.0
        %1918 = vmatprep.subr.mxu0 0.0
        %1919 = vmatpush1.xpose.msra.mxu0 0.0
        %1920 = vmatprep.subr.mxu0 0.0
        %1921 = vmatpush1.xpose.msra.mxu0 0.0
        %1922 = vmatprep.subr.mxu0 0.0
        %1923 = vmatpush1.xpose.msra.mxu0 0.0
        %1924 = vmatprep.subr.mxu0 0.0
        %1925 = vmatpush1.xpose.msra.mxu0 0.0
        %1926 = vmatprep.mubr.f32.mxu0 %v1843
        %1927 = vmatmul.mubr.f32.gmra.mrb[0].mxu0 %v1842
        %v1928 = vpop.f32.mrb[0].mxu0
        %v1929 = vadd.f32 0.0, %v1928
        %v1930 = vpop.f32.mrb[0].mxu0
        %1931 = vdwg.mxu0
        %1932 = vmatprep.subr.mxu0 %v1855
        %1933 = vmatpush1.xpose.msra.mxu0 %v509
        %1934 = vmatprep.subr.mxu0 0.0
        %1935 = vmatpush1.xpose.msra.mxu0 0.0
        %1936 = vmatprep.subr.mxu0 0.0
        %1937 = vmatpush1.xpose.msra.mxu0 0.0
        %1938 = vmatprep.subr.mxu0 0.0
        %1939 = vmatpush1.xpose.msra.mxu0 0.0
        %1940 = vmatprep.subr.mxu0 0.0
        %1941 = vmatpush1.xpose.msra.mxu0 0.0
        %1942 = vmatprep.subr.mxu0 0.0
        %1943 = vmatpush1.xpose.msra.mxu0 0.0
        %1944 = vmatprep.subr.mxu0 0.0
        %1945 = vmatpush1.xpose.msra.mxu0 0.0
        %1946 = vmatprep.subr.mxu0 0.0
        %1947 = vmatpush1.xpose.msra.mxu0 0.0
        %1948 = vmatprep.subr.mxu0 0.0
        %1949 = vmatpush1.xpose.msra.mxu0 0.0
        %1950 = vmatprep.subr.mxu0 0.0
        %1951 = vmatpush1.xpose.msra.mxu0 0.0
        %1952 = vmatprep.subr.mxu0 0.0
        %1953 = vmatpush1.xpose.msra.mxu0 0.0
        %1954 = vmatprep.subr.mxu0 0.0
        %1955 = vmatpush1.xpose.msra.mxu0 0.0
        %1956 = vmatprep.subr.mxu0 0.0
        %1957 = vmatpush1.xpose.msra.mxu0 0.0
        %1958 = vmatprep.subr.mxu0 0.0
        %1959 = vmatpush1.xpose.msra.mxu0 0.0
        %1960 = vmatprep.subr.mxu0 0.0
        %1961 = vmatpush1.xpose.msra.mxu0 0.0
        %1962 = vmatprep.subr.mxu0 0.0
        %1963 = vmatpush1.xpose.msra.mxu0 0.0
        %1964 = vmatprep.subr.mxu0 0.0
        %1965 = vmatpush1.xpose.msra.mxu0 0.0
        %1966 = vmatprep.subr.mxu0 0.0
        %1967 = vmatpush1.xpose.msra.mxu0 0.0
        %1968 = vmatprep.subr.mxu0 0.0
        %1969 = vmatpush1.xpose.msra.mxu0 0.0
        %1970 = vmatprep.subr.mxu0 0.0
        %1971 = vmatpush1.xpose.msra.mxu0 0.0
        %1972 = vmatprep.subr.mxu0 0.0
        %1973 = vmatpush1.xpose.msra.mxu0 0.0
        %1974 = vmatprep.subr.mxu0 0.0
        %1975 = vmatpush1.xpose.msra.mxu0 0.0
        %1976 = vmatprep.subr.mxu0 0.0
        %1977 = vmatpush1.xpose.msra.mxu0 0.0
        %1978 = vmatprep.subr.mxu0 0.0
        %1979 = vmatpush1.xpose.msra.mxu0 0.0
        %1980 = vmatprep.subr.mxu0 0.0
        %1981 = vmatpush1.xpose.msra.mxu0 0.0
        %1982 = vmatprep.subr.mxu0 0.0
        %1983 = vmatpush1.xpose.msra.mxu0 0.0
        %1984 = vmatprep.subr.mxu0 0.0
        %1985 = vmatpush1.xpose.msra.mxu0 0.0
        %1986 = vmatprep.subr.mxu0 0.0
        %1987 = vmatpush1.xpose.msra.mxu0 0.0
        %1988 = vmatprep.subr.mxu0 0.0
        %1989 = vmatpush1.xpose.msra.mxu0 0.0
        %1990 = vmatprep.subr.mxu0 0.0
        %1991 = vmatpush1.xpose.msra.mxu0 0.0
        %1992 = vmatprep.subr.mxu0 0.0
        %1993 = vmatpush1.xpose.msra.mxu0 0.0
        %1994 = vmatprep.subr.mxu0 0.0
        %1995 = vmatpush1.xpose.msra.mxu0 0.0
        %1996 = vmatprep.mubr.f32.mxu0 %v1845
        %1997 = vmatmul.mubr.f32.gmra.mrb[0].mxu0 %v1844
        %v1998 = vpop.f32.mrb[0].mxu0
        %v1999 = vadd.f32 %v1929, %v1998
        %v2000 = vpop.f32.mrb[0].mxu0
        %2001 = vdwg.mxu0
        %2002 = vmatprep.subr.mxu0 %v1856
        %2003 = vmatpush1.xpose.msra.mxu0 %v510
        %2004 = vmatprep.subr.mxu0 0.0
        %2005 = vmatpush1.xpose.msra.mxu0 0.0
        %2006 = vmatprep.subr.mxu0 0.0
        %2007 = vmatpush1.xpose.msra.mxu0 0.0
        %2008 = vmatprep.subr.mxu0 0.0
        %2009 = vmatpush1.xpose.msra.mxu0 0.0
        %2010 = vmatprep.subr.mxu0 0.0
        %2011 = vmatpush1.xpose.msra.mxu0 0.0
        %2012 = vmatprep.subr.mxu0 0.0
        %2013 = vmatpush1.xpose.msra.mxu0 0.0
        %2014 = vmatprep.subr.mxu0 0.0
        %2015 = vmatpush1.xpose.msra.mxu0 0.0
        %2016 = vmatprep.subr.mxu0 0.0
        %2017 = vmatpush1.xpose.msra.mxu0 0.0
        %2018 = vmatprep.subr.mxu0 0.0
        %2019 = vmatpush1.xpose.msra.mxu0 0.0
        %2020 = vmatprep.subr.mxu0 0.0
        %2021 = vmatpush1.xpose.msra.mxu0 0.0
        %2022 = vmatprep.subr.mxu0 0.0
        %2023 = vmatpush1.xpose.msra.mxu0 0.0
        %2024 = vmatprep.subr.mxu0 0.0
        %2025 = vmatpush1.xpose.msra.mxu0 0.0
        %2026 = vmatprep.subr.mxu0 0.0
        %2027 = vmatpush1.xpose.msra.mxu0 0.0
        %2028 = vmatprep.subr.mxu0 0.0
        %2029 = vmatpush1.xpose.msra.mxu0 0.0
        %2030 = vmatprep.subr.mxu0 0.0
        %2031 = vmatpush1.xpose.msra.mxu0 0.0
        %2032 = vmatprep.subr.mxu0 0.0
        %2033 = vmatpush1.xpose.msra.mxu0 0.0
        %2034 = vmatprep.subr.mxu0 0.0
        %2035 = vmatpush1.xpose.msra.mxu0 0.0
        %2036 = vmatprep.subr.mxu0 0.0
        %2037 = vmatpush1.xpose.msra.mxu0 0.0
        %2038 = vmatprep.subr.mxu0 0.0
        %2039 = vmatpush1.xpose.msra.mxu0 0.0
        %2040 = vmatprep.subr.mxu0 0.0
        %2041 = vmatpush1.xpose.msra.mxu0 0.0
        %2042 = vmatprep.subr.mxu0 0.0
        %2043 = vmatpush1.xpose.msra.mxu0 0.0
        %2044 = vmatprep.subr.mxu0 0.0
        %2045 = vmatpush1.xpose.msra.mxu0 0.0
        %2046 = vmatprep.subr.mxu0 0.0
        %2047 = vmatpush1.xpose.msra.mxu0 0.0
        %2048 = vmatprep.subr.mxu0 0.0
        %2049 = vmatpush1.xpose.msra.mxu0 0.0
        %2050 = vmatprep.subr.mxu0 0.0
        %2051 = vmatpush1.xpose.msra.mxu0 0.0
        %2052 = vmatprep.subr.mxu0 0.0
        %2053 = vmatpush1.xpose.msra.mxu0 0.0
        %2054 = vmatprep.subr.mxu0 0.0
        %2055 = vmatpush1.xpose.msra.mxu0 0.0
        %2056 = vmatprep.subr.mxu0 0.0
        %2057 = vmatpush1.xpose.msra.mxu0 0.0
        %2058 = vmatprep.subr.mxu0 0.0
        %2059 = vmatpush1.xpose.msra.mxu0 0.0
        %2060 = vmatprep.subr.mxu0 0.0
        %2061 = vmatpush1.xpose.msra.mxu0 0.0
        %2062 = vmatprep.subr.mxu0 0.0
        %2063 = vmatpush1.xpose.msra.mxu0 0.0
        %2064 = vmatprep.subr.mxu0 0.0
        %2065 = vmatpush1.xpose.msra.mxu0 0.0
        %2066 = vmatprep.mubr.f32.mxu0 %v1847
        %2067 = vmatmul.mubr.f32.gmra.mrb[0].mxu0 %v1846
        %v2068 = vpop.f32.mrb[0].mxu0
        %v2069 = vadd.f32 %v1999, %v2068
        %v2070 = vpop.f32.mrb[0].mxu0
        %2071 = vdwg.mxu0
        %2072 = vmatprep.subr.mxu0 %v1857
        %2073 = vmatpush1.xpose.msra.mxu0 %v511
        %2074 = vmatprep.subr.mxu0 0.0
        %2075 = vmatpush1.xpose.msra.mxu0 0.0
        %2076 = vmatprep.subr.mxu0 0.0
        %2077 = vmatpush1.xpose.msra.mxu0 0.0
        %2078 = vmatprep.subr.mxu0 0.0
        %2079 = vmatpush1.xpose.msra.mxu0 0.0
        %2080 = vmatprep.subr.mxu0 0.0
        %2081 = vmatpush1.xpose.msra.mxu0 0.0
        %2082 = vmatprep.subr.mxu0 0.0
        %2083 = vmatpush1.xpose.msra.mxu0 0.0
        %2084 = vmatprep.subr.mxu0 0.0
        %2085 = vmatpush1.xpose.msra.mxu0 0.0
        %2086 = vmatprep.subr.mxu0 0.0
        %2087 = vmatpush1.xpose.msra.mxu0 0.0
        %2088 = vmatprep.subr.mxu0 0.0
        %2089 = vmatpush1.xpose.msra.mxu0 0.0
        %2090 = vmatprep.subr.mxu0 0.0
        %2091 = vmatpush1.xpose.msra.mxu0 0.0
        %2092 = vmatprep.subr.mxu0 0.0
        %2093 = vmatpush1.xpose.msra.mxu0 0.0
        %2094 = vmatprep.subr.mxu0 0.0
        %2095 = vmatpush1.xpose.msra.mxu0 0.0
        %2096 = vmatprep.subr.mxu0 0.0
        %2097 = vmatpush1.xpose.msra.mxu0 0.0
        %2098 = vmatprep.subr.mxu0 0.0
        %2099 = vmatpush1.xpose.msra.mxu0 0.0
        %2100 = vmatprep.subr.mxu0 0.0
        %2101 = vmatpush1.xpose.msra.mxu0 0.0
        %2102 = vmatprep.subr.mxu0 0.0
        %2103 = vmatpush1.xpose.msra.mxu0 0.0
        %2104 = vmatprep.subr.mxu0 0.0
        %2105 = vmatpush1.xpose.msra.mxu0 0.0
        %2106 = vmatprep.subr.mxu0 0.0
        %2107 = vmatpush1.xpose.msra.mxu0 0.0
        %2108 = vmatprep.subr.mxu0 0.0
        %2109 = vmatpush1.xpose.msra.mxu0 0.0
        %2110 = vmatprep.subr.mxu0 0.0
        %2111 = vmatpush1.xpose.msra.mxu0 0.0
        %2112 = vmatprep.subr.mxu0 0.0
        %2113 = vmatpush1.xpose.msra.mxu0 0.0
        %2114 = vmatprep.subr.mxu0 0.0
        %2115 = vmatpush1.xpose.msra.mxu0 0.0
        %2116 = vmatprep.subr.mxu0 0.0
        %2117 = vmatpush1.xpose.msra.mxu0 0.0
        %2118 = vmatprep.subr.mxu0 0.0
        %2119 = vmatpush1.xpose.msra.mxu0 0.0
        %2120 = vmatprep.subr.mxu0 0.0
        %2121 = vmatpush1.xpose.msra.mxu0 0.0
        %2122 = vmatprep.subr.mxu0 0.0
        %2123 = vmatpush1.xpose.msra.mxu0 0.0
        %2124 = vmatprep.subr.mxu0 0.0
        %2125 = vmatpush1.xpose.msra.mxu0 0.0
        %2126 = vmatprep.subr.mxu0 0.0
        %2127 = vmatpush1.xpose.msra.mxu0 0.0
        %2128 = vmatprep.subr.mxu0 0.0
        %2129 = vmatpush1.xpose.msra.mxu0 0.0
        %2130 = vmatprep.subr.mxu0 0.0
        %2131 = vmatpush1.xpose.msra.mxu0 0.0
        %2132 = vmatprep.subr.mxu0 0.0
        %2133 = vmatpush1.xpose.msra.mxu0 0.0
        %2134 = vmatprep.subr.mxu0 0.0
        %2135 = vmatpush1.xpose.msra.mxu0 0.0
        %2136 = vmatprep.mubr.f32.mxu0 %v1849
        %2137 = vmatmul.mubr.f32.gmra.mrb[0].mxu0 %v1848
        %v2138 = vpop.f32.mrb[0].mxu0
        %v2139 = vadd.f32 %v2069, %v2138
        %v2140 = vpop.f32.mrb[0].mxu0
        %2141 = vdwg.mxu0
        %v2146 = vcombine.high %v512, %v512
        %v2147 = vcombine.high %v513, %v513
        %v2148 = vcombine.high %v514, %v514
        %v2149 = vcombine.high %v515, %v515
        %vm2150 = vcmask 31744
        %v2152 = vsel %vm2150, %v2139, 0
        %vm2154 = vcmask 1043456
        %v2155 = vsel %vm2154, %v512, 0
        %v2157 = vsel %vm2154, %v2146, 0
        %v2159 = vsel %vm2154, %v513, 0
        %v2161 = vsel %vm2154, %v2147, 0
        %v2163 = vsel %vm2154, %v514, 0
        %v2165 = vsel %vm2154, %v2148, 0
        %v2167 = vsel %vm2154, %v515, 0
        %v2169 = vsel %vm2154, %v2149, 0
        %2171 = vmatprep.subr.mxu0 %v2157
        %2172 = vmatpush1.msra.mxu0 %v2155
        %2173 = vmatprep.subr.mxu0 0.0
        %2174 = vmatpush1.msra.mxu0 0.0
        %2175 = vmatprep.subr.mxu0 0.0
        %2176 = vmatpush1.msra.mxu0 0.0
        %2177 = vmatprep.subr.mxu0 0.0
        %2178 = vmatpush1.msra.mxu0 0.0
        %2179 = vmatprep.subr.mxu0 0.0
        %2180 = vmatpush1.msra.mxu0 0.0
        %2181 = vmatprep.subr.mxu0 0.0
        %2182 = vmatpush1.msra.mxu0 0.0
        %2183 = vmatprep.subr.mxu0 0.0
        %2184 = vmatpush1.msra.mxu0 0.0
        %2185 = vmatprep.subr.mxu0 0.0
        %2186 = vmatpush1.msra.mxu0 0.0
        %2187 = vmatprep.subr.mxu0 0.0
        %2188 = vmatpush1.msra.mxu0 0.0
        %2189 = vmatprep.subr.mxu0 0.0
        %2190 = vmatpush1.msra.mxu0 0.0
        %2191 = vmatprep.subr.mxu0 0.0
        %2192 = vmatpush1.msra.mxu0 0.0
        %2193 = vmatprep.subr.mxu0 0.0
        %2194 = vmatpush1.msra.mxu0 0.0
        %2195 = vmatprep.subr.mxu0 0.0
        %2196 = vmatpush1.msra.mxu0 0.0
        %2197 = vmatprep.subr.mxu0 0.0
        %2198 = vmatpush1.msra.mxu0 0.0
        %2199 = vmatprep.subr.mxu0 0.0
        %2200 = vmatpush1.msra.mxu0 0.0
        %2201 = vmatprep.subr.mxu0 0.0
        %2202 = vmatpush1.msra.mxu0 0.0
        %2203 = vmatprep.subr.mxu0 0.0
        %2204 = vmatpush1.msra.mxu0 0.0
        %2205 = vmatprep.subr.mxu0 0.0
        %2206 = vmatpush1.msra.mxu0 0.0
        %2207 = vmatprep.subr.mxu0 0.0
        %2208 = vmatpush1.msra.mxu0 0.0
        %2209 = vmatprep.subr.mxu0 0.0
        %2210 = vmatpush1.msra.mxu0 0.0
        %2211 = vmatprep.subr.mxu0 0.0
        %2212 = vmatpush1.msra.mxu0 0.0
        %2213 = vmatprep.subr.mxu0 0.0
        %2214 = vmatpush1.msra.mxu0 0.0
        %2215 = vmatprep.subr.mxu0 0.0
        %2216 = vmatpush1.msra.mxu0 0.0
        %2217 = vmatprep.subr.mxu0 0.0
        %2218 = vmatpush1.msra.mxu0 0.0
        %2219 = vmatprep.subr.mxu0 0.0
        %2220 = vmatpush1.msra.mxu0 0.0
        %2221 = vmatprep.subr.mxu0 0.0
        %2222 = vmatpush1.msra.mxu0 0.0
        %2223 = vmatprep.subr.mxu0 0.0
        %2224 = vmatpush1.msra.mxu0 0.0
        %2225 = vmatprep.subr.mxu0 0.0
        %2226 = vmatpush1.msra.mxu0 0.0
        %2227 = vmatprep.subr.mxu0 0.0
        %2228 = vmatpush1.msra.mxu0 0.0
        %2229 = vmatprep.subr.mxu0 0.0
        %2230 = vmatpush1.msra.mxu0 0.0
        %2231 = vmatprep.subr.mxu0 0.0
        %2232 = vmatpush1.msra.mxu0 0.0
        %2233 = vmatprep.subr.mxu0 0.0
        %2234 = vmatpush1.msra.mxu0 0.0
        %2235 = vmatprep.mubr.f32.mxu0 0.0
        %2236 = vmatmul.mubr.f32.gmra.mrb[0].mxu0 %v2152
        %v2237 = vpop.f32.mrb[0].mxu0
        %v2238 = vadd.f32 0.0, %v2237
        %v2239 = vpop.f32.mrb[0].mxu0
        %v2240 = vadd.f32 0.0, %v2239
        %2241 = vdwg.mxu0
        %2242 = vmatprep.subr.mxu0 %v2161
        %2243 = vmatpush1.msra.mxu0 %v2159
        %2244 = vmatprep.subr.mxu0 0.0
        %2245 = vmatpush1.msra.mxu0 0.0
        %2246 = vmatprep.subr.mxu0 0.0
        %2247 = vmatpush1.msra.mxu0 0.0
        %2248 = vmatprep.subr.mxu0 0.0
        %2249 = vmatpush1.msra.mxu0 0.0
        %2250 = vmatprep.subr.mxu0 0.0
        %2251 = vmatpush1.msra.mxu0 0.0
        %2252 = vmatprep.subr.mxu0 0.0
        %2253 = vmatpush1.msra.mxu0 0.0
        %2254 = vmatprep.subr.mxu0 0.0
        %2255 = vmatpush1.msra.mxu0 0.0
        %2256 = vmatprep.subr.mxu0 0.0
        %2257 = vmatpush1.msra.mxu0 0.0
        %2258 = vmatprep.subr.mxu0 0.0
        %2259 = vmatpush1.msra.mxu0 0.0
        %2260 = vmatprep.subr.mxu0 0.0
        %2261 = vmatpush1.msra.mxu0 0.0
        %2262 = vmatprep.subr.mxu0 0.0
        %2263 = vmatpush1.msra.mxu0 0.0
        %2264 = vmatprep.subr.mxu0 0.0
        %2265 = vmatpush1.msra.mxu0 0.0
        %2266 = vmatprep.subr.mxu0 0.0
        %2267 = vmatpush1.msra.mxu0 0.0
        %2268 = vmatprep.subr.mxu0 0.0
        %2269 = vmatpush1.msra.mxu0 0.0
        %2270 = vmatprep.subr.mxu0 0.0
        %2271 = vmatpush1.msra.mxu0 0.0
        %2272 = vmatprep.subr.mxu0 0.0
        %2273 = vmatpush1.msra.mxu0 0.0
        %2274 = vmatprep.subr.mxu0 0.0
        %2275 = vmatpush1.msra.mxu0 0.0
        %2276 = vmatprep.subr.mxu0 0.0
        %2277 = vmatpush1.msra.mxu0 0.0
        %2278 = vmatprep.subr.mxu0 0.0
        %2279 = vmatpush1.msra.mxu0 0.0
        %2280 = vmatprep.subr.mxu0 0.0
        %2281 = vmatpush1.msra.mxu0 0.0
        %2282 = vmatprep.subr.mxu0 0.0
        %2283 = vmatpush1.msra.mxu0 0.0
        %2284 = vmatprep.subr.mxu0 0.0
        %2285 = vmatpush1.msra.mxu0 0.0
        %2286 = vmatprep.subr.mxu0 0.0
        %2287 = vmatpush1.msra.mxu0 0.0
        %2288 = vmatprep.subr.mxu0 0.0
        %2289 = vmatpush1.msra.mxu0 0.0
        %2290 = vmatprep.subr.mxu0 0.0
        %2291 = vmatpush1.msra.mxu0 0.0
        %2292 = vmatprep.subr.mxu0 0.0
        %2293 = vmatpush1.msra.mxu0 0.0
        %2294 = vmatprep.subr.mxu0 0.0
        %2295 = vmatpush1.msra.mxu0 0.0
        %2296 = vmatprep.subr.mxu0 0.0
        %2297 = vmatpush1.msra.mxu0 0.0
        %2298 = vmatprep.subr.mxu0 0.0
        %2299 = vmatpush1.msra.mxu0 0.0
        %2300 = vmatprep.subr.mxu0 0.0
        %2301 = vmatpush1.msra.mxu0 0.0
        %2302 = vmatprep.subr.mxu0 0.0
        %2303 = vmatpush1.msra.mxu0 0.0
        %2304 = vmatprep.subr.mxu0 0.0
        %2305 = vmatpush1.msra.mxu0 0.0
        %2306 = vmatprep.mubr.f32.mxu0 0.0
        %2307 = vmatmul.mubr.f32.gmra.mrb[0].mxu0 %v2152
        %v2308 = vpop.f32.mrb[0].mxu0
        %v2309 = vadd.f32 0.0, %v2308
        %v2310 = vpop.f32.mrb[0].mxu0
        %v2311 = vadd.f32 0.0, %v2310
        %2312 = vdwg.mxu0
        %2313 = vmatprep.subr.mxu0 %v2165
        %2314 = vmatpush1.msra.mxu0 %v2163
        %2315 = vmatprep.subr.mxu0 0.0
        %2316 = vmatpush1.msra.mxu0 0.0
        %2317 = vmatprep.subr.mxu0 0.0
        %2318 = vmatpush1.msra.mxu0 0.0
        %2319 = vmatprep.subr.mxu0 0.0
        %2320 = vmatpush1.msra.mxu0 0.0
        %2321 = vmatprep.subr.mxu0 0.0
        %2322 = vmatpush1.msra.mxu0 0.0
        %2323 = vmatprep.subr.mxu0 0.0
        %2324 = vmatpush1.msra.mxu0 0.0
        %2325 = vmatprep.subr.mxu0 0.0
        %2326 = vmatpush1.msra.mxu0 0.0
        %2327 = vmatprep.subr.mxu0 0.0
        %2328 = vmatpush1.msra.mxu0 0.0
        %2329 = vmatprep.subr.mxu0 0.0
        %2330 = vmatpush1.msra.mxu0 0.0
        %2331 = vmatprep.subr.mxu0 0.0
        %2332 = vmatpush1.msra.mxu0 0.0
        %2333 = vmatprep.subr.mxu0 0.0
        %2334 = vmatpush1.msra.mxu0 0.0
        %2335 = vmatprep.subr.mxu0 0.0
        %2336 = vmatpush1.msra.mxu0 0.0
        %2337 = vmatprep.subr.mxu0 0.0
        %2338 = vmatpush1.msra.mxu0 0.0
        %2339 = vmatprep.subr.mxu0 0.0
        %2340 = vmatpush1.msra.mxu0 0.0
        %2341 = vmatprep.subr.mxu0 0.0
        %2342 = vmatpush1.msra.mxu0 0.0
        %2343 = vmatprep.subr.mxu0 0.0
        %2344 = vmatpush1.msra.mxu0 0.0
        %2345 = vmatprep.subr.mxu0 0.0
        %2346 = vmatpush1.msra.mxu0 0.0
        %2347 = vmatprep.subr.mxu0 0.0
        %2348 = vmatpush1.msra.mxu0 0.0
        %2349 = vmatprep.subr.mxu0 0.0
        %2350 = vmatpush1.msra.mxu0 0.0
        %2351 = vmatprep.subr.mxu0 0.0
        %2352 = vmatpush1.msra.mxu0 0.0
        %2353 = vmatprep.subr.mxu0 0.0
        %2354 = vmatpush1.msra.mxu0 0.0
        %2355 = vmatprep.subr.mxu0 0.0
        %2356 = vmatpush1.msra.mxu0 0.0
        %2357 = vmatprep.subr.mxu0 0.0
        %2358 = vmatpush1.msra.mxu0 0.0
        %2359 = vmatprep.subr.mxu0 0.0
        %2360 = vmatpush1.msra.mxu0 0.0
        %2361 = vmatprep.subr.mxu0 0.0
        %2362 = vmatpush1.msra.mxu0 0.0
        %2363 = vmatprep.subr.mxu0 0.0
        %2364 = vmatpush1.msra.mxu0 0.0
        %2365 = vmatprep.subr.mxu0 0.0
        %2366 = vmatpush1.msra.mxu0 0.0
        %2367 = vmatprep.subr.mxu0 0.0
        %2368 = vmatpush1.msra.mxu0 0.0
        %2369 = vmatprep.subr.mxu0 0.0
        %2370 = vmatpush1.msra.mxu0 0.0
        %2371 = vmatprep.subr.mxu0 0.0
        %2372 = vmatpush1.msra.mxu0 0.0
        %2373 = vmatprep.subr.mxu0 0.0
        %2374 = vmatpush1.msra.mxu0 0.0
        %2375 = vmatprep.subr.mxu0 0.0
        %2376 = vmatpush1.msra.mxu0 0.0
        %2377 = vmatprep.mubr.f32.mxu0 0.0
        %2378 = vmatmul.mubr.f32.gmra.mrb[0].mxu0 %v2152
        %v2379 = vpop.f32.mrb[0].mxu0
        %v2380 = vadd.f32 0.0, %v2379
        %v2381 = vpop.f32.mrb[0].mxu0
        %v2382 = vadd.f32 0.0, %v2381
        %2383 = vdwg.mxu0
        %2384 = vmatprep.subr.mxu0 %v2169
        %2385 = vmatpush1.msra.mxu0 %v2167
        %2386 = vmatprep.subr.mxu0 0.0
        %2387 = vmatpush1.msra.mxu0 0.0
        %2388 = vmatprep.subr.mxu0 0.0
        %2389 = vmatpush1.msra.mxu0 0.0
        %2390 = vmatprep.subr.mxu0 0.0
        %2391 = vmatpush1.msra.mxu0 0.0
        %2392 = vmatprep.subr.mxu0 0.0
        %2393 = vmatpush1.msra.mxu0 0.0
        %2394 = vmatprep.subr.mxu0 0.0
        %2395 = vmatpush1.msra.mxu0 0.0
        %2396 = vmatprep.subr.mxu0 0.0
        %2397 = vmatpush1.msra.mxu0 0.0
        %2398 = vmatprep.subr.mxu0 0.0
        %2399 = vmatpush1.msra.mxu0 0.0
        %2400 = vmatprep.subr.mxu0 0.0
        %2401 = vmatpush1.msra.mxu0 0.0
        %2402 = vmatprep.subr.mxu0 0.0
        %2403 = vmatpush1.msra.mxu0 0.0
        %2404 = vmatprep.subr.mxu0 0.0
        %2405 = vmatpush1.msra.mxu0 0.0
        %2406 = vmatprep.subr.mxu0 0.0
        %2407 = vmatpush1.msra.mxu0 0.0
        %2408 = vmatprep.subr.mxu0 0.0
        %2409 = vmatpush1.msra.mxu0 0.0
        %2410 = vmatprep.subr.mxu0 0.0
        %2411 = vmatpush1.msra.mxu0 0.0
        %2412 = vmatprep.subr.mxu0 0.0
        %2413 = vmatpush1.msra.mxu0 0.0
        %2414 = vmatprep.subr.mxu0 0.0
        %2415 = vmatpush1.msra.mxu0 0.0
        %2416 = vmatprep.subr.mxu0 0.0
        %2417 = vmatpush1.msra.mxu0 0.0
        %2418 = vmatprep.subr.mxu0 0.0
        %2419 = vmatpush1.msra.mxu0 0.0
        %2420 = vmatprep.subr.mxu0 0.0
        %2421 = vmatpush1.msra.mxu0 0.0
        %2422 = vmatprep.subr.mxu0 0.0
        %2423 = vmatpush1.msra.mxu0 0.0
        %2424 = vmatprep.subr.mxu0 0.0
        %2425 = vmatpush1.msra.mxu0 0.0
        %2426 = vmatprep.subr.mxu0 0.0
        %2427 = vmatpush1.msra.mxu0 0.0
        %2428 = vmatprep.subr.mxu0 0.0
        %2429 = vmatpush1.msra.mxu0 0.0
        %2430 = vmatprep.subr.mxu0 0.0
        %2431 = vmatpush1.msra.mxu0 0.0
        %2432 = vmatprep.subr.mxu0 0.0
        %2433 = vmatpush1.msra.mxu0 0.0
        %2434 = vmatprep.subr.mxu0 0.0
        %2435 = vmatpush1.msra.mxu0 0.0
        %2436 = vmatprep.subr.mxu0 0.0
        %2437 = vmatpush1.msra.mxu0 0.0
        %2438 = vmatprep.subr.mxu0 0.0
        %2439 = vmatpush1.msra.mxu0 0.0
        %2440 = vmatprep.subr.mxu0 0.0
        %2441 = vmatpush1.msra.mxu0 0.0
        %2442 = vmatprep.subr.mxu0 0.0
        %2443 = vmatpush1.msra.mxu0 0.0
        %2444 = vmatprep.subr.mxu0 0.0
        %2445 = vmatpush1.msra.mxu0 0.0
        %2446 = vmatprep.subr.mxu0 0.0
        %2447 = vmatpush1.msra.mxu0 0.0
        %2448 = vmatprep.mubr.f32.mxu0 0.0
        %2449 = vmatmul.mubr.f32.gmra.mrb[0].mxu0 %v2152
        %v2450 = vpop.f32.mrb[0].mxu0
        %v2451 = vadd.f32 0.0, %v2450
        %v2452 = vpop.f32.mrb[0].mxu0
        %v2453 = vadd.f32 0.0, %v2452
        %2454 = vdwg.mxu0
        %v2455 = vsub.f32 %v1842, %v2238
        %v2456 = vsub.f32 %v1843, %v2240
        %v2457 = vsub.f32 %v1844, %v2309
        %v2458 = vsub.f32 %v1845, %v2311
        %v2459 = vsub.f32 %v1846, %v2380
        %v2460 = vsub.f32 %v1847, %v2382
        %v2461 = vsub.f32 %v1848, %v2451
        %v2462 = vsub.f32 %v1849, %v2453
        %v2463 = vmul.f32 %v2455, %v2455
        %v2464 = vmul.f32 %v2456, %v2456
        %v2465 = vmul.f32 %v2457, %v2457
        %v2466 = vmul.f32 %v2458, %v2458
        %v2467 = vmul.f32 %v2459, %v2459
        %v2468 = vmul.f32 %v2460, %v2460
        %v2469 = vmul.f32 %v2461, %v2461
        %v2470 = vmul.f32 %v2462, %v2462
        %2471 = vmatprep.subr.mxu0 %v1854
        %2472 = vmatpush1.xpose.msra.mxu0 %v508
        %2473 = vmatprep.subr.mxu0 0.0
        %2474 = vmatpush1.xpose.msra.mxu0 0.0
        %2475 = vmatprep.subr.mxu0 0.0
        %2476 = vmatpush1.xpose.msra.mxu0 0.0
        %2477 = vmatprep.subr.mxu0 0.0
        %2478 = vmatpush1.xpose.msra.mxu0 0.0
        %2479 = vmatprep.subr.mxu0 0.0
        %2480 = vmatpush1.xpose.msra.mxu0 0.0
        %2481 = vmatprep.subr.mxu0 0.0
        %2482 = vmatpush1.xpose.msra.mxu0 0.0
        %2483 = vmatprep.subr.mxu0 0.0
        %2484 = vmatpush1.xpose.msra.mxu0 0.0
        %2485 = vmatprep.subr.mxu0 0.0
        %2486 = vmatpush1.xpose.msra.mxu0 0.0
        %2487 = vmatprep.subr.mxu0 0.0
        %2488 = vmatpush1.xpose.msra.mxu0 0.0
        %2489 = vmatprep.subr.mxu0 0.0
        %2490 = vmatpush1.xpose.msra.mxu0 0.0
        %2491 = vmatprep.subr.mxu0 0.0
        %2492 = vmatpush1.xpose.msra.mxu0 0.0
        %2493 = vmatprep.subr.mxu0 0.0
        %2494 = vmatpush1.xpose.msra.mxu0 0.0
        %2495 = vmatprep.subr.mxu0 0.0
        %2496 = vmatpush1.xpose.msra.mxu0 0.0
        %2497 = vmatprep.subr.mxu0 0.0
        %2498 = vmatpush1.xpose.msra.mxu0 0.0
        %2499 = vmatprep.subr.mxu0 0.0
        %2500 = vmatpush1.xpose.msra.mxu0 0.0
        %2501 = vmatprep.subr.mxu0 0.0
        %2502 = vmatpush1.xpose.msra.mxu0 0.0
        %2503 = vmatprep.subr.mxu0 0.0
        %2504 = vmatpush1.xpose.msra.mxu0 0.0
        %2505 = vmatprep.subr.mxu0 0.0
        %2506 = vmatpush1.xpose.msra.mxu0 0.0
        %2507 = vmatprep.subr.mxu0 0.0
        %2508 = vmatpush1.xpose.msra.mxu0 0.0
        %2509 = vmatprep.subr.mxu0 0.0
        %2510 = vmatpush1.xpose.msra.mxu0 0.0
        %2511 = vmatprep.subr.mxu0 0.0
        %2512 = vmatpush1.xpose.msra.mxu0 0.0
        %2513 = vmatprep.subr.mxu0 0.0
        %2514 = vmatpush1.xpose.msra.mxu0 0.0
        %2515 = vmatprep.subr.mxu0 0.0
        %2516 = vmatpush1.xpose.msra.mxu0 0.0
        %2517 = vmatprep.subr.mxu0 0.0
        %2518 = vmatpush1.xpose.msra.mxu0 0.0
        %2519 = vmatprep.subr.mxu0 0.0
        %2520 = vmatpush1.xpose.msra.mxu0 0.0
        %2521 = vmatprep.subr.mxu0 0.0
        %2522 = vmatpush1.xpose.msra.mxu0 0.0
        %2523 = vmatprep.subr.mxu0 0.0
        %2524 = vmatpush1.xpose.msra.mxu0 0.0
        %2525 = vmatprep.subr.mxu0 0.0
        %2526 = vmatpush1.xpose.msra.mxu0 0.0
        %2527 = vmatprep.subr.mxu0 0.0
        %2528 = vmatpush1.xpose.msra.mxu0 0.0
        %2529 = vmatprep.subr.mxu0 0.0
        %2530 = vmatpush1.xpose.msra.mxu0 0.0
        %2531 = vmatprep.subr.mxu0 0.0
        %2532 = vmatpush1.xpose.msra.mxu0 0.0
        %2533 = vmatprep.subr.mxu0 0.0
        %2534 = vmatpush1.xpose.msra.mxu0 0.0
        %2535 = vmatprep.mubr.f32.mxu0 %v2464
        %2536 = vmatmul.mubr.f32.gmra.mrb[0].mxu0 %v2463
        %v2537 = vpop.f32.mrb[0].mxu0
        %v2538 = vadd.f32 1e-05, %v2537
        %v2539 = vpop.f32.mrb[0].mxu0
        %2540 = vdwg.mxu0
        %2541 = vmatprep.subr.mxu0 %v1855
        %2542 = vmatpush1.xpose.msra.mxu0 %v509
        %2543 = vmatprep.subr.mxu0 0.0
        %2544 = vmatpush1.xpose.msra.mxu0 0.0
        %2545 = vmatprep.subr.mxu0 0.0
        %2546 = vmatpush1.xpose.msra.mxu0 0.0
        %2547 = vmatprep.subr.mxu0 0.0
        %2548 = vmatpush1.xpose.msra.mxu0 0.0
        %2549 = vmatprep.subr.mxu0 0.0
        %2550 = vmatpush1.xpose.msra.mxu0 0.0
        %2551 = vmatprep.subr.mxu0 0.0
        %2552 = vmatpush1.xpose.msra.mxu0 0.0
        %2553 = vmatprep.subr.mxu0 0.0
        %2554 = vmatpush1.xpose.msra.mxu0 0.0
        %2555 = vmatprep.subr.mxu0 0.0
        %2556 = vmatpush1.xpose.msra.mxu0 0.0
        %2557 = vmatprep.subr.mxu0 0.0
        %2558 = vmatpush1.xpose.msra.mxu0 0.0
        %2559 = vmatprep.subr.mxu0 0.0
        %2560 = vmatpush1.xpose.msra.mxu0 0.0
        %2561 = vmatprep.subr.mxu0 0.0
        %2562 = vmatpush1.xpose.msra.mxu0 0.0
        %2563 = vmatprep.subr.mxu0 0.0
        %2564 = vmatpush1.xpose.msra.mxu0 0.0
        %2565 = vmatprep.subr.mxu0 0.0
        %2566 = vmatpush1.xpose.msra.mxu0 0.0
        %2567 = vmatprep.subr.mxu0 0.0
        %2568 = vmatpush1.xpose.msra.mxu0 0.0
        %2569 = vmatprep.subr.mxu0 0.0
        %2570 = vmatpush1.xpose.msra.mxu0 0.0
        %2571 = vmatprep.subr.mxu0 0.0
        %2572 = vmatpush1.xpose.msra.mxu0 0.0
        %2573 = vmatprep.subr.mxu0 0.0
        %2574 = vmatpush1.xpose.msra.mxu0 0.0
        %2575 = vmatprep.subr.mxu0 0.0
        %2576 = vmatpush1.xpose.msra.mxu0 0.0
        %2577 = vmatprep.subr.mxu0 0.0
        %2578 = vmatpush1.xpose.msra.mxu0 0.0
        %2579 = vmatprep.subr.mxu0 0.0
        %2580 = vmatpush1.xpose.msra.mxu0 0.0
        %2581 = vmatprep.subr.mxu0 0.0
        %2582 = vmatpush1.xpose.msra.mxu0 0.0
        %2583 = vmatprep.subr.mxu0 0.0
        %2584 = vmatpush1.xpose.msra.mxu0 0.0
        %2585 = vmatprep.subr.mxu0 0.0
        %2586 = vmatpush1.xpose.msra.mxu0 0.0
        %2587 = vmatprep.subr.mxu0 0.0
        %2588 = vmatpush1.xpose.msra.mxu0 0.0
        %2589 = vmatprep.subr.mxu0 0.0
        %2590 = vmatpush1.xpose.msra.mxu0 0.0
        %2591 = vmatprep.subr.mxu0 0.0
        %2592 = vmatpush1.xpose.msra.mxu0 0.0
        %2593 = vmatprep.subr.mxu0 0.0
        %2594 = vmatpush1.xpose.msra.mxu0 0.0
        %2595 = vmatprep.subr.mxu0 0.0
        %2596 = vmatpush1.xpose.msra.mxu0 0.0
        %2597 = vmatprep.subr.mxu0 0.0
        %2598 = vmatpush1.xpose.msra.mxu0 0.0
        %2599 = vmatprep.subr.mxu0 0.0
        %2600 = vmatpush1.xpose.msra.mxu0 0.0
        %2601 = vmatprep.subr.mxu0 0.0
        %2602 = vmatpush1.xpose.msra.mxu0 0.0
        %2603 = vmatprep.subr.mxu0 0.0
        %2604 = vmatpush1.xpose.msra.mxu0 0.0
        %2605 = vmatprep.mubr.f32.mxu0 %v2466
        %2606 = vmatmul.mubr.f32.gmra.mrb[0].mxu0 %v2465
        %v2607 = vpop.f32.mrb[0].mxu0
        %v2608 = vadd.f32 %v2538, %v2607
        %v2609 = vpop.f32.mrb[0].mxu0
        %2610 = vdwg.mxu0
        %2611 = vmatprep.subr.mxu0 %v1856
        %2612 = vmatpush1.xpose.msra.mxu0 %v510
        %2613 = vmatprep.subr.mxu0 0.0
        %2614 = vmatpush1.xpose.msra.mxu0 0.0
        %2615 = vmatprep.subr.mxu0 0.0
        %2616 = vmatpush1.xpose.msra.mxu0 0.0
        %2617 = vmatprep.subr.mxu0 0.0
        %2618 = vmatpush1.xpose.msra.mxu0 0.0
        %2619 = vmatprep.subr.mxu0 0.0
        %2620 = vmatpush1.xpose.msra.mxu0 0.0
        %2621 = vmatprep.subr.mxu0 0.0
        %2622 = vmatpush1.xpose.msra.mxu0 0.0
        %2623 = vmatprep.subr.mxu0 0.0
        %2624 = vmatpush1.xpose.msra.mxu0 0.0
        %2625 = vmatprep.subr.mxu0 0.0
        %2626 = vmatpush1.xpose.msra.mxu0 0.0
        %2627 = vmatprep.subr.mxu0 0.0
        %2628 = vmatpush1.xpose.msra.mxu0 0.0
        %2629 = vmatprep.subr.mxu0 0.0
        %2630 = vmatpush1.xpose.msra.mxu0 0.0
        %2631 = vmatprep.subr.mxu0 0.0
        %2632 = vmatpush1.xpose.msra.mxu0 0.0
        %2633 = vmatprep.subr.mxu0 0.0
        %2634 = vmatpush1.xpose.msra.mxu0 0.0
        %2635 = vmatprep.subr.mxu0 0.0
        %2636 = vmatpush1.xpose.msra.mxu0 0.0
        %2637 = vmatprep.subr.mxu0 0.0
        %2638 = vmatpush1.xpose.msra.mxu0 0.0
        %2639 = vmatprep.subr.mxu0 0.0
        %2640 = vmatpush1.xpose.msra.mxu0 0.0
        %2641 = vmatprep.subr.mxu0 0.0
        %2642 = vmatpush1.xpose.msra.mxu0 0.0
        %2643 = vmatprep.subr.mxu0 0.0
        %2644 = vmatpush1.xpose.msra.mxu0 0.0
        %2645 = vmatprep.subr.mxu0 0.0
        %2646 = vmatpush1.xpose.msra.mxu0 0.0
        %2647 = vmatprep.subr.mxu0 0.0
        %2648 = vmatpush1.xpose.msra.mxu0 0.0
        %2649 = vmatprep.subr.mxu0 0.0
        %2650 = vmatpush1.xpose.msra.mxu0 0.0
        %2651 = vmatprep.subr.mxu0 0.0
        %2652 = vmatpush1.xpose.msra.mxu0 0.0
        %2653 = vmatprep.subr.mxu0 0.0
        %2654 = vmatpush1.xpose.msra.mxu0 0.0
        %2655 = vmatprep.subr.mxu0 0.0
        %2656 = vmatpush1.xpose.msra.mxu0 0.0
        %2657 = vmatprep.subr.mxu0 0.0
        %2658 = vmatpush1.xpose.msra.mxu0 0.0
        %2659 = vmatprep.subr.mxu0 0.0
        %2660 = vmatpush1.xpose.msra.mxu0 0.0
        %2661 = vmatprep.subr.mxu0 0.0
        %2662 = vmatpush1.xpose.msra.mxu0 0.0
        %2663 = vmatprep.subr.mxu0 0.0
        %2664 = vmatpush1.xpose.msra.mxu0 0.0
        %2665 = vmatprep.subr.mxu0 0.0
        %2666 = vmatpush1.xpose.msra.mxu0 0.0
        %2667 = vmatprep.subr.mxu0 0.0
        %2668 = vmatpush1.xpose.msra.mxu0 0.0
        %2669 = vmatprep.subr.mxu0 0.0
        %2670 = vmatpush1.xpose.msra.mxu0 0.0
        %2671 = vmatprep.subr.mxu0 0.0
        %2672 = vmatpush1.xpose.msra.mxu0 0.0
        %2673 = vmatprep.subr.mxu0 0.0
        %2674 = vmatpush1.xpose.msra.mxu0 0.0
        %2675 = vmatprep.mubr.f32.mxu0 %v2468
        %2676 = vmatmul.mubr.f32.gmra.mrb[0].mxu0 %v2467
        %v2677 = vpop.f32.mrb[0].mxu0
        %v2678 = vadd.f32 %v2608, %v2677
        %v2679 = vpop.f32.mrb[0].mxu0
        %2680 = vdwg.mxu0
        %2681 = vmatprep.subr.mxu0 %v1857
        %2682 = vmatpush1.xpose.msra.mxu0 %v511
        %2683 = vmatprep.subr.mxu0 0.0
        %2684 = vmatpush1.xpose.msra.mxu0 0.0
        %2685 = vmatprep.subr.mxu0 0.0
        %2686 = vmatpush1.xpose.msra.mxu0 0.0
        %2687 = vmatprep.subr.mxu0 0.0
        %2688 = vmatpush1.xpose.msra.mxu0 0.0
        %2689 = vmatprep.subr.mxu0 0.0
        %2690 = vmatpush1.xpose.msra.mxu0 0.0
        %2691 = vmatprep.subr.mxu0 0.0
        %2692 = vmatpush1.xpose.msra.mxu0 0.0
        %2693 = vmatprep.subr.mxu0 0.0
        %2694 = vmatpush1.xpose.msra.mxu0 0.0
        %2695 = vmatprep.subr.mxu0 0.0
        %2696 = vmatpush1.xpose.msra.mxu0 0.0
        %2697 = vmatprep.subr.mxu0 0.0
        %2698 = vmatpush1.xpose.msra.mxu0 0.0
        %2699 = vmatprep.subr.mxu0 0.0
        %2700 = vmatpush1.xpose.msra.mxu0 0.0
        %2701 = vmatprep.subr.mxu0 0.0
        %2702 = vmatpush1.xpose.msra.mxu0 0.0
        %2703 = vmatprep.subr.mxu0 0.0
        %2704 = vmatpush1.xpose.msra.mxu0 0.0
        %2705 = vmatprep.subr.mxu0 0.0
        %2706 = vmatpush1.xpose.msra.mxu0 0.0
        %2707 = vmatprep.subr.mxu0 0.0
        %2708 = vmatpush1.xpose.msra.mxu0 0.0
        %2709 = vmatprep.subr.mxu0 0.0
        %2710 = vmatpush1.xpose.msra.mxu0 0.0
        %2711 = vmatprep.subr.mxu0 0.0
        %2712 = vmatpush1.xpose.msra.mxu0 0.0
        %2713 = vmatprep.subr.mxu0 0.0
        %2714 = vmatpush1.xpose.msra.mxu0 0.0
        %2715 = vmatprep.subr.mxu0 0.0
        %2716 = vmatpush1.xpose.msra.mxu0 0.0
        %2717 = vmatprep.subr.mxu0 0.0
        %2718 = vmatpush1.xpose.msra.mxu0 0.0
        %2719 = vmatprep.subr.mxu0 0.0
        %2720 = vmatpush1.xpose.msra.mxu0 0.0
        %2721 = vmatprep.subr.mxu0 0.0
        %2722 = vmatpush1.xpose.msra.mxu0 0.0
        %2723 = vmatprep.subr.mxu0 0.0
        %2724 = vmatpush1.xpose.msra.mxu0 0.0
        %2725 = vmatprep.subr.mxu0 0.0
        %2726 = vmatpush1.xpose.msra.mxu0 0.0
        %2727 = vmatprep.subr.mxu0 0.0
        %2728 = vmatpush1.xpose.msra.mxu0 0.0
        %2729 = vmatprep.subr.mxu0 0.0
        %2730 = vmatpush1.xpose.msra.mxu0 0.0
        %2731 = vmatprep.subr.mxu0 0.0
        %2732 = vmatpush1.xpose.msra.mxu0 0.0
        %2733 = vmatprep.subr.mxu0 0.0
        %2734 = vmatpush1.xpose.msra.mxu0 0.0
        %2735 = vmatprep.subr.mxu0 0.0
        %2736 = vmatpush1.xpose.msra.mxu0 0.0
        %2737 = vmatprep.subr.mxu0 0.0
        %2738 = vmatpush1.xpose.msra.mxu0 0.0
        %2739 = vmatprep.subr.mxu0 0.0
        %2740 = vmatpush1.xpose.msra.mxu0 0.0
        %2741 = vmatprep.subr.mxu0 0.0
        %2742 = vmatpush1.xpose.msra.mxu0 0.0
        %2743 = vmatprep.subr.mxu0 0.0
        %2744 = vmatpush1.xpose.msra.mxu0 0.0
        %2745 = vmatprep.mubr.f32.mxu0 %v2470
        %2746 = vmatmul.mubr.f32.gmra.mrb[0].mxu0 %v2469
        %v2747 = vpop.f32.mrb[0].mxu0
        %v2748 = vadd.f32 %v2678, %v2747
        %v2749 = vpop.f32.mrb[0].mxu0
        %2750 = vdwg.mxu0
        %v2751 = vrsqrt.pop %v2748
        %v2753 = vsel %vm2150, %v2751, 0
        %2755 = vmatprep.subr.mxu0 %v2157
        %2756 = vmatpush1.msra.mxu0 %v2155
        %2757 = vmatprep.subr.mxu0 0.0
        %2758 = vmatpush1.msra.mxu0 0.0
        %2759 = vmatprep.subr.mxu0 0.0
        %2760 = vmatpush1.msra.mxu0 0.0
        %2761 = vmatprep.subr.mxu0 0.0
        %2762 = vmatpush1.msra.mxu0 0.0
        %2763 = vmatprep.subr.mxu0 0.0
        %2764 = vmatpush1.msra.mxu0 0.0
        %2765 = vmatprep.subr.mxu0 0.0
        %2766 = vmatpush1.msra.mxu0 0.0
        %2767 = vmatprep.subr.mxu0 0.0
        %2768 = vmatpush1.msra.mxu0 0.0
        %2769 = vmatprep.subr.mxu0 0.0
        %2770 = vmatpush1.msra.mxu0 0.0
        %2771 = vmatprep.subr.mxu0 0.0
        %2772 = vmatpush1.msra.mxu0 0.0
        %2773 = vmatprep.subr.mxu0 0.0
        %2774 = vmatpush1.msra.mxu0 0.0
        %2775 = vmatprep.subr.mxu0 0.0
        %2776 = vmatpush1.msra.mxu0 0.0
        %2777 = vmatprep.subr.mxu0 0.0
        %2778 = vmatpush1.msra.mxu0 0.0
        %2779 = vmatprep.subr.mxu0 0.0
        %2780 = vmatpush1.msra.mxu0 0.0
        %2781 = vmatprep.subr.mxu0 0.0
        %2782 = vmatpush1.msra.mxu0 0.0
        %2783 = vmatprep.subr.mxu0 0.0
        %2784 = vmatpush1.msra.mxu0 0.0
        %2785 = vmatprep.subr.mxu0 0.0
        %2786 = vmatpush1.msra.mxu0 0.0
        %2787 = vmatprep.subr.mxu0 0.0
        %2788 = vmatpush1.msra.mxu0 0.0
        %2789 = vmatprep.subr.mxu0 0.0
        %2790 = vmatpush1.msra.mxu0 0.0
        %2791 = vmatprep.subr.mxu0 0.0
        %2792 = vmatpush1.msra.mxu0 0.0
        %2793 = vmatprep.subr.mxu0 0.0
        %2794 = vmatpush1.msra.mxu0 0.0
        %2795 = vmatprep.subr.mxu0 0.0
        %2796 = vmatpush1.msra.mxu0 0.0
        %2797 = vmatprep.subr.mxu0 0.0
        %2798 = vmatpush1.msra.mxu0 0.0
        %2799 = vmatprep.subr.mxu0 0.0
        %2800 = vmatpush1.msra.mxu0 0.0
        %2801 = vmatprep.subr.mxu0 0.0
        %2802 = vmatpush1.msra.mxu0 0.0
        %2803 = vmatprep.subr.mxu0 0.0
        %2804 = vmatpush1.msra.mxu0 0.0
        %2805 = vmatprep.subr.mxu0 0.0
        %2806 = vmatpush1.msra.mxu0 0.0
        %2807 = vmatprep.subr.mxu0 0.0
        %2808 = vmatpush1.msra.mxu0 0.0
        %2809 = vmatprep.subr.mxu0 0.0
        %2810 = vmatpush1.msra.mxu0 0.0
        %2811 = vmatprep.subr.mxu0 0.0
        %2812 = vmatpush1.msra.mxu0 0.0
        %2813 = vmatprep.subr.mxu0 0.0
        %2814 = vmatpush1.msra.mxu0 0.0
        %2815 = vmatprep.subr.mxu0 0.0
        %2816 = vmatpush1.msra.mxu0 0.0
        %2817 = vmatprep.subr.mxu0 0.0
        %2818 = vmatpush1.msra.mxu0 0.0
        %2819 = vmatprep.mubr.f32.mxu0 0.0
        %2820 = vmatmul.mubr.f32.gmra.mrb[0].mxu0 %v2753
        %v2821 = vpop.f32.mrb[0].mxu0
        %v2822 = vadd.f32 0.0, %v2821
        %v2823 = vpop.f32.mrb[0].mxu0
        %v2824 = vadd.f32 0.0, %v2823
        %2825 = vdwg.mxu0
        %2826 = vmatprep.subr.mxu0 %v2161
        %2827 = vmatpush1.msra.mxu0 %v2159
        %2828 = vmatprep.subr.mxu0 0.0
        %2829 = vmatpush1.msra.mxu0 0.0
        %2830 = vmatprep.subr.mxu0 0.0
        %2831 = vmatpush1.msra.mxu0 0.0
        %2832 = vmatprep.subr.mxu0 0.0
        %2833 = vmatpush1.msra.mxu0 0.0
        %2834 = vmatprep.subr.mxu0 0.0
        %2835 = vmatpush1.msra.mxu0 0.0
        %2836 = vmatprep.subr.mxu0 0.0
        %2837 = vmatpush1.msra.mxu0 0.0
        %2838 = vmatprep.subr.mxu0 0.0
        %2839 = vmatpush1.msra.mxu0 0.0
        %2840 = vmatprep.subr.mxu0 0.0
        %2841 = vmatpush1.msra.mxu0 0.0
        %2842 = vmatprep.subr.mxu0 0.0
        %2843 = vmatpush1.msra.mxu0 0.0
        %2844 = vmatprep.subr.mxu0 0.0
        %2845 = vmatpush1.msra.mxu0 0.0
        %2846 = vmatprep.subr.mxu0 0.0
        %2847 = vmatpush1.msra.mxu0 0.0
        %2848 = vmatprep.subr.mxu0 0.0
        %2849 = vmatpush1.msra.mxu0 0.0
        %2850 = vmatprep.subr.mxu0 0.0
        %2851 = vmatpush1.msra.mxu0 0.0
        %2852 = vmatprep.subr.mxu0 0.0
        %2853 = vmatpush1.msra.mxu0 0.0
        %2854 = vmatprep.subr.mxu0 0.0
        %2855 = vmatpush1.msra.mxu0 0.0
        %2856 = vmatprep.subr.mxu0 0.0
        %2857 = vmatpush1.msra.mxu0 0.0
        %2858 = vmatprep.subr.mxu0 0.0
        %2859 = vmatpush1.msra.mxu0 0.0
        %2860 = vmatprep.subr.mxu0 0.0
        %2861 = vmatpush1.msra.mxu0 0.0
        %2862 = vmatprep.subr.mxu0 0.0
        %2863 = vmatpush1.msra.mxu0 0.0
        %2864 = vmatprep.subr.mxu0 0.0
        %2865 = vmatpush1.msra.mxu0 0.0
        %2866 = vmatprep.subr.mxu0 0.0
        %2867 = vmatpush1.msra.mxu0 0.0
        %2868 = vmatprep.subr.mxu0 0.0
        %2869 = vmatpush1.msra.mxu0 0.0
        %2870 = vmatprep.subr.mxu0 0.0
        %2871 = vmatpush1.msra.mxu0 0.0
        %2872 = vmatprep.subr.mxu0 0.0
        %2873 = vmatpush1.msra.mxu0 0.0
        %2874 = vmatprep.subr.mxu0 0.0
        %2875 = vmatpush1.msra.mxu0 0.0
        %2876 = vmatprep.subr.mxu0 0.0
        %2877 = vmatpush1.msra.mxu0 0.0
        %2878 = vmatprep.subr.mxu0 0.0
        %2879 = vmatpush1.msra.mxu0 0.0
        %2880 = vmatprep.subr.mxu0 0.0
        %2881 = vmatpush1.msra.mxu0 0.0
        %2882 = vmatprep.subr.mxu0 0.0
        %2883 = vmatpush1.msra.mxu0 0.0
        %2884 = vmatprep.subr.mxu0 0.0
        %2885 = vmatpush1.msra.mxu0 0.0
        %2886 = vmatprep.subr.mxu0 0.0
        %2887 = vmatpush1.msra.mxu0 0.0
        %2888 = vmatprep.subr.mxu0 0.0
        %2889 = vmatpush1.msra.mxu0 0.0
        %2890 = vmatprep.mubr.f32.mxu0 0.0
        %2891 = vmatmul.mubr.f32.gmra.mrb[0].mxu0 %v2753
        %v2892 = vpop.f32.mrb[0].mxu0
        %v2893 = vadd.f32 0.0, %v2892
        %v2894 = vpop.f32.mrb[0].mxu0
        %v2895 = vadd.f32 0.0, %v2894
        %2896 = vdwg.mxu0
        %2897 = vmatprep.subr.mxu0 %v2165
        %2898 = vmatpush1.msra.mxu0 %v2163
        %2899 = vmatprep.subr.mxu0 0.0
        %2900 = vmatpush1.msra.mxu0 0.0
        %2901 = vmatprep.subr.mxu0 0.0
        %2902 = vmatpush1.msra.mxu0 0.0
        %2903 = vmatprep.subr.mxu0 0.0
        %2904 = vmatpush1.msra.mxu0 0.0
        %2905 = vmatprep.subr.mxu0 0.0
        %2906 = vmatpush1.msra.mxu0 0.0
        %2907 = vmatprep.subr.mxu0 0.0
        %2908 = vmatpush1.msra.mxu0 0.0
        %2909 = vmatprep.subr.mxu0 0.0
        %2910 = vmatpush1.msra.mxu0 0.0
        %2911 = vmatprep.subr.mxu0 0.0
        %2912 = vmatpush1.msra.mxu0 0.0
        %2913 = vmatprep.subr.mxu0 0.0
        %2914 = vmatpush1.msra.mxu0 0.0
        %2915 = vmatprep.subr.mxu0 0.0
        %2916 = vmatpush1.msra.mxu0 0.0
        %2917 = vmatprep.subr.mxu0 0.0
        %2918 = vmatpush1.msra.mxu0 0.0
        %2919 = vmatprep.subr.mxu0 0.0
        %2920 = vmatpush1.msra.mxu0 0.0
        %2921 = vmatprep.subr.mxu0 0.0
        %2922 = vmatpush1.msra.mxu0 0.0
        %2923 = vmatprep.subr.mxu0 0.0
        %2924 = vmatpush1.msra.mxu0 0.0
        %2925 = vmatprep.subr.mxu0 0.0
        %2926 = vmatpush1.msra.mxu0 0.0
        %2927 = vmatprep.subr.mxu0 0.0
        %2928 = vmatpush1.msra.mxu0 0.0
        %2929 = vmatprep.subr.mxu0 0.0
        %2930 = vmatpush1.msra.mxu0 0.0
        %2931 = vmatprep.subr.mxu0 0.0
        %2932 = vmatpush1.msra.mxu0 0.0
        %2933 = vmatprep.subr.mxu0 0.0
        %2934 = vmatpush1.msra.mxu0 0.0
        %2935 = vmatprep.subr.mxu0 0.0
        %2936 = vmatpush1.msra.mxu0 0.0
        %2937 = vmatprep.subr.mxu0 0.0
        %2938 = vmatpush1.msra.mxu0 0.0
        %2939 = vmatprep.subr.mxu0 0.0
        %2940 = vmatpush1.msra.mxu0 0.0
        %2941 = vmatprep.subr.mxu0 0.0
        %2942 = vmatpush1.msra.mxu0 0.0
        %2943 = vmatprep.subr.mxu0 0.0
        %2944 = vmatpush1.msra.mxu0 0.0
        %2945 = vmatprep.subr.mxu0 0.0
        %2946 = vmatpush1.msra.mxu0 0.0
        %2947 = vmatprep.subr.mxu0 0.0
        %2948 = vmatpush1.msra.mxu0 0.0
        %2949 = vmatprep.subr.mxu0 0.0
        %2950 = vmatpush1.msra.mxu0 0.0
        %2951 = vmatprep.subr.mxu0 0.0
        %2952 = vmatpush1.msra.mxu0 0.0
        %2953 = vmatprep.subr.mxu0 0.0
        %2954 = vmatpush1.msra.mxu0 0.0
        %2955 = vmatprep.subr.mxu0 0.0
        %2956 = vmatpush1.msra.mxu0 0.0
        %2957 = vmatprep.subr.mxu0 0.0
        %2958 = vmatpush1.msra.mxu0 0.0
        %2959 = vmatprep.subr.mxu0 0.0
        %2960 = vmatpush1.msra.mxu0 0.0
        %2961 = vmatprep.mubr.f32.mxu0 0.0
        %2962 = vmatmul.mubr.f32.gmra.mrb[0].mxu0 %v2753
        %v2963 = vpop.f32.mrb[0].mxu0
        %v2964 = vadd.f32 0.0, %v2963
        %v2965 = vpop.f32.mrb[0].mxu0
        %v2966 = vadd.f32 0.0, %v2965
        %2967 = vdwg.mxu0
        %2968 = vmatprep.subr.mxu0 %v2169
        %2969 = vmatpush1.msra.mxu0 %v2167
        %2970 = vmatprep.subr.mxu0 0.0
        %2971 = vmatpush1.msra.mxu0 0.0
        %2972 = vmatprep.subr.mxu0 0.0
        %2973 = vmatpush1.msra.mxu0 0.0
        %2974 = vmatprep.subr.mxu0 0.0
        %2975 = vmatpush1.msra.mxu0 0.0
        %2976 = vmatprep.subr.mxu0 0.0
        %2977 = vmatpush1.msra.mxu0 0.0
        %2978 = vmatprep.subr.mxu0 0.0
        %2979 = vmatpush1.msra.mxu0 0.0
        %2980 = vmatprep.subr.mxu0 0.0
        %2981 = vmatpush1.msra.mxu0 0.0
        %2982 = vmatprep.subr.mxu0 0.0
        %2983 = vmatpush1.msra.mxu0 0.0
        %2984 = vmatprep.subr.mxu0 0.0
        %2985 = vmatpush1.msra.mxu0 0.0
        %2986 = vmatprep.subr.mxu0 0.0
        %2987 = vmatpush1.msra.mxu0 0.0
        %2988 = vmatprep.subr.mxu0 0.0
        %2989 = vmatpush1.msra.mxu0 0.0
        %2990 = vmatprep.subr.mxu0 0.0
        %2991 = vmatpush1.msra.mxu0 0.0
        %2992 = vmatprep.subr.mxu0 0.0
        %2993 = vmatpush1.msra.mxu0 0.0
        %2994 = vmatprep.subr.mxu0 0.0
        %2995 = vmatpush1.msra.mxu0 0.0
        %2996 = vmatprep.subr.mxu0 0.0
        %2997 = vmatpush1.msra.mxu0 0.0
        %2998 = vmatprep.subr.mxu0 0.0
        %2999 = vmatpush1.msra.mxu0 0.0
        %3000 = vmatprep.subr.mxu0 0.0
        %3001 = vmatpush1.msra.mxu0 0.0
        %3002 = vmatprep.subr.mxu0 0.0
        %3003 = vmatpush1.msra.mxu0 0.0
        %3004 = vmatprep.subr.mxu0 0.0
        %3005 = vmatpush1.msra.mxu0 0.0
        %3006 = vmatprep.subr.mxu0 0.0
        %3007 = vmatpush1.msra.mxu0 0.0
        %3008 = vmatprep.subr.mxu0 0.0
        %3009 = vmatpush1.msra.mxu0 0.0
        %3010 = vmatprep.subr.mxu0 0.0
        %3011 = vmatpush1.msra.mxu0 0.0
        %3012 = vmatprep.subr.mxu0 0.0
        %3013 = vmatpush1.msra.mxu0 0.0
        %3014 = vmatprep.subr.mxu0 0.0
        %3015 = vmatpush1.msra.mxu0 0.0
        %3016 = vmatprep.subr.mxu0 0.0
        %3017 = vmatpush1.msra.mxu0 0.0
        %3018 = vmatprep.subr.mxu0 0.0
        %3019 = vmatpush1.msra.mxu0 0.0
        %3020 = vmatprep.subr.mxu0 0.0
        %3021 = vmatpush1.msra.mxu0 0.0
        %3022 = vmatprep.subr.mxu0 0.0
        %3023 = vmatpush1.msra.mxu0 0.0
        %3024 = vmatprep.subr.mxu0 0.0
        %3025 = vmatpush1.msra.mxu0 0.0
        %3026 = vmatprep.subr.mxu0 0.0
        %3027 = vmatpush1.msra.mxu0 0.0
        %3028 = vmatprep.subr.mxu0 0.0
        %3029 = vmatpush1.msra.mxu0 0.0
        %3030 = vmatprep.subr.mxu0 0.0
        %3031 = vmatpush1.msra.mxu0 0.0
        %3032 = vmatprep.mubr.f32.mxu0 0.0
        %3033 = vmatmul.mubr.f32.gmra.mrb[0].mxu0 %v2753
        %v3034 = vpop.f32.mrb[0].mxu0
        %v3035 = vadd.f32 0.0, %v3034
        %v3036 = vpop.f32.mrb[0].mxu0
        %v3037 = vadd.f32 0.0, %v3036
        %3038 = vdwg.mxu0
        %v3039 = vmul.f32 %v2455, %v2822
        %v3040 = vmul.f32 %v2456, %v2824
        %v3041 = vmul.f32 %v2457, %v2893
        %v3042 = vmul.f32 %v2458, %v2895
        %v3043 = vmul.f32 %v2459, %v2964
        %v3044 = vmul.f32 %v2460, %v2966
        %v3045 = vmul.f32 %v2461, %v3035
        %v3046 = vmul.f32 %v2462, %v3037
        %3047 = vset.pattern.permute.xlu0 2
        %3048 = vperm.xlu0 %3047, %v507
        %v3049 = vpop.permute.xlu0 %3048
        %v3051 = vmul.f32 %v3039, %v3049
        %v3052 = vmul.f32 %v3040, %v3049
        %v3053 = vmul.f32 %v3041, %v3049
        %v3054 = vmul.f32 %v3042, %v3049
        %v3055 = vmul.f32 %v3043, %v3049
        %v3056 = vmul.f32 %v3044, %v3049
        %v3057 = vmul.f32 %v3045, %v3049
        %v3058 = vmul.f32 %v3046, %v3049
        %3059 = vset.pattern.permute.xlu0 3
        %3060 = vperm.xlu0 %3059, %v507
        %v3061 = vpop.permute.xlu0 %3060
        %v3063 = vadd.f32 %v3051, %v3061
        %v3064 = vadd.f32 %v3052, %v3061
        %v3065 = vadd.f32 %v3053, %v3061
        %v3066 = vadd.f32 %v3054, %v3061
        %v3067 = vadd.f32 %v3055, %v3061
        %v3068 = vadd.f32 %v3056, %v3061
        %v3069 = vadd.f32 %v3057, %v3061
        %v3070 = vadd.f32 %v3058, %v3061
        %3071 = vrot.lane.b32.xlu0 %v499, 17
        %v3072 = vpop.permute.xlu0 %3071
        %3073 = vrot.lane.b32.xlu0 %v500, 17
        %v3074 = vpop.permute.xlu0 %3073
        %3075 = vrot.lane.b32.xlu0 %v501, 17
        %v3076 = vpop.permute.xlu0 %3075
        %3077 = vrot.lane.b32.xlu0 %v502, 17
        %v3078 = vpop.permute.xlu0 %3077
        %3079 = vrot.lane.b32.xlu0 %v503, 17
        %v3080 = vpop.permute.xlu0 %3079
        %3081 = vrot.lane.b32.xlu0 %v504, 17
        %v3082 = vpop.permute.xlu0 %3081
        %3083 = vrot.lane.b32.xlu0 %v505, 17
        %v3084 = vpop.permute.xlu0 %3083
        %3085 = vrot.lane.b32.xlu0 %v506, 17
        %v3086 = vpop.permute.xlu0 %3085
        %v3087 = vlaneseq
        %v3088 = vand.u32 %v3087, 127
        %vm3089 = vcmp.lt.s32.totalorder %v3088, 17
        %v3090 = vsel %vm3089, %v3084, %v3086
        %v3091 = vsel %vm3089, %v3082, %v3084
        %v3092 = vsel %vm3089, %v3080, %v3082
        %v3093 = vsel %vm3089, %v3078, %v3080
        %v3094 = vsel %vm3089, %v3076, %v3078
        %v3095 = vsel %vm3089, %v3074, %v3076
        %v3096 = vsel %vm3089, %v3072, %v3074
        %v3097 = vsel %vm3089, %v3086, %v3072
        %v3098 = vld [vmem:[#allocation13] ss:$8 sm:$0xf]
        %v3099 = vld [vmem:[#allocation13] ss:$8 sm:$0xf0]
        %v3100 = vor.u32 %v3098, %v3099
        %v3102 = vlaneseq
        %v3103 = vshrl.u32 %v3102, 7
        %v3104 = vsub.s32 0, %v3103
        %v3105 = vrot.slane %v3100, %v3104
        %v3106 = vlaneseq
        %v3107 = vshrl.u32 %v3106, 7
        %v3108 = vsub.s32 1, %v3107
        %v3109 = vrot.slane %v3100, %v3108
        %v3110 = vlaneseq
        %v3111 = vshrl.u32 %v3110, 7
        %v3112 = vsub.s32 2, %v3111
        %v3113 = vrot.slane %v3100, %v3112
        %v3114 = vlaneseq
        %v3115 = vshrl.u32 %v3114, 7
        %v3116 = vsub.s32 3, %v3115
        %v3117 = vrot.slane %v3100, %v3116
        %v3118 = vlaneseq
        %v3119 = vshrl.u32 %v3118, 7
        %v3120 = vsub.s32 4, %v3119
        %v3121 = vrot.slane %v3100, %v3120
        %v3122 = vlaneseq
        %v3123 = vshrl.u32 %v3122, 7
        %v3124 = vsub.s32 5, %v3123
        %v3125 = vrot.slane %v3100, %v3124
        %v3126 = vlaneseq
        %v3127 = vshrl.u32 %v3126, 7
        %v3128 = vsub.s32 6, %v3127
        %v3129 = vrot.slane %v3100, %v3128
        %v3130 = vlaneseq
        %v3131 = vshrl.u32 %v3130, 7
        %v3132 = vsub.s32 7, %v3131
        %v3133 = vrot.slane %v3100, %v3132
        %v3142 = vmul.f32 %v3097, %v3105
        %v3143 = vmul.f32 %v3096, %v3109
        %v3144 = vmul.f32 %v3095, %v3113
        %v3145 = vmul.f32 %v3094, %v3117
        %v3146 = vmul.f32 %v3093, %v3121
        %v3147 = vmul.f32 %v3092, %v3125
        %v3148 = vmul.f32 %v3091, %v3129
        %v3149 = vmul.f32 %v3090, %v3133
        %3150 = vrot.lane.b32.xlu0 %v499, 16
        %v3151 = vpop.permute.xlu0 %3150
        %3152 = vrot.lane.b32.xlu0 %v500, 16
        %v3153 = vpop.permute.xlu0 %3152
        %3154 = vrot.lane.b32.xlu0 %v501, 16
        %v3155 = vpop.permute.xlu0 %3154
        %3156 = vrot.lane.b32.xlu0 %v502, 16
        %v3157 = vpop.permute.xlu0 %3156
        %3158 = vrot.lane.b32.xlu0 %v503, 16
        %v3159 = vpop.permute.xlu0 %3158
        %3160 = vrot.lane.b32.xlu0 %v504, 16
        %v3161 = vpop.permute.xlu0 %3160
        %3162 = vrot.lane.b32.xlu0 %v505, 16
        %v3163 = vpop.permute.xlu0 %3162
        %3164 = vrot.lane.b32.xlu0 %v506, 16
        %v3165 = vpop.permute.xlu0 %3164
        %vm3166 = vcmp.lt.s32.totalorder %v3088, 16
        %v3167 = vsel %vm3166, %v3163, %v3165
        %v3168 = vsel %vm3166, %v3161, %v3163
        %v3169 = vsel %vm3166, %v3159, %v3161
        %v3170 = vsel %vm3166, %v3157, %v3159
        %v3171 = vsel %vm3166, %v3155, %v3157
        %v3172 = vsel %vm3166, %v3153, %v3155
        %v3173 = vsel %vm3166, %v3151, %v3153
        %v3174 = vsel %vm3166, %v3165, %v3151
        %s3175 = scalar_lea.vmem [#allocation13], 1
        %v3176 = vld [vmem:[%s3175] ss:$8 sm:$0xf]
        %v3177 = vld [vmem:[%s3175] ss:$8 sm:$0xf0]
        %v3178 = vor.u32 %v3176, %v3177
        %v3180 = vlaneseq
        %v3181 = vshrl.u32 %v3180, 7
        %v3182 = vsub.s32 0, %v3181
        %v3183 = vrot.slane %v3178, %v3182
        %v3184 = vlaneseq
        %v3185 = vshrl.u32 %v3184, 7
        %v3186 = vsub.s32 1, %v3185
        %v3187 = vrot.slane %v3178, %v3186
        %v3188 = vlaneseq
        %v3189 = vshrl.u32 %v3188, 7
        %v3190 = vsub.s32 2, %v3189
        %v3191 = vrot.slane %v3178, %v3190
        %v3192 = vlaneseq
        %v3193 = vshrl.u32 %v3192, 7
        %v3194 = vsub.s32 3, %v3193
        %v3195 = vrot.slane %v3178, %v3194
        %v3196 = vlaneseq
        %v3197 = vshrl.u32 %v3196, 7
        %v3198 = vsub.s32 4, %v3197
        %v3199 = vrot.slane %v3178, %v3198
        %v3200 = vlaneseq
        %v3201 = vshrl.u32 %v3200, 7
        %v3202 = vsub.s32 5, %v3201
        %v3203 = vrot.slane %v3178, %v3202
        %v3204 = vlaneseq
        %v3205 = vshrl.u32 %v3204, 7
        %v3206 = vsub.s32 6, %v3205
        %v3207 = vrot.slane %v3178, %v3206
        %v3208 = vlaneseq
        %v3209 = vshrl.u32 %v3208, 7
        %v3210 = vsub.s32 7, %v3209
        %v3211 = vrot.slane %v3178, %v3210
        %v3220 = vmul.f32 %v3174, %v3183
        %v3221 = vmul.f32 %v3173, %v3187
        %v3222 = vmul.f32 %v3172, %v3191
        %v3223 = vmul.f32 %v3171, %v3195
        %v3224 = vmul.f32 %v3170, %v3199
        %v3225 = vmul.f32 %v3169, %v3203
        %v3226 = vmul.f32 %v3168, %v3207
        %v3227 = vmul.f32 %v3167, %v3211
        %3228 = vrot.lane.b32.xlu0 %v499, 15
        %v3229 = vpop.permute.xlu0 %3228
        %3230 = vrot.lane.b32.xlu0 %v500, 15
        %v3231 = vpop.permute.xlu0 %3230
        %3232 = vrot.lane.b32.xlu0 %v501, 15
        %v3233 = vpop.permute.xlu0 %3232
        %3234 = vrot.lane.b32.xlu0 %v502, 15
        %v3235 = vpop.permute.xlu0 %3234
        %3236 = vrot.lane.b32.xlu0 %v503, 15
        %v3237 = vpop.permute.xlu0 %3236
        %3238 = vrot.lane.b32.xlu0 %v504, 15
        %v3239 = vpop.permute.xlu0 %3238
        %3240 = vrot.lane.b32.xlu0 %v505, 15
        %v3241 = vpop.permute.xlu0 %3240
        %3242 = vrot.lane.b32.xlu0 %v506, 15
        %v3243 = vpop.permute.xlu0 %3242
        %vm3244 = vcmp.lt.s32.totalorder %v3088, 15
        %v3245 = vsel %vm3244, %v3241, %v3243
        %v3246 = vsel %vm3244, %v3239, %v3241
        %v3247 = vsel %vm3244, %v3237, %v3239
        %v3248 = vsel %vm3244, %v3235, %v3237
        %v3249 = vsel %vm3244, %v3233, %v3235
        %v3250 = vsel %vm3244, %v3231, %v3233
        %v3251 = vsel %vm3244, %v3229, %v3231
        %v3252 = vsel %vm3244, %v3243, %v3229
        %s3253 = scalar_lea.vmem [#allocation13], 2
        %v3254 = vld [vmem:[%s3253] ss:$8 sm:$0xf]
        %v3255 = vld [vmem:[%s3253] ss:$8 sm:$0xf0]
        %v3256 = vor.u32 %v3254, %v3255
        %v3258 = vlaneseq
        %v3259 = vshrl.u32 %v3258, 7
        %v3260 = vsub.s32 0, %v3259
        %v3261 = vrot.slane %v3256, %v3260
        %v3262 = vlaneseq
        %v3263 = vshrl.u32 %v3262, 7
        %v3264 = vsub.s32 1, %v3263
        %v3265 = vrot.slane %v3256, %v3264
        %v3266 = vlaneseq
        %v3267 = vshrl.u32 %v3266, 7
        %v3268 = vsub.s32 2, %v3267
        %v3269 = vrot.slane %v3256, %v3268
        %v3270 = vlaneseq
        %v3271 = vshrl.u32 %v3270, 7
        %v3272 = vsub.s32 3, %v3271
        %v3273 = vrot.slane %v3256, %v3272
        %v3274 = vlaneseq
        %v3275 = vshrl.u32 %v3274, 7
        %v3276 = vsub.s32 4, %v3275
        %v3277 = vrot.slane %v3256, %v3276
        %v3278 = vlaneseq
        %v3279 = vshrl.u32 %v3278, 7
        %v3280 = vsub.s32 5, %v3279
        %v3281 = vrot.slane %v3256, %v3280
        %v3282 = vlaneseq
        %v3283 = vshrl.u32 %v3282, 7
        %v3284 = vsub.s32 6, %v3283
        %v3285 = vrot.slane %v3256, %v3284
        %v3286 = vlaneseq
        %v3287 = vshrl.u32 %v3286, 7
        %v3288 = vsub.s32 7, %v3287
        %v3289 = vrot.slane %v3256, %v3288
        %v3298 = vmul.f32 %v3252, %v3261
        %v3299 = vmul.f32 %v3251, %v3265
        %v3300 = vmul.f32 %v3250, %v3269
        %v3301 = vmul.f32 %v3249, %v3273
        %v3302 = vmul.f32 %v3248, %v3277
        %v3303 = vmul.f32 %v3247, %v3281
        %v3304 = vmul.f32 %v3246, %v3285
        %v3305 = vmul.f32 %v3245, %v3289
        %3306 = vrot.lane.b32.xlu0 %v499, 1
        %v3307 = vpop.permute.xlu0 %3306
        %3308 = vrot.lane.b32.xlu0 %v500, 1
        %v3309 = vpop.permute.xlu0 %3308
        %3310 = vrot.lane.b32.xlu0 %v501, 1
        %v3311 = vpop.permute.xlu0 %3310
        %3312 = vrot.lane.b32.xlu0 %v502, 1
        %v3313 = vpop.permute.xlu0 %3312
        %3314 = vrot.lane.b32.xlu0 %v503, 1
        %v3315 = vpop.permute.xlu0 %3314
        %3316 = vrot.lane.b32.xlu0 %v504, 1
        %v3317 = vpop.permute.xlu0 %3316
        %3318 = vrot.lane.b32.xlu0 %v505, 1
        %v3319 = vpop.permute.xlu0 %3318
        %3320 = vrot.lane.b32.xlu0 %v506, 1
        %v3321 = vpop.permute.xlu0 %3320
        %vm3322 = vcmp.lt.s32.totalorder %v3088, 1
        %v3323 = vsel %vm3322, %v3319, %v3321
        %v3324 = vsel %vm3322, %v3317, %v3319
        %v3325 = vsel %vm3322, %v3315, %v3317
        %v3326 = vsel %vm3322, %v3313, %v3315
        %v3327 = vsel %vm3322, %v3311, %v3313
        %v3328 = vsel %vm3322, %v3309, %v3311
        %v3329 = vsel %vm3322, %v3307, %v3309
        %v3330 = vsel %vm3322, %v3321, %v3307
        %s3331 = scalar_lea.vmem [#allocation13], 3
        %v3332 = vld [vmem:[%s3331] ss:$8 sm:$0xf]
        %v3333 = vld [vmem:[%s3331] ss:$8 sm:$0xf0]
        %v3334 = vor.u32 %v3332, %v3333
        %v3336 = vlaneseq
        %v3337 = vshrl.u32 %v3336, 7
        %v3338 = vsub.s32 0, %v3337
        %v3339 = vrot.slane %v3334, %v3338
        %v3340 = vlaneseq
        %v3341 = vshrl.u32 %v3340, 7
        %v3342 = vsub.s32 1, %v3341
        %v3343 = vrot.slane %v3334, %v3342
        %v3344 = vlaneseq
        %v3345 = vshrl.u32 %v3344, 7
        %v3346 = vsub.s32 2, %v3345
        %v3347 = vrot.slane %v3334, %v3346
        %v3348 = vlaneseq
        %v3349 = vshrl.u32 %v3348, 7
        %v3350 = vsub.s32 3, %v3349
        %v3351 = vrot.slane %v3334, %v3350
        %v3352 = vlaneseq
        %v3353 = vshrl.u32 %v3352, 7
        %v3354 = vsub.s32 4, %v3353
        %v3355 = vrot.slane %v3334, %v3354
        %v3356 = vlaneseq
        %v3357 = vshrl.u32 %v3356, 7
        %v3358 = vsub.s32 5, %v3357
        %v3359 = vrot.slane %v3334, %v3358
        %v3360 = vlaneseq
        %v3361 = vshrl.u32 %v3360, 7
        %v3362 = vsub.s32 6, %v3361
        %v3363 = vrot.slane %v3334, %v3362
        %v3364 = vlaneseq
        %v3365 = vshrl.u32 %v3364, 7
        %v3366 = vsub.s32 7, %v3365
        %v3367 = vrot.slane %v3334, %v3366
        %v3376 = vmul.f32 %v3330, %v3339
        %v3377 = vmul.f32 %v3329, %v3343
        %v3378 = vmul.f32 %v3328, %v3347
        %v3379 = vmul.f32 %v3327, %v3351
        %v3380 = vmul.f32 %v3326, %v3355
        %v3381 = vmul.f32 %v3325, %v3359
        %v3382 = vmul.f32 %v3324, %v3363
        %v3383 = vmul.f32 %v3323, %v3367
        %s3384 = scalar_lea.vmem [#allocation13], 4
        %v3385 = vld [vmem:[%s3384] ss:$8 sm:$0xf]
        %v3386 = vld [vmem:[%s3384] ss:$8 sm:$0xf0]
        %v3387 = vor.u32 %v3385, %v3386
        %v3389 = vlaneseq
        %v3390 = vshrl.u32 %v3389, 7
        %v3391 = vsub.s32 0, %v3390
        %v3392 = vrot.slane %v3387, %v3391
        %v3393 = vlaneseq
        %v3394 = vshrl.u32 %v3393, 7
        %v3395 = vsub.s32 1, %v3394
        %v3396 = vrot.slane %v3387, %v3395
        %v3397 = vlaneseq
        %v3398 = vshrl.u32 %v3397, 7
        %v3399 = vsub.s32 2, %v3398
        %v3400 = vrot.slane %v3387, %v3399
        %v3401 = vlaneseq
        %v3402 = vshrl.u32 %v3401, 7
        %v3403 = vsub.s32 3, %v3402
        %v3404 = vrot.slane %v3387, %v3403
        %v3405 = vlaneseq
        %v3406 = vshrl.u32 %v3405, 7
        %v3407 = vsub.s32 4, %v3406
        %v3408 = vrot.slane %v3387, %v3407
        %v3409 = vlaneseq
        %v3410 = vshrl.u32 %v3409, 7
        %v3411 = vsub.s32 5, %v3410
        %v3412 = vrot.slane %v3387, %v3411
        %v3413 = vlaneseq
        %v3414 = vshrl.u32 %v3413, 7
        %v3415 = vsub.s32 6, %v3414
        %v3416 = vrot.slane %v3387, %v3415
        %v3417 = vlaneseq
        %v3418 = vshrl.u32 %v3417, 7
        %v3419 = vsub.s32 7, %v3418
        %v3420 = vrot.slane %v3387, %v3419
        %v3429 = vmul.f32 %v499, %v3392
        %v3430 = vmul.f32 %v500, %v3396
        %v3431 = vmul.f32 %v501, %v3400
        %v3432 = vmul.f32 %v502, %v3404
        %v3433 = vmul.f32 %v503, %v3408
        %v3434 = vmul.f32 %v504, %v3412
        %v3435 = vmul.f32 %v505, %v3416
        %v3436 = vmul.f32 %v506, %v3420
        %3437 = vrot.lane.b32.xlu0 %v499, 127
        %v3438 = vpop.permute.xlu0 %3437
        %3439 = vrot.lane.b32.xlu0 %v500, 127
        %v3440 = vpop.permute.xlu0 %3439
        %3441 = vrot.lane.b32.xlu0 %v501, 127
        %v3442 = vpop.permute.xlu0 %3441
        %3443 = vrot.lane.b32.xlu0 %v502, 127
        %v3444 = vpop.permute.xlu0 %3443
        %3445 = vrot.lane.b32.xlu0 %v503, 127
        %v3446 = vpop.permute.xlu0 %3445
        %3447 = vrot.lane.b32.xlu0 %v504, 127
        %v3448 = vpop.permute.xlu0 %3447
        %3449 = vrot.lane.b32.xlu0 %v505, 127
        %v3450 = vpop.permute.xlu0 %3449
        %3451 = vrot.lane.b32.xlu0 %v506, 127
        %v3452 = vpop.permute.xlu0 %3451
        %vm3453 = vcmp.lt.s32.totalorder %v3088, 127
        %v3454 = vsel %vm3453, %v3450, %v3452
        %v3455 = vsel %vm3453, %v3448, %v3450
        %v3456 = vsel %vm3453, %v3446, %v3448
        %v3457 = vsel %vm3453, %v3444, %v3446
        %v3458 = vsel %vm3453, %v3442, %v3444
        %v3459 = vsel %vm3453, %v3440, %v3442
        %v3460 = vsel %vm3453, %v3438, %v3440
        %v3461 = vsel %vm3453, %v3452, %v3438
        %s3462 = scalar_lea.vmem [#allocation13], 5
        %v3463 = vld [vmem:[%s3462] ss:$8 sm:$0xf]
        %v3464 = vld [vmem:[%s3462] ss:$8 sm:$0xf0]
        %v3465 = vor.u32 %v3463, %v3464
        %v3467 = vlaneseq
        %v3468 = vshrl.u32 %v3467, 7
        %v3469 = vsub.s32 0, %v3468
        %v3470 = vrot.slane %v3465, %v3469
        %v3471 = vlaneseq
        %v3472 = vshrl.u32 %v3471, 7
        %v3473 = vsub.s32 1, %v3472
        %v3474 = vrot.slane %v3465, %v3473
        %v3475 = vlaneseq
        %v3476 = vshrl.u32 %v3475, 7
        %v3477 = vsub.s32 2, %v3476
        %v3478 = vrot.slane %v3465, %v3477
        %v3479 = vlaneseq
        %v3480 = vshrl.u32 %v3479, 7
        %v3481 = vsub.s32 3, %v3480
        %v3482 = vrot.slane %v3465, %v3481
        %v3483 = vlaneseq
        %v3484 = vshrl.u32 %v3483, 7
        %v3485 = vsub.s32 4, %v3484
        %v3486 = vrot.slane %v3465, %v3485
        %v3487 = vlaneseq
        %v3488 = vshrl.u32 %v3487, 7
        %v3489 = vsub.s32 5, %v3488
        %v3490 = vrot.slane %v3465, %v3489
        %v3491 = vlaneseq
        %v3492 = vshrl.u32 %v3491, 7
        %v3493 = vsub.s32 6, %v3492
        %v3494 = vrot.slane %v3465, %v3493
        %v3495 = vlaneseq
        %v3496 = vshrl.u32 %v3495, 7
        %v3497 = vsub.s32 7, %v3496
        %v3498 = vrot.slane %v3465, %v3497
        %v3507 = vmul.f32 %v3460, %v3470
        %v3508 = vmul.f32 %v3459, %v3474
        %v3509 = vmul.f32 %v3458, %v3478
        %v3510 = vmul.f32 %v3457, %v3482
        %v3511 = vmul.f32 %v3456, %v3486
        %v3512 = vmul.f32 %v3455, %v3490
        %v3513 = vmul.f32 %v3454, %v3494
        %v3514 = vmul.f32 %v3461, %v3498
        %3515 = vrot.lane.b32.xlu0 %v499, 113
        %v3516 = vpop.permute.xlu0 %3515
        %3517 = vrot.lane.b32.xlu0 %v500, 113
        %v3518 = vpop.permute.xlu0 %3517
        %3519 = vrot.lane.b32.xlu0 %v501, 113
        %v3520 = vpop.permute.xlu0 %3519
        %3521 = vrot.lane.b32.xlu0 %v502, 113
        %v3522 = vpop.permute.xlu0 %3521
        %3523 = vrot.lane.b32.xlu0 %v503, 113
        %v3524 = vpop.permute.xlu0 %3523
        %3525 = vrot.lane.b32.xlu0 %v504, 113
        %v3526 = vpop.permute.xlu0 %3525
        %3527 = vrot.lane.b32.xlu0 %v505, 113
        %v3528 = vpop.permute.xlu0 %3527
        %3529 = vrot.lane.b32.xlu0 %v506, 113
        %v3530 = vpop.permute.xlu0 %3529
        %vm3531 = vcmp.lt.s32.totalorder %v3088, 113
        %v3532 = vsel %vm3531, %v3528, %v3530
        %v3533 = vsel %vm3531, %v3526, %v3528
        %v3534 = vsel %vm3531, %v3524, %v3526
        %v3535 = vsel %vm3531, %v3522, %v3524
        %v3536 = vsel %vm3531, %v3520, %v3522
        %v3537 = vsel %vm3531, %v3518, %v3520
        %v3538 = vsel %vm3531, %v3516, %v3518
        %v3539 = vsel %vm3531, %v3530, %v3516
        %s3540 = scalar_lea.vmem [#allocation13], 6
        %v3541 = vld [vmem:[%s3540] ss:$8 sm:$0xf]
        %v3542 = vld [vmem:[%s3540] ss:$8 sm:$0xf0]
        %v3543 = vor.u32 %v3541, %v3542
        %v3545 = vlaneseq
        %v3546 = vshrl.u32 %v3545, 7
        %v3547 = vsub.s32 0, %v3546
        %v3548 = vrot.slane %v3543, %v3547
        %v3549 = vlaneseq
        %v3550 = vshrl.u32 %v3549, 7
        %v3551 = vsub.s32 1, %v3550
        %v3552 = vrot.slane %v3543, %v3551
        %v3553 = vlaneseq
        %v3554 = vshrl.u32 %v3553, 7
        %v3555 = vsub.s32 2, %v3554
        %v3556 = vrot.slane %v3543, %v3555
        %v3557 = vlaneseq
        %v3558 = vshrl.u32 %v3557, 7
        %v3559 = vsub.s32 3, %v3558
        %v3560 = vrot.slane %v3543, %v3559
        %v3561 = vlaneseq
        %v3562 = vshrl.u32 %v3561, 7
        %v3563 = vsub.s32 4, %v3562
        %v3564 = vrot.slane %v3543, %v3563
        %v3565 = vlaneseq
        %v3566 = vshrl.u32 %v3565, 7
        %v3567 = vsub.s32 5, %v3566
        %v3568 = vrot.slane %v3543, %v3567
        %v3569 = vlaneseq
        %v3570 = vshrl.u32 %v3569, 7
        %v3571 = vsub.s32 6, %v3570
        %v3572 = vrot.slane %v3543, %v3571
        %v3573 = vlaneseq
        %v3574 = vshrl.u32 %v3573, 7
        %v3575 = vsub.s32 7, %v3574
        %v3576 = vrot.slane %v3543, %v3575
        %v3585 = vmul.f32 %v3538, %v3548
        %v3586 = vmul.f32 %v3537, %v3552
        %v3587 = vmul.f32 %v3536, %v3556
        %v3588 = vmul.f32 %v3535, %v3560
        %v3589 = vmul.f32 %v3534, %v3564
        %v3590 = vmul.f32 %v3533, %v3568
        %v3591 = vmul.f32 %v3532, %v3572
        %v3592 = vmul.f32 %v3539, %v3576
        %3593 = vrot.lane.b32.xlu0 %v499, 112
        %v3594 = vpop.permute.xlu0 %3593
        %3595 = vrot.lane.b32.xlu0 %v500, 112
        %v3596 = vpop.permute.xlu0 %3595
        %3597 = vrot.lane.b32.xlu0 %v501, 112
        %v3598 = vpop.permute.xlu0 %3597
        %3599 = vrot.lane.b32.xlu0 %v502, 112
        %v3600 = vpop.permute.xlu0 %3599
        %3601 = vrot.lane.b32.xlu0 %v503, 112
        %v3602 = vpop.permute.xlu0 %3601
        %3603 = vrot.lane.b32.xlu0 %v504, 112
        %v3604 = vpop.permute.xlu0 %3603
        %3605 = vrot.lane.b32.xlu0 %v505, 112
        %v3606 = vpop.permute.xlu0 %3605
        %3607 = vrot.lane.b32.xlu0 %v506, 112
        %v3608 = vpop.permute.xlu0 %3607
        %vm3609 = vcmp.lt.s32.totalorder %v3088, 112
        %v3610 = vsel %vm3609, %v3606, %v3608
        %v3611 = vsel %vm3609, %v3604, %v3606
        %v3612 = vsel %vm3609, %v3602, %v3604
        %v3613 = vsel %vm3609, %v3600, %v3602
        %v3614 = vsel %vm3609, %v3598, %v3600
        %v3615 = vsel %vm3609, %v3596, %v3598
        %v3616 = vsel %vm3609, %v3594, %v3596
        %v3617 = vsel %vm3609, %v3608, %v3594
        %s3618 = scalar_lea.vmem [#allocation13], 7
        %v3619 = vld [vmem:[%s3618] ss:$8 sm:$0xf]
        %v3620 = vld [vmem:[%s3618] ss:$8 sm:$0xf0]
        %v3621 = vor.u32 %v3619, %v3620
        %v3623 = vlaneseq
        %v3624 = vshrl.u32 %v3623, 7
        %v3625 = vsub.s32 0, %v3624
        %v3626 = vrot.slane %v3621, %v3625
        %v3627 = vlaneseq
        %v3628 = vshrl.u32 %v3627, 7
        %v3629 = vsub.s32 1, %v3628
        %v3630 = vrot.slane %v3621, %v3629
        %v3631 = vlaneseq
        %v3632 = vshrl.u32 %v3631, 7
        %v3633 = vsub.s32 2, %v3632
        %v3634 = vrot.slane %v3621, %v3633
        %v3635 = vlaneseq
        %v3636 = vshrl.u32 %v3635, 7
        %v3637 = vsub.s32 3, %v3636
        %v3638 = vrot.slane %v3621, %v3637
        %v3639 = vlaneseq
        %v3640 = vshrl.u32 %v3639, 7
        %v3641 = vsub.s32 4, %v3640
        %v3642 = vrot.slane %v3621, %v3641
        %v3643 = vlaneseq
        %v3644 = vshrl.u32 %v3643, 7
        %v3645 = vsub.s32 5, %v3644
        %v3646 = vrot.slane %v3621, %v3645
        %v3647 = vlaneseq
        %v3648 = vshrl.u32 %v3647, 7
        %v3649 = vsub.s32 6, %v3648
        %v3650 = vrot.slane %v3621, %v3649
        %v3651 = vlaneseq
        %v3652 = vshrl.u32 %v3651, 7
        %v3653 = vsub.s32 7, %v3652
        %v3654 = vrot.slane %v3621, %v3653
        %v3663 = vmul.f32 %v3616, %v3626
        %v3664 = vmul.f32 %v3615, %v3630
        %v3665 = vmul.f32 %v3614, %v3634
        %v3666 = vmul.f32 %v3613, %v3638
        %v3667 = vmul.f32 %v3612, %v3642
        %v3668 = vmul.f32 %v3611, %v3646
        %v3669 = vmul.f32 %v3610, %v3650
        %v3670 = vmul.f32 %v3617, %v3654
        %3671 = vrot.lane.b32.xlu0 %v499, 111
        %v3672 = vpop.permute.xlu0 %3671
        %3673 = vrot.lane.b32.xlu0 %v500, 111
        %v3674 = vpop.permute.xlu0 %3673
        %3675 = vrot.lane.b32.xlu0 %v501, 111
        %v3676 = vpop.permute.xlu0 %3675
        %3677 = vrot.lane.b32.xlu0 %v502, 111
        %v3678 = vpop.permute.xlu0 %3677
        %3679 = vrot.lane.b32.xlu0 %v503, 111
        %v3680 = vpop.permute.xlu0 %3679
        %3681 = vrot.lane.b32.xlu0 %v504, 111
        %v3682 = vpop.permute.xlu0 %3681
        %3683 = vrot.lane.b32.xlu0 %v505, 111
        %v3684 = vpop.permute.xlu0 %3683
        %3685 = vrot.lane.b32.xlu0 %v506, 111
        %v3686 = vpop.permute.xlu0 %3685
        %vm3687 = vcmp.lt.s32.totalorder %v3088, 111
        %v3688 = vsel %vm3687, %v3684, %v3686
        %v3689 = vsel %vm3687, %v3682, %v3684
        %v3690 = vsel %vm3687, %v3680, %v3682
        %v3691 = vsel %vm3687, %v3678, %v3680
        %v3692 = vsel %vm3687, %v3676, %v3678
        %v3693 = vsel %vm3687, %v3674, %v3676
        %v3694 = vsel %vm3687, %v3672, %v3674
        %v3695 = vsel %vm3687, %v3686, %v3672
        %s3696 = scalar_lea.vmem [#allocation13], 64
        %v3697 = vld [vmem:[%s3696] ss:$8 sm:$0xf]
        %v3698 = vld [vmem:[%s3696] ss:$8 sm:$0xf0]
        %v3699 = vor.u32 %v3697, %v3698
        %v3701 = vlaneseq
        %v3702 = vshrl.u32 %v3701, 7
        %v3703 = vsub.s32 0, %v3702
        %v3704 = vrot.slane %v3699, %v3703
        %v3705 = vlaneseq
        %v3706 = vshrl.u32 %v3705, 7
        %v3707 = vsub.s32 1, %v3706
        %v3708 = vrot.slane %v3699, %v3707
        %v3709 = vlaneseq
        %v3710 = vshrl.u32 %v3709, 7
        %v3711 = vsub.s32 2, %v3710
        %v3712 = vrot.slane %v3699, %v3711
        %v3713 = vlaneseq
        %v3714 = vshrl.u32 %v3713, 7
        %v3715 = vsub.s32 3, %v3714
        %v3716 = vrot.slane %v3699, %v3715
        %v3717 = vlaneseq
        %v3718 = vshrl.u32 %v3717, 7
        %v3719 = vsub.s32 4, %v3718
        %v3720 = vrot.slane %v3699, %v3719
        %v3721 = vlaneseq
        %v3722 = vshrl.u32 %v3721, 7
        %v3723 = vsub.s32 5, %v3722
        %v3724 = vrot.slane %v3699, %v3723
        %v3725 = vlaneseq
        %v3726 = vshrl.u32 %v3725, 7
        %v3727 = vsub.s32 6, %v3726
        %v3728 = vrot.slane %v3699, %v3727
        %v3729 = vlaneseq
        %v3730 = vshrl.u32 %v3729, 7
        %v3731 = vsub.s32 7, %v3730
        %v3732 = vrot.slane %v3699, %v3731
        %v3741 = vmul.f32 %v3694, %v3704
        %v3742 = vmul.f32 %v3693, %v3708
        %v3743 = vmul.f32 %v3692, %v3712
        %v3744 = vmul.f32 %v3691, %v3716
        %v3745 = vmul.f32 %v3690, %v3720
        %v3746 = vmul.f32 %v3689, %v3724
        %v3747 = vmul.f32 %v3688, %v3728
        %v3748 = vmul.f32 %v3695, %v3732
        %v3749 = vld [vmem:[#allocation16] sm:$0xff]
        %3750 = vset.pattern.permute.xlu0 1
        %3751 = vperm.xlu0 %3750, %v507
        %v3752 = vpop.permute.xlu0 %3751
        %vm3754 = vcmask 588800
        %v3756 = vsel %vm3754, %v3749, 0
        %3758 = vmatprep.subr.mxu0 %v3143
        %3759 = vmatpush1.msra.mxu0 %v3142
        %3760 = vmatprep.subr.mxu0 %v3221
        %3761 = vmatpush1.msra.mxu0 %v3220
        %3762 = vmatprep.subr.mxu0 %v3299
        %3763 = vmatpush1.msra.mxu0 %v3298
        %3764 = vmatprep.subr.mxu0 %v3377
        %3765 = vmatpush1.msra.mxu0 %v3376
        %3766 = vmatprep.subr.mxu0 %v3430
        %3767 = vmatpush1.msra.mxu0 %v3429
        %3768 = vmatprep.subr.mxu0 %v3508
        %3769 = vmatpush1.msra.mxu0 %v3507
        %3770 = vmatprep.subr.mxu0 %v3586
        %3771 = vmatpush1.msra.mxu0 %v3585
        %3772 = vmatprep.subr.mxu0 %v3664
        %3773 = vmatpush1.msra.mxu0 %v3663
        %3774 = vmatprep.subr.mxu0 %v3742
        %3775 = vmatpush1.msra.mxu0 %v3741
        %3776 = vmatprep.subr.mxu0 0.0
        %3777 = vmatpush1.msra.mxu0 0.0
        %3778 = vmatprep.subr.mxu0 0.0
        %3779 = vmatpush1.msra.mxu0 0.0
        %3780 = vmatprep.subr.mxu0 0.0
        %3781 = vmatpush1.msra.mxu0 0.0
        %3782 = vmatprep.subr.mxu0 0.0
        %3783 = vmatpush1.msra.mxu0 0.0
        %3784 = vmatprep.subr.mxu0 0.0
        %3785 = vmatpush1.msra.mxu0 0.0
        %3786 = vmatprep.subr.mxu0 0.0
        %3787 = vmatpush1.msra.mxu0 0.0
        %3788 = vmatprep.subr.mxu0 0.0
        %3789 = vmatpush1.msra.mxu0 0.0
        %3790 = vmatprep.subr.mxu0 0.0
        %3791 = vmatpush1.msra.mxu0 0.0
        %3792 = vmatprep.subr.mxu0 0.0
        %3793 = vmatpush1.msra.mxu0 0.0
        %3794 = vmatprep.subr.mxu0 0.0
        %3795 = vmatpush1.msra.mxu0 0.0
        %3796 = vmatprep.subr.mxu0 0.0
        %3797 = vmatpush1.msra.mxu0 0.0
        %3798 = vmatprep.subr.mxu0 0.0
        %3799 = vmatpush1.msra.mxu0 0.0
        %3800 = vmatprep.subr.mxu0 0.0
        %3801 = vmatpush1.msra.mxu0 0.0
        %3802 = vmatprep.subr.mxu0 0.0
        %3803 = vmatpush1.msra.mxu0 0.0
        %3804 = vmatprep.subr.mxu0 0.0
        %3805 = vmatpush1.msra.mxu0 0.0
        %3806 = vmatprep.subr.mxu0 0.0
        %3807 = vmatpush1.msra.mxu0 0.0
        %3808 = vmatprep.subr.mxu0 0.0
        %3809 = vmatpush1.msra.mxu0 0.0
        %3810 = vmatprep.subr.mxu0 0.0
        %3811 = vmatpush1.msra.mxu0 0.0
        %3812 = vmatprep.subr.mxu0 0.0
        %3813 = vmatpush1.msra.mxu0 0.0
        %3814 = vmatprep.subr.mxu0 0.0
        %3815 = vmatpush1.msra.mxu0 0.0
        %3816 = vmatprep.subr.mxu0 0.0
        %3817 = vmatpush1.msra.mxu0 0.0
        %3818 = vmatprep.subr.mxu0 0.0
        %3819 = vmatpush1.msra.mxu0 0.0
        %3820 = vmatprep.subr.mxu0 0.0
        %3821 = vmatpush1.msra.mxu0 0.0
        %3822 = vmatprep.mubr.f32.mxu0 0.0
        %3823 = vmatmul.mubr.f32.gmra.mrb[0].mxu0 %v3756
        %v3824 = vpop.f32.mrb[0].mxu0
        %v3825 = vadd.f32 %v3752, %v3824
        %v3826 = vpop.f32.mrb[0].mxu0
        %v3827 = vadd.f32 %v3752, %v3826
        %3828 = vdwg.mxu0
        %3829 = vmatprep.subr.mxu0 %v3145
        %3830 = vmatpush1.msra.mxu0 %v3144
        %3831 = vmatprep.subr.mxu0 %v3223
        %3832 = vmatpush1.msra.mxu0 %v3222
        %3833 = vmatprep.subr.mxu0 %v3301
        %3834 = vmatpush1.msra.mxu0 %v3300
        %3835 = vmatprep.subr.mxu0 %v3379
        %3836 = vmatpush1.msra.mxu0 %v3378
        %3837 = vmatprep.subr.mxu0 %v3432
        %3838 = vmatpush1.msra.mxu0 %v3431
        %3839 = vmatprep.subr.mxu0 %v3510
        %3840 = vmatpush1.msra.mxu0 %v3509
        %3841 = vmatprep.subr.mxu0 %v3588
        %3842 = vmatpush1.msra.mxu0 %v3587
        %3843 = vmatprep.subr.mxu0 %v3666
        %3844 = vmatpush1.msra.mxu0 %v3665
        %3845 = vmatprep.subr.mxu0 %v3744
        %3846 = vmatpush1.msra.mxu0 %v3743
        %3847 = vmatprep.subr.mxu0 0.0
        %3848 = vmatpush1.msra.mxu0 0.0
        %3849 = vmatprep.subr.mxu0 0.0
        %3850 = vmatpush1.msra.mxu0 0.0
        %3851 = vmatprep.subr.mxu0 0.0
        %3852 = vmatpush1.msra.mxu0 0.0
        %3853 = vmatprep.subr.mxu0 0.0
        %3854 = vmatpush1.msra.mxu0 0.0
        %3855 = vmatprep.subr.mxu0 0.0
        %3856 = vmatpush1.msra.mxu0 0.0
        %3857 = vmatprep.subr.mxu0 0.0
        %3858 = vmatpush1.msra.mxu0 0.0
        %3859 = vmatprep.subr.mxu0 0.0
        %3860 = vmatpush1.msra.mxu0 0.0
        %3861 = vmatprep.subr.mxu0 0.0
        %3862 = vmatpush1.msra.mxu0 0.0
        %3863 = vmatprep.subr.mxu0 0.0
        %3864 = vmatpush1.msra.mxu0 0.0
        %3865 = vmatprep.subr.mxu0 0.0
        %3866 = vmatpush1.msra.mxu0 0.0
        %3867 = vmatprep.subr.mxu0 0.0
        %3868 = vmatpush1.msra.mxu0 0.0
        %3869 = vmatprep.subr.mxu0 0.0
        %3870 = vmatpush1.msra.mxu0 0.0
        %3871 = vmatprep.subr.mxu0 0.0
        %3872 = vmatpush1.msra.mxu0 0.0
        %3873 = vmatprep.subr.mxu0 0.0
        %3874 = vmatpush1.msra.mxu0 0.0
        %3875 = vmatprep.subr.mxu0 0.0
        %3876 = vmatpush1.msra.mxu0 0.0
        %3877 = vmatprep.subr.mxu0 0.0
        %3878 = vmatpush1.msra.mxu0 0.0
        %3879 = vmatprep.subr.mxu0 0.0
        %3880 = vmatpush1.msra.mxu0 0.0
        %3881 = vmatprep.subr.mxu0 0.0
        %3882 = vmatpush1.msra.mxu0 0.0
        %3883 = vmatprep.subr.mxu0 0.0
        %3884 = vmatpush1.msra.mxu0 0.0
        %3885 = vmatprep.subr.mxu0 0.0
        %3886 = vmatpush1.msra.mxu0 0.0
        %3887 = vmatprep.subr.mxu0 0.0
        %3888 = vmatpush1.msra.mxu0 0.0
        %3889 = vmatprep.subr.mxu0 0.0
        %3890 = vmatpush1.msra.mxu0 0.0
        %3891 = vmatprep.subr.mxu0 0.0
        %3892 = vmatpush1.msra.mxu0 0.0
        %3893 = vmatprep.mubr.f32.mxu0 0.0
        %3894 = vmatmul.mubr.f32.gmra.mrb[0].mxu0 %v3756
        %v3895 = vpop.f32.mrb[0].mxu0
        %v3896 = vadd.f32 %v3752, %v3895
        %v3897 = vpop.f32.mrb[0].mxu0
        %v3898 = vadd.f32 %v3752, %v3897
        %3899 = vdwg.mxu0
        %3900 = vmatprep.subr.mxu0 %v3147
        %3901 = vmatpush1.msra.mxu0 %v3146
        %3902 = vmatprep.subr.mxu0 %v3225
        %3903 = vmatpush1.msra.mxu0 %v3224
        %3904 = vmatprep.subr.mxu0 %v3303
        %3905 = vmatpush1.msra.mxu0 %v3302
        %3906 = vmatprep.subr.mxu0 %v3381
        %3907 = vmatpush1.msra.mxu0 %v3380
        %3908 = vmatprep.subr.mxu0 %v3434
        %3909 = vmatpush1.msra.mxu0 %v3433
        %3910 = vmatprep.subr.mxu0 %v3512
        %3911 = vmatpush1.msra.mxu0 %v3511
        %3912 = vmatprep.subr.mxu0 %v3590
        %3913 = vmatpush1.msra.mxu0 %v3589
        %3914 = vmatprep.subr.mxu0 %v3668
        %3915 = vmatpush1.msra.mxu0 %v3667
        %3916 = vmatprep.subr.mxu0 %v3746
        %3917 = vmatpush1.msra.mxu0 %v3745
        %3918 = vmatprep.subr.mxu0 0.0
        %3919 = vmatpush1.msra.mxu0 0.0
        %3920 = vmatprep.subr.mxu0 0.0
        %3921 = vmatpush1.msra.mxu0 0.0
        %3922 = vmatprep.subr.mxu0 0.0
        %3923 = vmatpush1.msra.mxu0 0.0
        %3924 = vmatprep.subr.mxu0 0.0
        %3925 = vmatpush1.msra.mxu0 0.0
        %3926 = vmatprep.subr.mxu0 0.0
        %3927 = vmatpush1.msra.mxu0 0.0
        %3928 = vmatprep.subr.mxu0 0.0
        %3929 = vmatpush1.msra.mxu0 0.0
        %3930 = vmatprep.subr.mxu0 0.0
        %3931 = vmatpush1.msra.mxu0 0.0
        %3932 = vmatprep.subr.mxu0 0.0
        %3933 = vmatpush1.msra.mxu0 0.0
        %3934 = vmatprep.subr.mxu0 0.0
        %3935 = vmatpush1.msra.mxu0 0.0
        %3936 = vmatprep.subr.mxu0 0.0
        %3937 = vmatpush1.msra.mxu0 0.0
        %3938 = vmatprep.subr.mxu0 0.0
        %3939 = vmatpush1.msra.mxu0 0.0
        %3940 = vmatprep.subr.mxu0 0.0
        %3941 = vmatpush1.msra.mxu0 0.0
        %3942 = vmatprep.subr.mxu0 0.0
        %3943 = vmatpush1.msra.mxu0 0.0
        %3944 = vmatprep.subr.mxu0 0.0
        %3945 = vmatpush1.msra.mxu0 0.0
        %3946 = vmatprep.subr.mxu0 0.0
        %3947 = vmatpush1.msra.mxu0 0.0
        %3948 = vmatprep.subr.mxu0 0.0
        %3949 = vmatpush1.msra.mxu0 0.0
        %3950 = vmatprep.subr.mxu0 0.0
        %3951 = vmatpush1.msra.mxu0 0.0
        %3952 = vmatprep.subr.mxu0 0.0
        %3953 = vmatpush1.msra.mxu0 0.0
        %3954 = vmatprep.subr.mxu0 0.0
        %3955 = vmatpush1.msra.mxu0 0.0
        %3956 = vmatprep.subr.mxu0 0.0
        %3957 = vmatpush1.msra.mxu0 0.0
        %3958 = vmatprep.subr.mxu0 0.0
        %3959 = vmatpush1.msra.mxu0 0.0
        %3960 = vmatprep.subr.mxu0 0.0
        %3961 = vmatpush1.msra.mxu0 0.0
        %3962 = vmatprep.subr.mxu0 0.0
        %3963 = vmatpush1.msra.mxu0 0.0
        %3964 = vmatprep.mubr.f32.mxu0 0.0
        %3965 = vmatmul.mubr.f32.gmra.mrb[0].mxu0 %v3756
        %v3966 = vpop.f32.mrb[0].mxu0
        %v3967 = vadd.f32 %v3752, %v3966
        %v3968 = vpop.f32.mrb[0].mxu0
        %v3969 = vadd.f32 %v3752, %v3968
        %3970 = vdwg.mxu0
        %3971 = vmatprep.subr.mxu0 %v3149
        %3972 = vmatpush1.msra.mxu0 %v3148
        %3973 = vmatprep.subr.mxu0 %v3227
        %3974 = vmatpush1.msra.mxu0 %v3226
        %3975 = vmatprep.subr.mxu0 %v3305
        %3976 = vmatpush1.msra.mxu0 %v3304
        %3977 = vmatprep.subr.mxu0 %v3383
        %3978 = vmatpush1.msra.mxu0 %v3382
        %3979 = vmatprep.subr.mxu0 %v3436
        %3980 = vmatpush1.msra.mxu0 %v3435
        %3981 = vmatprep.subr.mxu0 %v3514
        %3982 = vmatpush1.msra.mxu0 %v3513
        %3983 = vmatprep.subr.mxu0 %v3592
        %3984 = vmatpush1.msra.mxu0 %v3591
        %3985 = vmatprep.subr.mxu0 %v3670
        %3986 = vmatpush1.msra.mxu0 %v3669
        %3987 = vmatprep.subr.mxu0 %v3748
        %3988 = vmatpush1.msra.mxu0 %v3747
        %3989 = vmatprep.subr.mxu0 0.0
        %3990 = vmatpush1.msra.mxu0 0.0
        %3991 = vmatprep.subr.mxu0 0.0
        %3992 = vmatpush1.msra.mxu0 0.0
        %3993 = vmatprep.subr.mxu0 0.0
        %3994 = vmatpush1.msra.mxu0 0.0
        %3995 = vmatprep.subr.mxu0 0.0
        %3996 = vmatpush1.msra.mxu0 0.0
        %3997 = vmatprep.subr.mxu0 0.0
        %3998 = vmatpush1.msra.mxu0 0.0
        %3999 = vmatprep.subr.mxu0 0.0
        %4000 = vmatpush1.msra.mxu0 0.0
        %4001 = vmatprep.subr.mxu0 0.0
        %4002 = vmatpush1.msra.mxu0 0.0
        %4003 = vmatprep.subr.mxu0 0.0
        %4004 = vmatpush1.msra.mxu0 0.0
        %4005 = vmatprep.subr.mxu0 0.0
        %4006 = vmatpush1.msra.mxu0 0.0
        %4007 = vmatprep.subr.mxu0 0.0
        %4008 = vmatpush1.msra.mxu0 0.0
        %4009 = vmatprep.subr.mxu0 0.0
        %4010 = vmatpush1.msra.mxu0 0.0
        %4011 = vmatprep.subr.mxu0 0.0
        %4012 = vmatpush1.msra.mxu0 0.0
        %4013 = vmatprep.subr.mxu0 0.0
        %4014 = vmatpush1.msra.mxu0 0.0
        %4015 = vmatprep.subr.mxu0 0.0
        %4016 = vmatpush1.msra.mxu0 0.0
        %4017 = vmatprep.subr.mxu0 0.0
        %4018 = vmatpush1.msra.mxu0 0.0
        %4019 = vmatprep.subr.mxu0 0.0
        %4020 = vmatpush1.msra.mxu0 0.0
        %4021 = vmatprep.subr.mxu0 0.0
        %4022 = vmatpush1.msra.mxu0 0.0
        %4023 = vmatprep.subr.mxu0 0.0
        %4024 = vmatpush1.msra.mxu0 0.0
        %4025 = vmatprep.subr.mxu0 0.0
        %4026 = vmatpush1.msra.mxu0 0.0
        %4027 = vmatprep.subr.mxu0 0.0
        %4028 = vmatpush1.msra.mxu0 0.0
        %4029 = vmatprep.subr.mxu0 0.0
        %4030 = vmatpush1.msra.mxu0 0.0
        %4031 = vmatprep.subr.mxu0 0.0
        %4032 = vmatpush1.msra.mxu0 0.0
        %4033 = vmatprep.subr.mxu0 0.0
        %4034 = vmatpush1.msra.mxu0 0.0
        %4035 = vmatprep.mubr.f32.mxu0 0.0
        %4036 = vmatmul.mubr.f32.gmra.mrb[0].mxu0 %v3756
        %v4037 = vpop.f32.mrb[0].mxu0
        %v4038 = vadd.f32 %v3752, %v4037
        %v4039 = vpop.f32.mrb[0].mxu0
        %v4040 = vadd.f32 %v3752, %v4039
        %4041 = vdwg.mxu0
        %4042 = vset.pattern.permute.xlu0 4
        %4043 = vperm.xlu0 %4042, %v507
        %v4044 = vpop.permute.xlu0 %4043
        %4046 = vmatprep.subr.mxu0 %v1854
        %4047 = vmatpush1.xpose.msra.mxu0 %v508
        %4048 = vmatprep.subr.mxu0 0.0
        %4049 = vmatpush1.xpose.msra.mxu0 0.0
        %4050 = vmatprep.subr.mxu0 0.0
        %4051 = vmatpush1.xpose.msra.mxu0 0.0
        %4052 = vmatprep.subr.mxu0 0.0
        %4053 = vmatpush1.xpose.msra.mxu0 0.0
        %4054 = vmatprep.subr.mxu0 0.0
        %4055 = vmatpush1.xpose.msra.mxu0 0.0
        %4056 = vmatprep.subr.mxu0 0.0
        %4057 = vmatpush1.xpose.msra.mxu0 0.0
        %4058 = vmatprep.subr.mxu0 0.0
        %4059 = vmatpush1.xpose.msra.mxu0 0.0
        %4060 = vmatprep.subr.mxu0 0.0
        %4061 = vmatpush1.xpose.msra.mxu0 0.0
        %4062 = vmatprep.subr.mxu0 0.0
        %4063 = vmatpush1.xpose.msra.mxu0 0.0
        %4064 = vmatprep.subr.mxu0 0.0
        %4065 = vmatpush1.xpose.msra.mxu0 0.0
        %4066 = vmatprep.subr.mxu0 0.0
        %4067 = vmatpush1.xpose.msra.mxu0 0.0
        %4068 = vmatprep.subr.mxu0 0.0
        %4069 = vmatpush1.xpose.msra.mxu0 0.0
        %4070 = vmatprep.subr.mxu0 0.0
        %4071 = vmatpush1.xpose.msra.mxu0 0.0
        %4072 = vmatprep.subr.mxu0 0.0
        %4073 = vmatpush1.xpose.msra.mxu0 0.0
        %4074 = vmatprep.subr.mxu0 0.0
        %4075 = vmatpush1.xpose.msra.mxu0 0.0
        %4076 = vmatprep.subr.mxu0 0.0
        %4077 = vmatpush1.xpose.msra.mxu0 0.0
        %4078 = vmatprep.subr.mxu0 0.0
        %4079 = vmatpush1.xpose.msra.mxu0 0.0
        %4080 = vmatprep.subr.mxu0 0.0
        %4081 = vmatpush1.xpose.msra.mxu0 0.0
        %4082 = vmatprep.subr.mxu0 0.0
        %4083 = vmatpush1.xpose.msra.mxu0 0.0
        %4084 = vmatprep.subr.mxu0 0.0
        %4085 = vmatpush1.xpose.msra.mxu0 0.0
        %4086 = vmatprep.subr.mxu0 0.0
        %4087 = vmatpush1.xpose.msra.mxu0 0.0
        %4088 = vmatprep.subr.mxu0 0.0
        %4089 = vmatpush1.xpose.msra.mxu0 0.0
        %4090 = vmatprep.subr.mxu0 0.0
        %4091 = vmatpush1.xpose.msra.mxu0 0.0
        %4092 = vmatprep.subr.mxu0 0.0
        %4093 = vmatpush1.xpose.msra.mxu0 0.0
        %4094 = vmatprep.subr.mxu0 0.0
        %4095 = vmatpush1.xpose.msra.mxu0 0.0
        %4096 = vmatprep.subr.mxu0 0.0
        %4097 = vmatpush1.xpose.msra.mxu0 0.0
        %4098 = vmatprep.subr.mxu0 0.0
        %4099 = vmatpush1.xpose.msra.mxu0 0.0
        %4100 = vmatprep.subr.mxu0 0.0
        %4101 = vmatpush1.xpose.msra.mxu0 0.0
        %4102 = vmatprep.subr.mxu0 0.0
        %4103 = vmatpush1.xpose.msra.mxu0 0.0
        %4104 = vmatprep.subr.mxu0 0.0
        %4105 = vmatpush1.xpose.msra.mxu0 0.0
        %4106 = vmatprep.subr.mxu0 0.0
        %4107 = vmatpush1.xpose.msra.mxu0 0.0
        %4108 = vmatprep.subr.mxu0 0.0
        %4109 = vmatpush1.xpose.msra.mxu0 0.0
        %4110 = vmatprep.mubr.f32.mxu0 %v3064
        %4111 = vmatmul.mubr.f32.gmra.mrb[0].mxu0 %v3063
        %v4112 = vpop.f32.mrb[0].mxu0
        %v4113 = vadd.f32 %v4044, %v4112
        %v4114 = vpop.f32.mrb[0].mxu0
        %4115 = vdwg.mxu0
        %4116 = vmatprep.subr.mxu0 %v1855
        %4117 = vmatpush1.xpose.msra.mxu0 %v509
        %4118 = vmatprep.subr.mxu0 0.0
        %4119 = vmatpush1.xpose.msra.mxu0 0.0
        %4120 = vmatprep.subr.mxu0 0.0
        %4121 = vmatpush1.xpose.msra.mxu0 0.0
        %4122 = vmatprep.subr.mxu0 0.0
        %4123 = vmatpush1.xpose.msra.mxu0 0.0
        %4124 = vmatprep.subr.mxu0 0.0
        %4125 = vmatpush1.xpose.msra.mxu0 0.0
        %4126 = vmatprep.subr.mxu0 0.0
        %4127 = vmatpush1.xpose.msra.mxu0 0.0
        %4128 = vmatprep.subr.mxu0 0.0
        %4129 = vmatpush1.xpose.msra.mxu0 0.0
        %4130 = vmatprep.subr.mxu0 0.0
        %4131 = vmatpush1.xpose.msra.mxu0 0.0
        %4132 = vmatprep.subr.mxu0 0.0
        %4133 = vmatpush1.xpose.msra.mxu0 0.0
        %4134 = vmatprep.subr.mxu0 0.0
        %4135 = vmatpush1.xpose.msra.mxu0 0.0
        %4136 = vmatprep.subr.mxu0 0.0
        %4137 = vmatpush1.xpose.msra.mxu0 0.0
        %4138 = vmatprep.subr.mxu0 0.0
        %4139 = vmatpush1.xpose.msra.mxu0 0.0
        %4140 = vmatprep.subr.mxu0 0.0
        %4141 = vmatpush1.xpose.msra.mxu0 0.0
        %4142 = vmatprep.subr.mxu0 0.0
        %4143 = vmatpush1.xpose.msra.mxu0 0.0
        %4144 = vmatprep.subr.mxu0 0.0
        %4145 = vmatpush1.xpose.msra.mxu0 0.0
        %4146 = vmatprep.subr.mxu0 0.0
        %4147 = vmatpush1.xpose.msra.mxu0 0.0
        %4148 = vmatprep.subr.mxu0 0.0
        %4149 = vmatpush1.xpose.msra.mxu0 0.0
        %4150 = vmatprep.subr.mxu0 0.0
        %4151 = vmatpush1.xpose.msra.mxu0 0.0
        %4152 = vmatprep.subr.mxu0 0.0
        %4153 = vmatpush1.xpose.msra.mxu0 0.0
        %4154 = vmatprep.subr.mxu0 0.0
        %4155 = vmatpush1.xpose.msra.mxu0 0.0
        %4156 = vmatprep.subr.mxu0 0.0
        %4157 = vmatpush1.xpose.msra.mxu0 0.0
        %4158 = vmatprep.subr.mxu0 0.0
        %4159 = vmatpush1.xpose.msra.mxu0 0.0
        %4160 = vmatprep.subr.mxu0 0.0
        %4161 = vmatpush1.xpose.msra.mxu0 0.0
        %4162 = vmatprep.subr.mxu0 0.0
        %4163 = vmatpush1.xpose.msra.mxu0 0.0
        %4164 = vmatprep.subr.mxu0 0.0
        %4165 = vmatpush1.xpose.msra.mxu0 0.0
        %4166 = vmatprep.subr.mxu0 0.0
        %4167 = vmatpush1.xpose.msra.mxu0 0.0
        %4168 = vmatprep.subr.mxu0 0.0
        %4169 = vmatpush1.xpose.msra.mxu0 0.0
        %4170 = vmatprep.subr.mxu0 0.0
        %4171 = vmatpush1.xpose.msra.mxu0 0.0
        %4172 = vmatprep.subr.mxu0 0.0
        %4173 = vmatpush1.xpose.msra.mxu0 0.0
        %4174 = vmatprep.subr.mxu0 0.0
        %4175 = vmatpush1.xpose.msra.mxu0 0.0
        %4176 = vmatprep.subr.mxu0 0.0
        %4177 = vmatpush1.xpose.msra.mxu0 0.0
        %4178 = vmatprep.subr.mxu0 0.0
        %4179 = vmatpush1.xpose.msra.mxu0 0.0
        %4180 = vmatprep.mubr.f32.mxu0 %v3066
        %4181 = vmatmul.mubr.f32.gmra.mrb[0].mxu0 %v3065
        %v4182 = vpop.f32.mrb[0].mxu0
        %v4183 = vadd.f32 %v4113, %v4182
        %v4184 = vpop.f32.mrb[0].mxu0
        %4185 = vdwg.mxu0
        %4186 = vmatprep.subr.mxu0 %v1856
        %4187 = vmatpush1.xpose.msra.mxu0 %v510
        %4188 = vmatprep.subr.mxu0 0.0
        %4189 = vmatpush1.xpose.msra.mxu0 0.0
        %4190 = vmatprep.subr.mxu0 0.0
        %4191 = vmatpush1.xpose.msra.mxu0 0.0
        %4192 = vmatprep.subr.mxu0 0.0
        %4193 = vmatpush1.xpose.msra.mxu0 0.0
        %4194 = vmatprep.subr.mxu0 0.0
        %4195 = vmatpush1.xpose.msra.mxu0 0.0
        %4196 = vmatprep.subr.mxu0 0.0
        %4197 = vmatpush1.xpose.msra.mxu0 0.0
        %4198 = vmatprep.subr.mxu0 0.0
        %4199 = vmatpush1.xpose.msra.mxu0 0.0
        %4200 = vmatprep.subr.mxu0 0.0
        %4201 = vmatpush1.xpose.msra.mxu0 0.0
        %4202 = vmatprep.subr.mxu0 0.0
        %4203 = vmatpush1.xpose.msra.mxu0 0.0
        %4204 = vmatprep.subr.mxu0 0.0
        %4205 = vmatpush1.xpose.msra.mxu0 0.0
        %4206 = vmatprep.subr.mxu0 0.0
        %4207 = vmatpush1.xpose.msra.mxu0 0.0
        %4208 = vmatprep.subr.mxu0 0.0
        %4209 = vmatpush1.xpose.msra.mxu0 0.0
        %4210 = vmatprep.subr.mxu0 0.0
        %4211 = vmatpush1.xpose.msra.mxu0 0.0
        %4212 = vmatprep.subr.mxu0 0.0
        %4213 = vmatpush1.xpose.msra.mxu0 0.0
        %4214 = vmatprep.subr.mxu0 0.0
        %4215 = vmatpush1.xpose.msra.mxu0 0.0
        %4216 = vmatprep.subr.mxu0 0.0
        %4217 = vmatpush1.xpose.msra.mxu0 0.0
        %4218 = vmatprep.subr.mxu0 0.0
        %4219 = vmatpush1.xpose.msra.mxu0 0.0
        %4220 = vmatprep.subr.mxu0 0.0
        %4221 = vmatpush1.xpose.msra.mxu0 0.0
        %4222 = vmatprep.subr.mxu0 0.0
        %4223 = vmatpush1.xpose.msra.mxu0 0.0
        %4224 = vmatprep.subr.mxu0 0.0
        %4225 = vmatpush1.xpose.msra.mxu0 0.0
        %4226 = vmatprep.subr.mxu0 0.0
        %4227 = vmatpush1.xpose.msra.mxu0 0.0
        %4228 = vmatprep.subr.mxu0 0.0
        %4229 = vmatpush1.xpose.msra.mxu0 0.0
        %4230 = vmatprep.subr.mxu0 0.0
        %4231 = vmatpush1.xpose.msra.mxu0 0.0
        %4232 = vmatprep.subr.mxu0 0.0
        %4233 = vmatpush1.xpose.msra.mxu0 0.0
        %4234 = vmatprep.subr.mxu0 0.0
        %4235 = vmatpush1.xpose.msra.mxu0 0.0
        %4236 = vmatprep.subr.mxu0 0.0
        %4237 = vmatpush1.xpose.msra.mxu0 0.0
        %4238 = vmatprep.subr.mxu0 0.0
        %4239 = vmatpush1.xpose.msra.mxu0 0.0
        %4240 = vmatprep.subr.mxu0 0.0
        %4241 = vmatpush1.xpose.msra.mxu0 0.0
        %4242 = vmatprep.subr.mxu0 0.0
        %4243 = vmatpush1.xpose.msra.mxu0 0.0
        %4244 = vmatprep.subr.mxu0 0.0
        %4245 = vmatpush1.xpose.msra.mxu0 0.0
        %4246 = vmatprep.subr.mxu0 0.0
        %4247 = vmatpush1.xpose.msra.mxu0 0.0
        %4248 = vmatprep.subr.mxu0 0.0
        %4249 = vmatpush1.xpose.msra.mxu0 0.0
        %4250 = vmatprep.mubr.f32.mxu0 %v3068
        %4251 = vmatmul.mubr.f32.gmra.mrb[0].mxu0 %v3067
        %v4252 = vpop.f32.mrb[0].mxu0
        %v4253 = vadd.f32 %v4183, %v4252
        %v4254 = vpop.f32.mrb[0].mxu0
        %4255 = vdwg.mxu0
        %4256 = vmatprep.subr.mxu0 %v1857
        %4257 = vmatpush1.xpose.msra.mxu0 %v511
        %4258 = vmatprep.subr.mxu0 0.0
        %4259 = vmatpush1.xpose.msra.mxu0 0.0
        %4260 = vmatprep.subr.mxu0 0.0
        %4261 = vmatpush1.xpose.msra.mxu0 0.0
        %4262 = vmatprep.subr.mxu0 0.0
        %4263 = vmatpush1.xpose.msra.mxu0 0.0
        %4264 = vmatprep.subr.mxu0 0.0
        %4265 = vmatpush1.xpose.msra.mxu0 0.0
        %4266 = vmatprep.subr.mxu0 0.0
        %4267 = vmatpush1.xpose.msra.mxu0 0.0
        %4268 = vmatprep.subr.mxu0 0.0
        %4269 = vmatpush1.xpose.msra.mxu0 0.0
        %4270 = vmatprep.subr.mxu0 0.0
        %4271 = vmatpush1.xpose.msra.mxu0 0.0
        %4272 = vmatprep.subr.mxu0 0.0
        %4273 = vmatpush1.xpose.msra.mxu0 0.0
        %4274 = vmatprep.subr.mxu0 0.0
        %4275 = vmatpush1.xpose.msra.mxu0 0.0
        %4276 = vmatprep.subr.mxu0 0.0
        %4277 = vmatpush1.xpose.msra.mxu0 0.0
        %4278 = vmatprep.subr.mxu0 0.0
        %4279 = vmatpush1.xpose.msra.mxu0 0.0
        %4280 = vmatprep.subr.mxu0 0.0
        %4281 = vmatpush1.xpose.msra.mxu0 0.0
        %4282 = vmatprep.subr.mxu0 0.0
        %4283 = vmatpush1.xpose.msra.mxu0 0.0
        %4284 = vmatprep.subr.mxu0 0.0
        %4285 = vmatpush1.xpose.msra.mxu0 0.0
        %4286 = vmatprep.subr.mxu0 0.0
        %4287 = vmatpush1.xpose.msra.mxu0 0.0
        %4288 = vmatprep.subr.mxu0 0.0
        %4289 = vmatpush1.xpose.msra.mxu0 0.0
        %4290 = vmatprep.subr.mxu0 0.0
        %4291 = vmatpush1.xpose.msra.mxu0 0.0
        %4292 = vmatprep.subr.mxu0 0.0
        %4293 = vmatpush1.xpose.msra.mxu0 0.0
        %4294 = vmatprep.subr.mxu0 0.0
        %4295 = vmatpush1.xpose.msra.mxu0 0.0
        %4296 = vmatprep.subr.mxu0 0.0
        %4297 = vmatpush1.xpose.msra.mxu0 0.0
        %4298 = vmatprep.subr.mxu0 0.0
        %4299 = vmatpush1.xpose.msra.mxu0 0.0
        %4300 = vmatprep.subr.mxu0 0.0
        %4301 = vmatpush1.xpose.msra.mxu0 0.0
        %4302 = vmatprep.subr.mxu0 0.0
        %4303 = vmatpush1.xpose.msra.mxu0 0.0
        %4304 = vmatprep.subr.mxu0 0.0
        %4305 = vmatpush1.xpose.msra.mxu0 0.0
        %4306 = vmatprep.subr.mxu0 0.0
        %4307 = vmatpush1.xpose.msra.mxu0 0.0
        %4308 = vmatprep.subr.mxu0 0.0
        %4309 = vmatpush1.xpose.msra.mxu0 0.0
        %4310 = vmatprep.subr.mxu0 0.0
        %4311 = vmatpush1.xpose.msra.mxu0 0.0
        %4312 = vmatprep.subr.mxu0 0.0
        %4313 = vmatpush1.xpose.msra.mxu0 0.0
        %4314 = vmatprep.subr.mxu0 0.0
        %4315 = vmatpush1.xpose.msra.mxu0 0.0
        %4316 = vmatprep.subr.mxu0 0.0
        %4317 = vmatpush1.xpose.msra.mxu0 0.0
        %4318 = vmatprep.subr.mxu0 0.0
        %4319 = vmatpush1.xpose.msra.mxu0 0.0
        %4320 = vmatprep.mubr.f32.mxu0 %v3070
        %4321 = vmatmul.mubr.f32.gmra.mrb[0].mxu0 %v3069
        %v4322 = vpop.f32.mrb[0].mxu0
        %v4323 = vadd.f32 %v4253, %v4322
        %v4324 = vpop.f32.mrb[0].mxu0
        %4325 = vdwg.mxu0
        %4326 = vmatprep.subr.mxu0 %v1854
        %4327 = vmatpush1.xpose.msra.mxu0 %v508
        %4328 = vmatprep.subr.mxu0 0.0
        %4329 = vmatpush1.xpose.msra.mxu0 0.0
        %4330 = vmatprep.subr.mxu0 0.0
        %4331 = vmatpush1.xpose.msra.mxu0 0.0
        %4332 = vmatprep.subr.mxu0 0.0
        %4333 = vmatpush1.xpose.msra.mxu0 0.0
        %4334 = vmatprep.subr.mxu0 0.0
        %4335 = vmatpush1.xpose.msra.mxu0 0.0
        %4336 = vmatprep.subr.mxu0 0.0
        %4337 = vmatpush1.xpose.msra.mxu0 0.0
        %4338 = vmatprep.subr.mxu0 0.0
        %4339 = vmatpush1.xpose.msra.mxu0 0.0
        %4340 = vmatprep.subr.mxu0 0.0
        %4341 = vmatpush1.xpose.msra.mxu0 0.0
        %4342 = vmatprep.subr.mxu0 0.0
        %4343 = vmatpush1.xpose.msra.mxu0 0.0
        %4344 = vmatprep.subr.mxu0 0.0
        %4345 = vmatpush1.xpose.msra.mxu0 0.0
        %4346 = vmatprep.subr.mxu0 0.0
        %4347 = vmatpush1.xpose.msra.mxu0 0.0
        %4348 = vmatprep.subr.mxu0 0.0
        %4349 = vmatpush1.xpose.msra.mxu0 0.0
        %4350 = vmatprep.subr.mxu0 0.0
        %4351 = vmatpush1.xpose.msra.mxu0 0.0
        %4352 = vmatprep.subr.mxu0 0.0
        %4353 = vmatpush1.xpose.msra.mxu0 0.0
        %4354 = vmatprep.subr.mxu0 0.0
        %4355 = vmatpush1.xpose.msra.mxu0 0.0
        %4356 = vmatprep.subr.mxu0 0.0
        %4357 = vmatpush1.xpose.msra.mxu0 0.0
        %4358 = vmatprep.subr.mxu0 0.0
        %4359 = vmatpush1.xpose.msra.mxu0 0.0
        %4360 = vmatprep.subr.mxu0 0.0
        %4361 = vmatpush1.xpose.msra.mxu0 0.0
        %4362 = vmatprep.subr.mxu0 0.0
        %4363 = vmatpush1.xpose.msra.mxu0 0.0
        %4364 = vmatprep.subr.mxu0 0.0
        %4365 = vmatpush1.xpose.msra.mxu0 0.0
        %4366 = vmatprep.subr.mxu0 0.0
        %4367 = vmatpush1.xpose.msra.mxu0 0.0
        %4368 = vmatprep.subr.mxu0 0.0
        %4369 = vmatpush1.xpose.msra.mxu0 0.0
        %4370 = vmatprep.subr.mxu0 0.0
        %4371 = vmatpush1.xpose.msra.mxu0 0.0
        %4372 = vmatprep.subr.mxu0 0.0
        %4373 = vmatpush1.xpose.msra.mxu0 0.0
        %4374 = vmatprep.subr.mxu0 0.0
        %4375 = vmatpush1.xpose.msra.mxu0 0.0
        %4376 = vmatprep.subr.mxu0 0.0
        %4377 = vmatpush1.xpose.msra.mxu0 0.0
        %4378 = vmatprep.subr.mxu0 0.0
        %4379 = vmatpush1.xpose.msra.mxu0 0.0
        %4380 = vmatprep.subr.mxu0 0.0
        %4381 = vmatpush1.xpose.msra.mxu0 0.0
        %4382 = vmatprep.subr.mxu0 0.0
        %4383 = vmatpush1.xpose.msra.mxu0 0.0
        %4384 = vmatprep.subr.mxu0 0.0
        %4385 = vmatpush1.xpose.msra.mxu0 0.0
        %4386 = vmatprep.subr.mxu0 0.0
        %4387 = vmatpush1.xpose.msra.mxu0 0.0
        %4388 = vmatprep.subr.mxu0 0.0
        %4389 = vmatpush1.xpose.msra.mxu0 0.0
        %4390 = vmatprep.mubr.f32.mxu0 %v3827
        %4391 = vmatmul.mubr.f32.gmra.mrb[0].mxu0 %v3825
        %v4392 = vpop.f32.mrb[0].mxu0
        %v4393 = vadd.f32 %v4044, %v4392
        %v4394 = vpop.f32.mrb[0].mxu0
        %4395 = vdwg.mxu0
        %4396 = vmatprep.subr.mxu0 %v1855
        %4397 = vmatpush1.xpose.msra.mxu0 %v509
        %4398 = vmatprep.subr.mxu0 0.0
        %4399 = vmatpush1.xpose.msra.mxu0 0.0
        %4400 = vmatprep.subr.mxu0 0.0
        %4401 = vmatpush1.xpose.msra.mxu0 0.0
        %4402 = vmatprep.subr.mxu0 0.0
        %4403 = vmatpush1.xpose.msra.mxu0 0.0
        %4404 = vmatprep.subr.mxu0 0.0
        %4405 = vmatpush1.xpose.msra.mxu0 0.0
        %4406 = vmatprep.subr.mxu0 0.0
        %4407 = vmatpush1.xpose.msra.mxu0 0.0
        %4408 = vmatprep.subr.mxu0 0.0
        %4409 = vmatpush1.xpose.msra.mxu0 0.0
        %4410 = vmatprep.subr.mxu0 0.0
        %4411 = vmatpush1.xpose.msra.mxu0 0.0
        %4412 = vmatprep.subr.mxu0 0.0
        %4413 = vmatpush1.xpose.msra.mxu0 0.0
        %4414 = vmatprep.subr.mxu0 0.0
        %4415 = vmatpush1.xpose.msra.mxu0 0.0
        %4416 = vmatprep.subr.mxu0 0.0
        %4417 = vmatpush1.xpose.msra.mxu0 0.0
        %4418 = vmatprep.subr.mxu0 0.0
        %4419 = vmatpush1.xpose.msra.mxu0 0.0
        %4420 = vmatprep.subr.mxu0 0.0
        %4421 = vmatpush1.xpose.msra.mxu0 0.0
        %4422 = vmatprep.subr.mxu0 0.0
        %4423 = vmatpush1.xpose.msra.mxu0 0.0
        %4424 = vmatprep.subr.mxu0 0.0
        %4425 = vmatpush1.xpose.msra.mxu0 0.0
        %4426 = vmatprep.subr.mxu0 0.0
        %4427 = vmatpush1.xpose.msra.mxu0 0.0
        %4428 = vmatprep.subr.mxu0 0.0
        %4429 = vmatpush1.xpose.msra.mxu0 0.0
        %4430 = vmatprep.subr.mxu0 0.0
        %4431 = vmatpush1.xpose.msra.mxu0 0.0
        %4432 = vmatprep.subr.mxu0 0.0
        %4433 = vmatpush1.xpose.msra.mxu0 0.0
        %4434 = vmatprep.subr.mxu0 0.0
        %4435 = vmatpush1.xpose.msra.mxu0 0.0
        %4436 = vmatprep.subr.mxu0 0.0
        %4437 = vmatpush1.xpose.msra.mxu0 0.0
        %4438 = vmatprep.subr.mxu0 0.0
        %4439 = vmatpush1.xpose.msra.mxu0 0.0
        %4440 = vmatprep.subr.mxu0 0.0
        %4441 = vmatpush1.xpose.msra.mxu0 0.0
        %4442 = vmatprep.subr.mxu0 0.0
        %4443 = vmatpush1.xpose.msra.mxu0 0.0
        %4444 = vmatprep.subr.mxu0 0.0
        %4445 = vmatpush1.xpose.msra.mxu0 0.0
        %4446 = vmatprep.subr.mxu0 0.0
        %4447 = vmatpush1.xpose.msra.mxu0 0.0
        %4448 = vmatprep.subr.mxu0 0.0
        %4449 = vmatpush1.xpose.msra.mxu0 0.0
        %4450 = vmatprep.subr.mxu0 0.0
        %4451 = vmatpush1.xpose.msra.mxu0 0.0
        %4452 = vmatprep.subr.mxu0 0.0
        %4453 = vmatpush1.xpose.msra.mxu0 0.0
        %4454 = vmatprep.subr.mxu0 0.0
        %4455 = vmatpush1.xpose.msra.mxu0 0.0
        %4456 = vmatprep.subr.mxu0 0.0
        %4457 = vmatpush1.xpose.msra.mxu0 0.0
        %4458 = vmatprep.subr.mxu0 0.0
        %4459 = vmatpush1.xpose.msra.mxu0 0.0
        %4460 = vmatprep.mubr.f32.mxu0 %v3898
        %4461 = vmatmul.mubr.f32.gmra.mrb[0].mxu0 %v3896
        %v4462 = vpop.f32.mrb[0].mxu0
        %v4463 = vadd.f32 %v4393, %v4462
        %v4464 = vpop.f32.mrb[0].mxu0
        %4465 = vdwg.mxu0
        %4466 = vmatprep.subr.mxu0 %v1856
        %4467 = vmatpush1.xpose.msra.mxu0 %v510
        %4468 = vmatprep.subr.mxu0 0.0
        %4469 = vmatpush1.xpose.msra.mxu0 0.0
        %4470 = vmatprep.subr.mxu0 0.0
        %4471 = vmatpush1.xpose.msra.mxu0 0.0
        %4472 = vmatprep.subr.mxu0 0.0
        %4473 = vmatpush1.xpose.msra.mxu0 0.0
        %4474 = vmatprep.subr.mxu0 0.0
        %4475 = vmatpush1.xpose.msra.mxu0 0.0
        %4476 = vmatprep.subr.mxu0 0.0
        %4477 = vmatpush1.xpose.msra.mxu0 0.0
        %4478 = vmatprep.subr.mxu0 0.0
        %4479 = vmatpush1.xpose.msra.mxu0 0.0
        %4480 = vmatprep.subr.mxu0 0.0
        %4481 = vmatpush1.xpose.msra.mxu0 0.0
        %4482 = vmatprep.subr.mxu0 0.0
        %4483 = vmatpush1.xpose.msra.mxu0 0.0
        %4484 = vmatprep.subr.mxu0 0.0
        %4485 = vmatpush1.xpose.msra.mxu0 0.0
        %4486 = vmatprep.subr.mxu0 0.0
        %4487 = vmatpush1.xpose.msra.mxu0 0.0
        %4488 = vmatprep.subr.mxu0 0.0
        %4489 = vmatpush1.xpose.msra.mxu0 0.0
        %4490 = vmatprep.subr.mxu0 0.0
        %4491 = vmatpush1.xpose.msra.mxu0 0.0
        %4492 = vmatprep.subr.mxu0 0.0
        %4493 = vmatpush1.xpose.msra.mxu0 0.0
        %4494 = vmatprep.subr.mxu0 0.0
        %4495 = vmatpush1.xpose.msra.mxu0 0.0
        %4496 = vmatprep.subr.mxu0 0.0
        %4497 = vmatpush1.xpose.msra.mxu0 0.0
        %4498 = vmatprep.subr.mxu0 0.0
        %4499 = vmatpush1.xpose.msra.mxu0 0.0
        %4500 = vmatprep.subr.mxu0 0.0
        %4501 = vmatpush1.xpose.msra.mxu0 0.0
        %4502 = vmatprep.subr.mxu0 0.0
        %4503 = vmatpush1.xpose.msra.mxu0 0.0
        %4504 = vmatprep.subr.mxu0 0.0
        %4505 = vmatpush1.xpose.msra.mxu0 0.0
        %4506 = vmatprep.subr.mxu0 0.0
        %4507 = vmatpush1.xpose.msra.mxu0 0.0
        %4508 = vmatprep.subr.mxu0 0.0
        %4509 = vmatpush1.xpose.msra.mxu0 0.0
        %4510 = vmatprep.subr.mxu0 0.0
        %4511 = vmatpush1.xpose.msra.mxu0 0.0
        %4512 = vmatprep.subr.mxu0 0.0
        %4513 = vmatpush1.xpose.msra.mxu0 0.0
        %4514 = vmatprep.subr.mxu0 0.0
        %4515 = vmatpush1.xpose.msra.mxu0 0.0
        %4516 = vmatprep.subr.mxu0 0.0
        %4517 = vmatpush1.xpose.msra.mxu0 0.0
        %4518 = vmatprep.subr.mxu0 0.0
        %4519 = vmatpush1.xpose.msra.mxu0 0.0
        %4520 = vmatprep.subr.mxu0 0.0
        %4521 = vmatpush1.xpose.msra.mxu0 0.0
        %4522 = vmatprep.subr.mxu0 0.0
        %4523 = vmatpush1.xpose.msra.mxu0 0.0
        %4524 = vmatprep.subr.mxu0 0.0
        %4525 = vmatpush1.xpose.msra.mxu0 0.0
        %4526 = vmatprep.subr.mxu0 0.0
        %4527 = vmatpush1.xpose.msra.mxu0 0.0
        %4528 = vmatprep.subr.mxu0 0.0
        %4529 = vmatpush1.xpose.msra.mxu0 0.0
        %4530 = vmatprep.mubr.f32.mxu0 %v3969
        %4531 = vmatmul.mubr.f32.gmra.mrb[0].mxu0 %v3967
        %v4532 = vpop.f32.mrb[0].mxu0
        %v4533 = vadd.f32 %v4463, %v4532
        %v4534 = vpop.f32.mrb[0].mxu0
        %4535 = vdwg.mxu0
        %4536 = vmatprep.subr.mxu0 %v1857
        %4537 = vmatpush1.xpose.msra.mxu0 %v511
        %4538 = vmatprep.subr.mxu0 0.0
        %4539 = vmatpush1.xpose.msra.mxu0 0.0
        %4540 = vmatprep.subr.mxu0 0.0
        %4541 = vmatpush1.xpose.msra.mxu0 0.0
        %4542 = vmatprep.subr.mxu0 0.0
        %4543 = vmatpush1.xpose.msra.mxu0 0.0
        %4544 = vmatprep.subr.mxu0 0.0
        %4545 = vmatpush1.xpose.msra.mxu0 0.0
        %4546 = vmatprep.subr.mxu0 0.0
        %4547 = vmatpush1.xpose.msra.mxu0 0.0
        %4548 = vmatprep.subr.mxu0 0.0
        %4549 = vmatpush1.xpose.msra.mxu0 0.0
        %4550 = vmatprep.subr.mxu0 0.0
        %4551 = vmatpush1.xpose.msra.mxu0 0.0
        %4552 = vmatprep.subr.mxu0 0.0
        %4553 = vmatpush1.xpose.msra.mxu0 0.0
        %4554 = vmatprep.subr.mxu0 0.0
        %4555 = vmatpush1.xpose.msra.mxu0 0.0
        %4556 = vmatprep.subr.mxu0 0.0
        %4557 = vmatpush1.xpose.msra.mxu0 0.0
        %4558 = vmatprep.subr.mxu0 0.0
        %4559 = vmatpush1.xpose.msra.mxu0 0.0
        %4560 = vmatprep.subr.mxu0 0.0
        %4561 = vmatpush1.xpose.msra.mxu0 0.0
        %4562 = vmatprep.subr.mxu0 0.0
        %4563 = vmatpush1.xpose.msra.mxu0 0.0
        %4564 = vmatprep.subr.mxu0 0.0
        %4565 = vmatpush1.xpose.msra.mxu0 0.0
        %4566 = vmatprep.subr.mxu0 0.0
        %4567 = vmatpush1.xpose.msra.mxu0 0.0
        %4568 = vmatprep.subr.mxu0 0.0
        %4569 = vmatpush1.xpose.msra.mxu0 0.0
        %4570 = vmatprep.subr.mxu0 0.0
        %4571 = vmatpush1.xpose.msra.mxu0 0.0
        %4572 = vmatprep.subr.mxu0 0.0
        %4573 = vmatpush1.xpose.msra.mxu0 0.0
        %4574 = vmatprep.subr.mxu0 0.0
        %4575 = vmatpush1.xpose.msra.mxu0 0.0
        %4576 = vmatprep.subr.mxu0 0.0
        %4577 = vmatpush1.xpose.msra.mxu0 0.0
        %4578 = vmatprep.subr.mxu0 0.0
        %4579 = vmatpush1.xpose.msra.mxu0 0.0
        %4580 = vmatprep.subr.mxu0 0.0
        %4581 = vmatpush1.xpose.msra.mxu0 0.0
        %4582 = vmatprep.subr.mxu0 0.0
        %4583 = vmatpush1.xpose.msra.mxu0 0.0
        %4584 = vmatprep.subr.mxu0 0.0
        %4585 = vmatpush1.xpose.msra.mxu0 0.0
        %4586 = vmatprep.subr.mxu0 0.0
        %4587 = vmatpush1.xpose.msra.mxu0 0.0
        %4588 = vmatprep.subr.mxu0 0.0
        %4589 = vmatpush1.xpose.msra.mxu0 0.0
        %4590 = vmatprep.subr.mxu0 0.0
        %4591 = vmatpush1.xpose.msra.mxu0 0.0
        %4592 = vmatprep.subr.mxu0 0.0
        %4593 = vmatpush1.xpose.msra.mxu0 0.0
        %4594 = vmatprep.subr.mxu0 0.0
        %4595 = vmatpush1.xpose.msra.mxu0 0.0
        %4596 = vmatprep.subr.mxu0 0.0
        %4597 = vmatpush1.xpose.msra.mxu0 0.0
        %4598 = vmatprep.subr.mxu0 0.0
        %4599 = vmatpush1.xpose.msra.mxu0 0.0
        %4600 = vmatprep.mubr.f32.mxu0 %v4040
        %4601 = vmatmul.mubr.f32.gmra.mrb[0].mxu0 %v4038
        %v4602 = vpop.f32.mrb[0].mxu0
        %v4603 = vadd.f32 %v4533, %v4602
        %v4604 = vpop.f32.mrb[0].mxu0
        %4605 = vdwg.mxu0
        %v4606 = vsel %vm2150, %v4323, -inf
        %v4607 = vrot.slane %v4606, 4
        %v4608 = vmax.f32 %v4606, %v4607
        %v4609 = vrot.slane %v4608, 2
        %v4610 = vmax.f32 %v4608, %v4609
        %v4611 = vrot.slane %v4610, 1
        %v4612 = vmax.f32 %v4610, %v4611
        %v4613 = vsub.f32 %v4323, %v4612
        %v4614 = vmul.f32 %v4613, 1.442695
        %v4615 = vpow.pop %v4614
        %v4616 = vsel %vm2150, %v4603, -inf
        %v4617 = vrot.slane %v4616, 4
        %v4618 = vmax.f32 %v4616, %v4617
        %v4619 = vrot.slane %v4618, 2
        %v4620 = vmax.f32 %v4618, %v4619
        %v4621 = vrot.slane %v4620, 1
        %v4622 = vmax.f32 %v4620, %v4621
        %v4623 = vsub.f32 %v4603, %v4622
        %v4624 = vmul.f32 %v4623, 1.442695
        %v4625 = vpow.pop %v4624
        %v4626 = vsel %vm2150, %v4615, 0.0
        %v4627 = vrot.slane %v4626, 4
        %v4628 = vadd.f32 %v4626, %v4627
        %v4629 = vrot.slane %v4628, 2
        %v4630 = vadd.f32 %v4628, %v4629
        %v4631 = vrot.slane %v4630, 1
        %v4632 = vadd.f32 %v4630, %v4631
        %v4633 = vrcp.pop %v4632
        %v4634 = vmul.f32 %v4615, %v4633
        %v4635 = vsel %vm2150, %v4625, 0.0
        %v4636 = vrot.slane %v4635, 4
        %v4637 = vadd.f32 %v4635, %v4636
        %v4638 = vrot.slane %v4637, 2
        %v4639 = vadd.f32 %v4637, %v4638
        %v4640 = vrot.slane %v4639, 1
        %v4641 = vadd.f32 %v4639, %v4640
        %v4642 = vrcp.pop %v4641
        %v4643 = vmul.f32 %v4625, %v4642
        %v4645 = vsel %vm2150, %v4634, 0
        %4647 = vmatprep.subr.mxu0 %v2157
        %4648 = vmatpush1.msra.mxu0 %v2155
        %4649 = vmatprep.subr.mxu0 0.0
        %4650 = vmatpush1.msra.mxu0 0.0
        %4651 = vmatprep.subr.mxu0 0.0
        %4652 = vmatpush1.msra.mxu0 0.0
        %4653 = vmatprep.subr.mxu0 0.0
        %4654 = vmatpush1.msra.mxu0 0.0
        %4655 = vmatprep.subr.mxu0 0.0
        %4656 = vmatpush1.msra.mxu0 0.0
        %4657 = vmatprep.subr.mxu0 0.0
        %4658 = vmatpush1.msra.mxu0 0.0
        %4659 = vmatprep.subr.mxu0 0.0
        %4660 = vmatpush1.msra.mxu0 0.0
        %4661 = vmatprep.subr.mxu0 0.0
        %4662 = vmatpush1.msra.mxu0 0.0
        %4663 = vmatprep.subr.mxu0 0.0
        %4664 = vmatpush1.msra.mxu0 0.0
        %4665 = vmatprep.subr.mxu0 0.0
        %4666 = vmatpush1.msra.mxu0 0.0
        %4667 = vmatprep.subr.mxu0 0.0
        %4668 = vmatpush1.msra.mxu0 0.0
        %4669 = vmatprep.subr.mxu0 0.0
        %4670 = vmatpush1.msra.mxu0 0.0
        %4671 = vmatprep.subr.mxu0 0.0
        %4672 = vmatpush1.msra.mxu0 0.0
        %4673 = vmatprep.subr.mxu0 0.0
        %4674 = vmatpush1.msra.mxu0 0.0
        %4675 = vmatprep.subr.mxu0 0.0
        %4676 = vmatpush1.msra.mxu0 0.0
        %4677 = vmatprep.subr.mxu0 0.0
        %4678 = vmatpush1.msra.mxu0 0.0
        %4679 = vmatprep.subr.mxu0 0.0
        %4680 = vmatpush1.msra.mxu0 0.0
        %4681 = vmatprep.subr.mxu0 0.0
        %4682 = vmatpush1.msra.mxu0 0.0
        %4683 = vmatprep.subr.mxu0 0.0
        %4684 = vmatpush1.msra.mxu0 0.0
        %4685 = vmatprep.subr.mxu0 0.0
        %4686 = vmatpush1.msra.mxu0 0.0
        %4687 = vmatprep.subr.mxu0 0.0
        %4688 = vmatpush1.msra.mxu0 0.0
        %4689 = vmatprep.subr.mxu0 0.0
        %4690 = vmatpush1.msra.mxu0 0.0
        %4691 = vmatprep.subr.mxu0 0.0
        %4692 = vmatpush1.msra.mxu0 0.0
        %4693 = vmatprep.subr.mxu0 0.0
        %4694 = vmatpush1.msra.mxu0 0.0
        %4695 = vmatprep.subr.mxu0 0.0
        %4696 = vmatpush1.msra.mxu0 0.0
        %4697 = vmatprep.subr.mxu0 0.0
        %4698 = vmatpush1.msra.mxu0 0.0
        %4699 = vmatprep.subr.mxu0 0.0
        %4700 = vmatpush1.msra.mxu0 0.0
        %4701 = vmatprep.subr.mxu0 0.0
        %4702 = vmatpush1.msra.mxu0 0.0
        %4703 = vmatprep.subr.mxu0 0.0
        %4704 = vmatpush1.msra.mxu0 0.0
        %4705 = vmatprep.subr.mxu0 0.0
        %4706 = vmatpush1.msra.mxu0 0.0
        %4707 = vmatprep.subr.mxu0 0.0
        %4708 = vmatpush1.msra.mxu0 0.0
        %4709 = vmatprep.subr.mxu0 0.0
        %4710 = vmatpush1.msra.mxu0 0.0
        %4711 = vmatprep.mubr.f32.mxu0 0.0
        %4712 = vmatmul.mubr.f32.gmra.mrb[0].mxu0 %v4645
        %v4713 = vpop.f32.mrb[0].mxu0
        %v4714 = vadd.f32 0.0, %v4713
        %v4715 = vpop.f32.mrb[0].mxu0
        %v4716 = vadd.f32 0.0, %v4715
        %4717 = vdwg.mxu0
        %4718 = vmatprep.subr.mxu0 %v2161
        %4719 = vmatpush1.msra.mxu0 %v2159
        %4720 = vmatprep.subr.mxu0 0.0
        %4721 = vmatpush1.msra.mxu0 0.0
        %4722 = vmatprep.subr.mxu0 0.0
        %4723 = vmatpush1.msra.mxu0 0.0
        %4724 = vmatprep.subr.mxu0 0.0
        %4725 = vmatpush1.msra.mxu0 0.0
        %4726 = vmatprep.subr.mxu0 0.0
        %4727 = vmatpush1.msra.mxu0 0.0
        %4728 = vmatprep.subr.mxu0 0.0
        %4729 = vmatpush1.msra.mxu0 0.0
        %4730 = vmatprep.subr.mxu0 0.0
        %4731 = vmatpush1.msra.mxu0 0.0
        %4732 = vmatprep.subr.mxu0 0.0
        %4733 = vmatpush1.msra.mxu0 0.0
        %4734 = vmatprep.subr.mxu0 0.0
        %4735 = vmatpush1.msra.mxu0 0.0
        %4736 = vmatprep.subr.mxu0 0.0
        %4737 = vmatpush1.msra.mxu0 0.0
        %4738 = vmatprep.subr.mxu0 0.0
        %4739 = vmatpush1.msra.mxu0 0.0
        %4740 = vmatprep.subr.mxu0 0.0
        %4741 = vmatpush1.msra.mxu0 0.0
        %4742 = vmatprep.subr.mxu0 0.0
        %4743 = vmatpush1.msra.mxu0 0.0
        %4744 = vmatprep.subr.mxu0 0.0
        %4745 = vmatpush1.msra.mxu0 0.0
        %4746 = vmatprep.subr.mxu0 0.0
        %4747 = vmatpush1.msra.mxu0 0.0
        %4748 = vmatprep.subr.mxu0 0.0
        %4749 = vmatpush1.msra.mxu0 0.0
        %4750 = vmatprep.subr.mxu0 0.0
        %4751 = vmatpush1.msra.mxu0 0.0
        %4752 = vmatprep.subr.mxu0 0.0
        %4753 = vmatpush1.msra.mxu0 0.0
        %4754 = vmatprep.subr.mxu0 0.0
        %4755 = vmatpush1.msra.mxu0 0.0
        %4756 = vmatprep.subr.mxu0 0.0
        %4757 = vmatpush1.msra.mxu0 0.0
        %4758 = vmatprep.subr.mxu0 0.0
        %4759 = vmatpush1.msra.mxu0 0.0
        %4760 = vmatprep.subr.mxu0 0.0
        %4761 = vmatpush1.msra.mxu0 0.0
        %4762 = vmatprep.subr.mxu0 0.0
        %4763 = vmatpush1.msra.mxu0 0.0
        %4764 = vmatprep.subr.mxu0 0.0
        %4765 = vmatpush1.msra.mxu0 0.0
        %4766 = vmatprep.subr.mxu0 0.0
        %4767 = vmatpush1.msra.mxu0 0.0
        %4768 = vmatprep.subr.mxu0 0.0
        %4769 = vmatpush1.msra.mxu0 0.0
        %4770 = vmatprep.subr.mxu0 0.0
        %4771 = vmatpush1.msra.mxu0 0.0
        %4772 = vmatprep.subr.mxu0 0.0
        %4773 = vmatpush1.msra.mxu0 0.0
        %4774 = vmatprep.subr.mxu0 0.0
        %4775 = vmatpush1.msra.mxu0 0.0
        %4776 = vmatprep.subr.mxu0 0.0
        %4777 = vmatpush1.msra.mxu0 0.0
        %4778 = vmatprep.subr.mxu0 0.0
        %4779 = vmatpush1.msra.mxu0 0.0
        %4780 = vmatprep.subr.mxu0 0.0
        %4781 = vmatpush1.msra.mxu0 0.0
        %4782 = vmatprep.mubr.f32.mxu0 0.0
        %4783 = vmatmul.mubr.f32.gmra.mrb[0].mxu0 %v4645
        %v4784 = vpop.f32.mrb[0].mxu0
        %v4785 = vadd.f32 0.0, %v4784
        %v4786 = vpop.f32.mrb[0].mxu0
        %v4787 = vadd.f32 0.0, %v4786
        %4788 = vdwg.mxu0
        %4789 = vmatprep.subr.mxu0 %v2165
        %4790 = vmatpush1.msra.mxu0 %v2163
        %4791 = vmatprep.subr.mxu0 0.0
        %4792 = vmatpush1.msra.mxu0 0.0
        %4793 = vmatprep.subr.mxu0 0.0
        %4794 = vmatpush1.msra.mxu0 0.0
        %4795 = vmatprep.subr.mxu0 0.0
        %4796 = vmatpush1.msra.mxu0 0.0
        %4797 = vmatprep.subr.mxu0 0.0
        %4798 = vmatpush1.msra.mxu0 0.0
        %4799 = vmatprep.subr.mxu0 0.0
        %4800 = vmatpush1.msra.mxu0 0.0
        %4801 = vmatprep.subr.mxu0 0.0
        %4802 = vmatpush1.msra.mxu0 0.0
        %4803 = vmatprep.subr.mxu0 0.0
        %4804 = vmatpush1.msra.mxu0 0.0
        %4805 = vmatprep.subr.mxu0 0.0
        %4806 = vmatpush1.msra.mxu0 0.0
        %4807 = vmatprep.subr.mxu0 0.0
        %4808 = vmatpush1.msra.mxu0 0.0
        %4809 = vmatprep.subr.mxu0 0.0
        %4810 = vmatpush1.msra.mxu0 0.0
        %4811 = vmatprep.subr.mxu0 0.0
        %4812 = vmatpush1.msra.mxu0 0.0
        %4813 = vmatprep.subr.mxu0 0.0
        %4814 = vmatpush1.msra.mxu0 0.0
        %4815 = vmatprep.subr.mxu0 0.0
        %4816 = vmatpush1.msra.mxu0 0.0
        %4817 = vmatprep.subr.mxu0 0.0
        %4818 = vmatpush1.msra.mxu0 0.0
        %4819 = vmatprep.subr.mxu0 0.0
        %4820 = vmatpush1.msra.mxu0 0.0
        %4821 = vmatprep.subr.mxu0 0.0
        %4822 = vmatpush1.msra.mxu0 0.0
        %4823 = vmatprep.subr.mxu0 0.0
        %4824 = vmatpush1.msra.mxu0 0.0
        %4825 = vmatprep.subr.mxu0 0.0
        %4826 = vmatpush1.msra.mxu0 0.0
        %4827 = vmatprep.subr.mxu0 0.0
        %4828 = vmatpush1.msra.mxu0 0.0
        %4829 = vmatprep.subr.mxu0 0.0
        %4830 = vmatpush1.msra.mxu0 0.0
        %4831 = vmatprep.subr.mxu0 0.0
        %4832 = vmatpush1.msra.mxu0 0.0
        %4833 = vmatprep.subr.mxu0 0.0
        %4834 = vmatpush1.msra.mxu0 0.0
        %4835 = vmatprep.subr.mxu0 0.0
        %4836 = vmatpush1.msra.mxu0 0.0
        %4837 = vmatprep.subr.mxu0 0.0
        %4838 = vmatpush1.msra.mxu0 0.0
        %4839 = vmatprep.subr.mxu0 0.0
        %4840 = vmatpush1.msra.mxu0 0.0
        %4841 = vmatprep.subr.mxu0 0.0
        %4842 = vmatpush1.msra.mxu0 0.0
        %4843 = vmatprep.subr.mxu0 0.0
        %4844 = vmatpush1.msra.mxu0 0.0
        %4845 = vmatprep.subr.mxu0 0.0
        %4846 = vmatpush1.msra.mxu0 0.0
        %4847 = vmatprep.subr.mxu0 0.0
        %4848 = vmatpush1.msra.mxu0 0.0
        %4849 = vmatprep.subr.mxu0 0.0
        %4850 = vmatpush1.msra.mxu0 0.0
        %4851 = vmatprep.subr.mxu0 0.0
        %4852 = vmatpush1.msra.mxu0 0.0
        %4853 = vmatprep.mubr.f32.mxu0 0.0
        %4854 = vmatmul.mubr.f32.gmra.mrb[0].mxu0 %v4645
        %v4855 = vpop.f32.mrb[0].mxu0
        %v4856 = vadd.f32 0.0, %v4855
        %v4857 = vpop.f32.mrb[0].mxu0
        %v4858 = vadd.f32 0.0, %v4857
        %4859 = vdwg.mxu0
        %4860 = vmatprep.subr.mxu0 %v2169
        %4861 = vmatpush1.msra.mxu0 %v2167
        %4862 = vmatprep.subr.mxu0 0.0
        %4863 = vmatpush1.msra.mxu0 0.0
        %4864 = vmatprep.subr.mxu0 0.0
        %4865 = vmatpush1.msra.mxu0 0.0
        %4866 = vmatprep.subr.mxu0 0.0
        %4867 = vmatpush1.msra.mxu0 0.0
        %4868 = vmatprep.subr.mxu0 0.0
        %4869 = vmatpush1.msra.mxu0 0.0
        %4870 = vmatprep.subr.mxu0 0.0
        %4871 = vmatpush1.msra.mxu0 0.0
        %4872 = vmatprep.subr.mxu0 0.0
        %4873 = vmatpush1.msra.mxu0 0.0
        %4874 = vmatprep.subr.mxu0 0.0
        %4875 = vmatpush1.msra.mxu0 0.0
        %4876 = vmatprep.subr.mxu0 0.0
        %4877 = vmatpush1.msra.mxu0 0.0
        %4878 = vmatprep.subr.mxu0 0.0
        %4879 = vmatpush1.msra.mxu0 0.0
        %4880 = vmatprep.subr.mxu0 0.0
        %4881 = vmatpush1.msra.mxu0 0.0
        %4882 = vmatprep.subr.mxu0 0.0
        %4883 = vmatpush1.msra.mxu0 0.0
        %4884 = vmatprep.subr.mxu0 0.0
        %4885 = vmatpush1.msra.mxu0 0.0
        %4886 = vmatprep.subr.mxu0 0.0
        %4887 = vmatpush1.msra.mxu0 0.0
        %4888 = vmatprep.subr.mxu0 0.0
        %4889 = vmatpush1.msra.mxu0 0.0
        %4890 = vmatprep.subr.mxu0 0.0
        %4891 = vmatpush1.msra.mxu0 0.0
        %4892 = vmatprep.subr.mxu0 0.0
        %4893 = vmatpush1.msra.mxu0 0.0
        %4894 = vmatprep.subr.mxu0 0.0
        %4895 = vmatpush1.msra.mxu0 0.0
        %4896 = vmatprep.subr.mxu0 0.0
        %4897 = vmatpush1.msra.mxu0 0.0
        %4898 = vmatprep.subr.mxu0 0.0
        %4899 = vmatpush1.msra.mxu0 0.0
        %4900 = vmatprep.subr.mxu0 0.0
        %4901 = vmatpush1.msra.mxu0 0.0
        %4902 = vmatprep.subr.mxu0 0.0
        %4903 = vmatpush1.msra.mxu0 0.0
        %4904 = vmatprep.subr.mxu0 0.0
        %4905 = vmatpush1.msra.mxu0 0.0
        %4906 = vmatprep.subr.mxu0 0.0
        %4907 = vmatpush1.msra.mxu0 0.0
        %4908 = vmatprep.subr.mxu0 0.0
        %4909 = vmatpush1.msra.mxu0 0.0
        %4910 = vmatprep.subr.mxu0 0.0
        %4911 = vmatpush1.msra.mxu0 0.0
        %4912 = vmatprep.subr.mxu0 0.0
        %4913 = vmatpush1.msra.mxu0 0.0
        %4914 = vmatprep.subr.mxu0 0.0
        %4915 = vmatpush1.msra.mxu0 0.0
        %4916 = vmatprep.subr.mxu0 0.0
        %4917 = vmatpush1.msra.mxu0 0.0
        %4918 = vmatprep.subr.mxu0 0.0
        %4919 = vmatpush1.msra.mxu0 0.0
        %4920 = vmatprep.subr.mxu0 0.0
        %4921 = vmatpush1.msra.mxu0 0.0
        %4922 = vmatprep.subr.mxu0 0.0
        %4923 = vmatpush1.msra.mxu0 0.0
        %4924 = vmatprep.mubr.f32.mxu0 0.0
        %4925 = vmatmul.mubr.f32.gmra.mrb[0].mxu0 %v4645
        %v4926 = vpop.f32.mrb[0].mxu0
        %v4927 = vadd.f32 0.0, %v4926
        %v4928 = vpop.f32.mrb[0].mxu0
        %v4929 = vadd.f32 0.0, %v4928
        %4930 = vdwg.mxu0
        %v4932 = vsel %vm2150, %v4643, 0
        %4934 = vmatprep.subr.mxu0 %v2157
        %4935 = vmatpush1.msra.mxu0 %v2155
        %4936 = vmatprep.subr.mxu0 0.0
        %4937 = vmatpush1.msra.mxu0 0.0
        %4938 = vmatprep.subr.mxu0 0.0
        %4939 = vmatpush1.msra.mxu0 0.0
        %4940 = vmatprep.subr.mxu0 0.0
        %4941 = vmatpush1.msra.mxu0 0.0
        %4942 = vmatprep.subr.mxu0 0.0
        %4943 = vmatpush1.msra.mxu0 0.0
        %4944 = vmatprep.subr.mxu0 0.0
        %4945 = vmatpush1.msra.mxu0 0.0
        %4946 = vmatprep.subr.mxu0 0.0
        %4947 = vmatpush1.msra.mxu0 0.0
        %4948 = vmatprep.subr.mxu0 0.0
        %4949 = vmatpush1.msra.mxu0 0.0
        %4950 = vmatprep.subr.mxu0 0.0
        %4951 = vmatpush1.msra.mxu0 0.0
        %4952 = vmatprep.subr.mxu0 0.0
        %4953 = vmatpush1.msra.mxu0 0.0
        %4954 = vmatprep.subr.mxu0 0.0
        %4955 = vmatpush1.msra.mxu0 0.0
        %4956 = vmatprep.subr.mxu0 0.0
        %4957 = vmatpush1.msra.mxu0 0.0
        %4958 = vmatprep.subr.mxu0 0.0
        %4959 = vmatpush1.msra.mxu0 0.0
        %4960 = vmatprep.subr.mxu0 0.0
        %4961 = vmatpush1.msra.mxu0 0.0
        %4962 = vmatprep.subr.mxu0 0.0
        %4963 = vmatpush1.msra.mxu0 0.0
        %4964 = vmatprep.subr.mxu0 0.0
        %4965 = vmatpush1.msra.mxu0 0.0
        %4966 = vmatprep.subr.mxu0 0.0
        %4967 = vmatpush1.msra.mxu0 0.0
        %4968 = vmatprep.subr.mxu0 0.0
        %4969 = vmatpush1.msra.mxu0 0.0
        %4970 = vmatprep.subr.mxu0 0.0
        %4971 = vmatpush1.msra.mxu0 0.0
        %4972 = vmatprep.subr.mxu0 0.0
        %4973 = vmatpush1.msra.mxu0 0.0
        %4974 = vmatprep.subr.mxu0 0.0
        %4975 = vmatpush1.msra.mxu0 0.0
        %4976 = vmatprep.subr.mxu0 0.0
        %4977 = vmatpush1.msra.mxu0 0.0
        %4978 = vmatprep.subr.mxu0 0.0
        %4979 = vmatpush1.msra.mxu0 0.0
        %4980 = vmatprep.subr.mxu0 0.0
        %4981 = vmatpush1.msra.mxu0 0.0
        %4982 = vmatprep.subr.mxu0 0.0
        %4983 = vmatpush1.msra.mxu0 0.0
        %4984 = vmatprep.subr.mxu0 0.0
        %4985 = vmatpush1.msra.mxu0 0.0
        %4986 = vmatprep.subr.mxu0 0.0
        %4987 = vmatpush1.msra.mxu0 0.0
        %4988 = vmatprep.subr.mxu0 0.0
        %4989 = vmatpush1.msra.mxu0 0.0
        %4990 = vmatprep.subr.mxu0 0.0
        %4991 = vmatpush1.msra.mxu0 0.0
        %4992 = vmatprep.subr.mxu0 0.0
        %4993 = vmatpush1.msra.mxu0 0.0
        %4994 = vmatprep.subr.mxu0 0.0
        %4995 = vmatpush1.msra.mxu0 0.0
        %4996 = vmatprep.subr.mxu0 0.0
        %4997 = vmatpush1.msra.mxu0 0.0
        %4998 = vmatprep.mubr.f32.mxu0 0.0
        %4999 = vmatmul.mubr.f32.gmra.mrb[0].mxu0 %v4932
        %v5000 = vpop.f32.mrb[0].mxu0
        %v5001 = vadd.f32 0.0, %v5000
        %v5002 = vpop.f32.mrb[0].mxu0
        %v5003 = vadd.f32 0.0, %v5002
        %5004 = vdwg.mxu0
        %5005 = vmatprep.subr.mxu0 %v2161
        %5006 = vmatpush1.msra.mxu0 %v2159
        %5007 = vmatprep.subr.mxu0 0.0
        %5008 = vmatpush1.msra.mxu0 0.0
        %5009 = vmatprep.subr.mxu0 0.0
        %5010 = vmatpush1.msra.mxu0 0.0
        %5011 = vmatprep.subr.mxu0 0.0
        %5012 = vmatpush1.msra.mxu0 0.0
        %5013 = vmatprep.subr.mxu0 0.0
        %5014 = vmatpush1.msra.mxu0 0.0
        %5015 = vmatprep.subr.mxu0 0.0
        %5016 = vmatpush1.msra.mxu0 0.0
        %5017 = vmatprep.subr.mxu0 0.0
        %5018 = vmatpush1.msra.mxu0 0.0
        %5019 = vmatprep.subr.mxu0 0.0
        %5020 = vmatpush1.msra.mxu0 0.0
        %5021 = vmatprep.subr.mxu0 0.0
        %5022 = vmatpush1.msra.mxu0 0.0
        %5023 = vmatprep.subr.mxu0 0.0
        %5024 = vmatpush1.msra.mxu0 0.0
        %5025 = vmatprep.subr.mxu0 0.0
        %5026 = vmatpush1.msra.mxu0 0.0
        %5027 = vmatprep.subr.mxu0 0.0
        %5028 = vmatpush1.msra.mxu0 0.0
        %5029 = vmatprep.subr.mxu0 0.0
        %5030 = vmatpush1.msra.mxu0 0.0
        %5031 = vmatprep.subr.mxu0 0.0
        %5032 = vmatpush1.msra.mxu0 0.0
        %5033 = vmatprep.subr.mxu0 0.0
        %5034 = vmatpush1.msra.mxu0 0.0
        %5035 = vmatprep.subr.mxu0 0.0
        %5036 = vmatpush1.msra.mxu0 0.0
        %5037 = vmatprep.subr.mxu0 0.0
        %5038 = vmatpush1.msra.mxu0 0.0
        %5039 = vmatprep.subr.mxu0 0.0
        %5040 = vmatpush1.msra.mxu0 0.0
        %5041 = vmatprep.subr.mxu0 0.0
        %5042 = vmatpush1.msra.mxu0 0.0
        %5043 = vmatprep.subr.mxu0 0.0
        %5044 = vmatpush1.msra.mxu0 0.0
        %5045 = vmatprep.subr.mxu0 0.0
        %5046 = vmatpush1.msra.mxu0 0.0
        %5047 = vmatprep.subr.mxu0 0.0
        %5048 = vmatpush1.msra.mxu0 0.0
        %5049 = vmatprep.subr.mxu0 0.0
        %5050 = vmatpush1.msra.mxu0 0.0
        %5051 = vmatprep.subr.mxu0 0.0
        %5052 = vmatpush1.msra.mxu0 0.0
        %5053 = vmatprep.subr.mxu0 0.0
        %5054 = vmatpush1.msra.mxu0 0.0
        %5055 = vmatprep.subr.mxu0 0.0
        %5056 = vmatpush1.msra.mxu0 0.0
        %5057 = vmatprep.subr.mxu0 0.0
        %5058 = vmatpush1.msra.mxu0 0.0
        %5059 = vmatprep.subr.mxu0 0.0
        %5060 = vmatpush1.msra.mxu0 0.0
        %5061 = vmatprep.subr.mxu0 0.0
        %5062 = vmatpush1.msra.mxu0 0.0
        %5063 = vmatprep.subr.mxu0 0.0
        %5064 = vmatpush1.msra.mxu0 0.0
        %5065 = vmatprep.subr.mxu0 0.0
        %5066 = vmatpush1.msra.mxu0 0.0
        %5067 = vmatprep.subr.mxu0 0.0
        %5068 = vmatpush1.msra.mxu0 0.0
        %5069 = vmatprep.mubr.f32.mxu0 0.0
        %5070 = vmatmul.mubr.f32.gmra.mrb[0].mxu0 %v4932
        %v5071 = vpop.f32.mrb[0].mxu0
        %v5072 = vadd.f32 0.0, %v5071
        %v5073 = vpop.f32.mrb[0].mxu0
        %v5074 = vadd.f32 0.0, %v5073
        %5075 = vdwg.mxu0
        %5076 = vmatprep.subr.mxu0 %v2165
        %5077 = vmatpush1.msra.mxu0 %v2163
        %5078 = vmatprep.subr.mxu0 0.0
        %5079 = vmatpush1.msra.mxu0 0.0
        %5080 = vmatprep.subr.mxu0 0.0
        %5081 = vmatpush1.msra.mxu0 0.0
        %5082 = vmatprep.subr.mxu0 0.0
        %5083 = vmatpush1.msra.mxu0 0.0
        %5084 = vmatprep.subr.mxu0 0.0
        %5085 = vmatpush1.msra.mxu0 0.0
        %5086 = vmatprep.subr.mxu0 0.0
        %5087 = vmatpush1.msra.mxu0 0.0
        %5088 = vmatprep.subr.mxu0 0.0
        %5089 = vmatpush1.msra.mxu0 0.0
        %5090 = vmatprep.subr.mxu0 0.0
        %5091 = vmatpush1.msra.mxu0 0.0
        %5092 = vmatprep.subr.mxu0 0.0
        %5093 = vmatpush1.msra.mxu0 0.0
        %5094 = vmatprep.subr.mxu0 0.0
        %5095 = vmatpush1.msra.mxu0 0.0
        %5096 = vmatprep.subr.mxu0 0.0
        %5097 = vmatpush1.msra.mxu0 0.0
        %5098 = vmatprep.subr.mxu0 0.0
        %5099 = vmatpush1.msra.mxu0 0.0
        %5100 = vmatprep.subr.mxu0 0.0
        %5101 = vmatpush1.msra.mxu0 0.0
        %5102 = vmatprep.subr.mxu0 0.0
        %5103 = vmatpush1.msra.mxu0 0.0
        %5104 = vmatprep.subr.mxu0 0.0
        %5105 = vmatpush1.msra.mxu0 0.0
        %5106 = vmatprep.subr.mxu0 0.0
        %5107 = vmatpush1.msra.mxu0 0.0
        %5108 = vmatprep.subr.mxu0 0.0
        %5109 = vmatpush1.msra.mxu0 0.0
        %5110 = vmatprep.subr.mxu0 0.0
        %5111 = vmatpush1.msra.mxu0 0.0
        %5112 = vmatprep.subr.mxu0 0.0
        %5113 = vmatpush1.msra.mxu0 0.0
        %5114 = vmatprep.subr.mxu0 0.0
        %5115 = vmatpush1.msra.mxu0 0.0
        %5116 = vmatprep.subr.mxu0 0.0
        %5117 = vmatpush1.msra.mxu0 0.0
        %5118 = vmatprep.subr.mxu0 0.0
        %5119 = vmatpush1.msra.mxu0 0.0
        %5120 = vmatprep.subr.mxu0 0.0
        %5121 = vmatpush1.msra.mxu0 0.0
        %5122 = vmatprep.subr.mxu0 0.0
        %5123 = vmatpush1.msra.mxu0 0.0
        %5124 = vmatprep.subr.mxu0 0.0
        %5125 = vmatpush1.msra.mxu0 0.0
        %5126 = vmatprep.subr.mxu0 0.0
        %5127 = vmatpush1.msra.mxu0 0.0
        %5128 = vmatprep.subr.mxu0 0.0
        %5129 = vmatpush1.msra.mxu0 0.0
        %5130 = vmatprep.subr.mxu0 0.0
        %5131 = vmatpush1.msra.mxu0 0.0
        %5132 = vmatprep.subr.mxu0 0.0
        %5133 = vmatpush1.msra.mxu0 0.0
        %5134 = vmatprep.subr.mxu0 0.0
        %5135 = vmatpush1.msra.mxu0 0.0
        %5136 = vmatprep.subr.mxu0 0.0
        %5137 = vmatpush1.msra.mxu0 0.0
        %5138 = vmatprep.subr.mxu0 0.0
        %5139 = vmatpush1.msra.mxu0 0.0
        %5140 = vmatprep.mubr.f32.mxu0 0.0
        %5141 = vmatmul.mubr.f32.gmra.mrb[0].mxu0 %v4932
        %v5142 = vpop.f32.mrb[0].mxu0
        %v5143 = vadd.f32 0.0, %v5142
        %v5144 = vpop.f32.mrb[0].mxu0
        %v5145 = vadd.f32 0.0, %v5144
        %5146 = vdwg.mxu0
        %5147 = vmatprep.subr.mxu0 %v2169
        %5148 = vmatpush1.msra.mxu0 %v2167
        %5149 = vmatprep.subr.mxu0 0.0
        %5150 = vmatpush1.msra.mxu0 0.0
        %5151 = vmatprep.subr.mxu0 0.0
        %5152 = vmatpush1.msra.mxu0 0.0
        %5153 = vmatprep.subr.mxu0 0.0
        %5154 = vmatpush1.msra.mxu0 0.0
        %5155 = vmatprep.subr.mxu0 0.0
        %5156 = vmatpush1.msra.mxu0 0.0
        %5157 = vmatprep.subr.mxu0 0.0
        %5158 = vmatpush1.msra.mxu0 0.0
        %5159 = vmatprep.subr.mxu0 0.0
        %5160 = vmatpush1.msra.mxu0 0.0
        %5161 = vmatprep.subr.mxu0 0.0
        %5162 = vmatpush1.msra.mxu0 0.0
        %5163 = vmatprep.subr.mxu0 0.0
        %5164 = vmatpush1.msra.mxu0 0.0
        %5165 = vmatprep.subr.mxu0 0.0
        %5166 = vmatpush1.msra.mxu0 0.0
        %5167 = vmatprep.subr.mxu0 0.0
        %5168 = vmatpush1.msra.mxu0 0.0
        %5169 = vmatprep.subr.mxu0 0.0
        %5170 = vmatpush1.msra.mxu0 0.0
        %5171 = vmatprep.subr.mxu0 0.0
        %5172 = vmatpush1.msra.mxu0 0.0
        %5173 = vmatprep.subr.mxu0 0.0
        %5174 = vmatpush1.msra.mxu0 0.0
        %5175 = vmatprep.subr.mxu0 0.0
        %5176 = vmatpush1.msra.mxu0 0.0
        %5177 = vmatprep.subr.mxu0 0.0
        %5178 = vmatpush1.msra.mxu0 0.0
        %5179 = vmatprep.subr.mxu0 0.0
        %5180 = vmatpush1.msra.mxu0 0.0
        %5181 = vmatprep.subr.mxu0 0.0
        %5182 = vmatpush1.msra.mxu0 0.0
        %5183 = vmatprep.subr.mxu0 0.0
        %5184 = vmatpush1.msra.mxu0 0.0
        %5185 = vmatprep.subr.mxu0 0.0
        %5186 = vmatpush1.msra.mxu0 0.0
        %5187 = vmatprep.subr.mxu0 0.0
        %5188 = vmatpush1.msra.mxu0 0.0
        %5189 = vmatprep.subr.mxu0 0.0
        %5190 = vmatpush1.msra.mxu0 0.0
        %5191 = vmatprep.subr.mxu0 0.0
        %5192 = vmatpush1.msra.mxu0 0.0
        %5193 = vmatprep.subr.mxu0 0.0
        %5194 = vmatpush1.msra.mxu0 0.0
        %5195 = vmatprep.subr.mxu0 0.0
        %5196 = vmatpush1.msra.mxu0 0.0
        %5197 = vmatprep.subr.mxu0 0.0
        %5198 = vmatpush1.msra.mxu0 0.0
        %5199 = vmatprep.subr.mxu0 0.0
        %5200 = vmatpush1.msra.mxu0 0.0
        %5201 = vmatprep.subr.mxu0 0.0
        %5202 = vmatpush1.msra.mxu0 0.0
        %5203 = vmatprep.subr.mxu0 0.0
        %5204 = vmatpush1.msra.mxu0 0.0
        %5205 = vmatprep.subr.mxu0 0.0
        %5206 = vmatpush1.msra.mxu0 0.0
        %5207 = vmatprep.subr.mxu0 0.0
        %5208 = vmatpush1.msra.mxu0 0.0
        %5209 = vmatprep.subr.mxu0 0.0
        %5210 = vmatpush1.msra.mxu0 0.0
        %5211 = vmatprep.mubr.f32.mxu0 0.0
        %5212 = vmatmul.mubr.f32.gmra.mrb[0].mxu0 %v4932
        %v5213 = vpop.f32.mrb[0].mxu0
        %v5214 = vadd.f32 0.0, %v5213
        %v5215 = vpop.f32.mrb[0].mxu0
        %v5216 = vadd.f32 0.0, %v5215
        %5217 = vdwg.mxu0
        %v5218 = vmul.f32 %v4714, %v3825
        %v5219 = vmul.f32 %v4716, %v3827
        %v5220 = vmul.f32 %v4785, %v3896
        %v5221 = vmul.f32 %v4787, %v3898
        %v5222 = vmul.f32 %v4856, %v3967
        %v5223 = vmul.f32 %v4858, %v3969
        %v5224 = vmul.f32 %v4927, %v4038
        %v5225 = vmul.f32 %v4929, %v4040
        %v5226 = vmul.f32 %v5001, %v3063
        %v5227 = vmul.f32 %v5003, %v3064
        %v5228 = vmul.f32 %v5072, %v3065
        %v5229 = vmul.f32 %v5074, %v3066
        %v5230 = vmul.f32 %v5143, %v3067
        %v5231 = vmul.f32 %v5145, %v3068
        %v5232 = vmul.f32 %v5214, %v3069
        %v5233 = vmul.f32 %v5216, %v3070
        %v5234 = vadd.f32 %v5218, %v5226
        %v5235 = vadd.f32 %v5219, %v5227
        %v5236 = vadd.f32 %v5220, %v5228
        %v5237 = vadd.f32 %v5221, %v5229
        %v5238 = vadd.f32 %v5222, %v5230
        %v5239 = vadd.f32 %v5223, %v5231
        %v5240 = vadd.f32 %v5224, %v5232
        %v5241 = vadd.f32 %v5225, %v5233
        %v5242 = vrot.slane %v5234, 4
        %v5243 = vadd.f32 %v5234, %v5242
        %v5244 = vrot.slane %v5243, 2
        %v5245 = vadd.f32 %v5243, %v5244
        %v5246 = vrot.slane %v5245, 1
        %v5247 = vadd.f32 %v5245, %v5246
        %v5248 = vrot.slane %v5235, 4
        %v5249 = vadd.f32 %v5235, %v5248
        %v5250 = vrot.slane %v5249, 2
        %v5251 = vadd.f32 %v5249, %v5250
        %v5252 = vrot.slane %v5251, 1
        %v5253 = vadd.f32 %v5251, %v5252
        %v5254 = vrot.slane %v5236, 4
        %v5255 = vadd.f32 %v5236, %v5254
        %v5256 = vrot.slane %v5255, 2
        %v5257 = vadd.f32 %v5255, %v5256
        %v5258 = vrot.slane %v5257, 1
        %v5259 = vadd.f32 %v5257, %v5258
        %v5260 = vrot.slane %v5237, 4
        %v5261 = vadd.f32 %v5237, %v5260
        %v5262 = vrot.slane %v5261, 2
        %v5263 = vadd.f32 %v5261, %v5262
        %v5264 = vrot.slane %v5263, 1
        %v5265 = vadd.f32 %v5263, %v5264
        %v5266 = vrot.slane %v5238, 4
        %v5267 = vadd.f32 %v5238, %v5266
        %v5268 = vrot.slane %v5267, 2
        %v5269 = vadd.f32 %v5267, %v5268
        %v5270 = vrot.slane %v5269, 1
        %v5271 = vadd.f32 %v5269, %v5270
        %v5272 = vrot.slane %v5239, 4
        %v5273 = vadd.f32 %v5239, %v5272
        %v5274 = vrot.slane %v5273, 2
        %v5275 = vadd.f32 %v5273, %v5274
        %v5276 = vrot.slane %v5275, 1
        %v5277 = vadd.f32 %v5275, %v5276
        %v5278 = vrot.slane %v5240, 4
        %v5279 = vadd.f32 %v5240, %v5278
        %v5280 = vrot.slane %v5279, 2
        %v5281 = vadd.f32 %v5279, %v5280
        %v5282 = vrot.slane %v5281, 1
        %v5283 = vadd.f32 %v5281, %v5282
        %v5284 = vrot.slane %v5241, 4
        %v5285 = vadd.f32 %v5241, %v5284
        %v5286 = vrot.slane %v5285, 2
        %v5287 = vadd.f32 %v5285, %v5286
        %v5288 = vrot.slane %v5287, 1
        %v5289 = vadd.f32 %v5287, %v5288
        %v5290 = vxor.u32 %v5247, 2147483648
        %v5291 = vxor.u32 %v5253, 2147483648
        %v5292 = vxor.u32 %v5259, 2147483648
        %v5293 = vxor.u32 %v5265, 2147483648
        %v5294 = vxor.u32 %v5271, 2147483648
        %v5295 = vxor.u32 %v5277, 2147483648
        %v5296 = vxor.u32 %v5283, 2147483648
        %v5297 = vxor.u32 %v5289, 2147483648
        %v5298 = vmul.f32 %v5290, 1.442695
        %v5299 = vpow.pop %v5298
        %v5300 = vmul.f32 %v5291, 1.442695
        %v5301 = vpow.pop %v5300
        %v5302 = vmul.f32 %v5292, 1.442695
        %v5303 = vpow.pop %v5302
        %v5304 = vmul.f32 %v5293, 1.442695
        %v5305 = vpow.pop %v5304
        %v5306 = vmul.f32 %v5294, 1.442695
        %v5307 = vpow.pop %v5306
        %v5308 = vmul.f32 %v5295, 1.442695
        %v5309 = vpow.pop %v5308
        %v5310 = vmul.f32 %v5296, 1.442695
        %v5311 = vpow.pop %v5310
        %v5312 = vmul.f32 %v5297, 1.442695
        %v5313 = vpow.pop %v5312
        %v5314 = vadd.f32 %v5299, 1.0
        %v5315 = vadd.f32 %v5301, 1.0
        %v5316 = vadd.f32 %v5303, 1.0
        %v5317 = vadd.f32 %v5305, 1.0
        %v5318 = vadd.f32 %v5307, 1.0
        %v5319 = vadd.f32 %v5309, 1.0
        %v5320 = vadd.f32 %v5311, 1.0
        %v5321 = vadd.f32 %v5313, 1.0
        %v5322 = vrcp.pop %v5314
        %v5323 = vmul.f32 1.0, %v5322
        %v5324 = vrcp.pop %v5315
        %v5325 = vmul.f32 1.0, %v5324
        %v5326 = vrcp.pop %v5316
        %v5327 = vmul.f32 1.0, %v5326
        %v5328 = vrcp.pop %v5317
        %v5329 = vmul.f32 1.0, %v5328
        %v5330 = vrcp.pop %v5318
        %v5331 = vmul.f32 1.0, %v5330
        %v5332 = vrcp.pop %v5319
        %v5333 = vmul.f32 1.0, %v5332
        %v5334 = vrcp.pop %v5320
        %v5335 = vmul.f32 1.0, %v5334
        %v5336 = vrcp.pop %v5321
        %v5337 = vmul.f32 1.0, %v5336
        %v5338 = vmul.f32 %v499, %v5323
        %v5339 = vmul.f32 %v500, %v5325
        %v5340 = vmul.f32 %v501, %v5327
        %v5341 = vmul.f32 %v502, %v5329
        %v5342 = vmul.f32 %v503, %v5331
        %v5343 = vmul.f32 %v504, %v5333
        %v5344 = vmul.f32 %v505, %v5335
        %v5345 = vmul.f32 %v506, %v5337
        %5346 = vst [vmem:[%s496] sm:$0xff] %v5338
        %5347 = vst [vmem:[%s496 + $0x8] sm:$0xff] %v5339
        %5348 = vst [vmem:[%s496 + $0x10] sm:$0xff] %v5340
        %5349 = vst [vmem:[%s496 + $0x18] sm:$0xff] %v5341
        %5350 = vst [vmem:[%s496 + $0x20] sm:$0xff] %v5342
        %5351 = vst [vmem:[%s496 + $0x28] sm:$0xff] %v5343
        %5352 = vst [vmem:[%s496 + $0x30] sm:$0xff] %v5344
        %5353 = vst [vmem:[%s496 + $0x38] sm:$0xff] %v5345
        %s5354 = sand.u32 %s255, 1
        %s5355 = scalar_lea.sflag [#allocation4], %s5354
        %s5356 = sand.u32 %s255, 1
        %s5357 = smul.addr %s5356, 64
        %s5358 = scalar_lea.vmem [#allocation19], %s5357
        // Predicated region
        $region101: #{_lambda_.1} parent=59 // pred_check
          %p5359 = pneg %p265
        $region102: #{_lambda_.1} parent=59 // pred_check_branch
          %5361 = sbr.rel (%p5359) target = $region104
        $region103: #{_lambda_.1} parent=59 // pred_region
          %s5362 = smul.u32 8, %s32
          %s5364 = ssub.s32 1024, 1024
          %5365 = vsyncadd %s5355, %s5364
          %s5366 = smul.addr %s5362, 128
          %s5367 = scalar_lea.hbm %s10, %s5366
          %s5369 = sshll.u32 %s5358, 4
          %s5370 = int_to_ptr.vmem [resolvable:$true] %s5369
          %5372 = dma.vmem_to_hbm [thread:$0]  %s5370, 1024, %s5367, %s5355
        $region104: #{_lambda_.1} parent=59 // pred_fallthru
          _
      $region60: #{_lambda_.1} parent=5 // pred_fallthru
        _
      %p5373 = scmp.le.s32.totalorder 2, %s27
      // Predicated region
      $region105: #{_lambda_.1} parent=5 // pred_check
        %p5374 = pneg %p5373
      $region106: #{_lambda_.1} parent=5 // pred_check_branch
        %5376 = sbr.rel (%p5374) target = $region108
      $region107: #{_lambda_.1} parent=5 // pred_region
        %s5377 = ssub.s32 %s27, 2
        // Predicated region
        $region109: #{_lambda_.1} parent=107 // pred_check
          %p5378 = pneg %p271
        $region110: #{_lambda_.1} parent=107 // pred_check_branch
          %5380 = sbr.rel (%p5378) target = $region112
        $region111: #{_lambda_.1} parent=107 // pred_region
          %s5381 = sand.u32 %s256, 1
          %s5382 = scalar_lea.sflag [#allocation4], %s5381
          %s5383 = sand.u32 %s256, 1
          %s5384 = smul.addr %s5383, 64
          %s5385 = scalar_lea.vmem [#allocation19], %s5384
          %5386 = dma.done %s5382, 1024
        $region112: #{_lambda_.1} parent=107 // pred_fallthru
          _
      $region108: #{_lambda_.1} parent=5 // pred_fallthru
        _
    $region6: #{_lambda_.1} parent=1 // loop_footer
      %s31 = sadd.s32 1, %s27
    $region7: #{_lambda_.1} parent=1 // loop_footer_branch
      %26 = sbr.rel target = $region3
    $region8: #{_lambda_.1} parent=1 // loop_exit
      _
    %5387 = vsyncpa [#allocation3], 1
    %s5388 = scalar_lea.sflag [#allocation3], 1
    %5389 = vsyncpa %s5388, 1
    %5390 = vsyncpa [#allocation6], 1
    %5391 = vsyncpa [#allocation9], 1
    %5392 = vsyncpa [#allocation12], 1
    %5393 = vsyncpa [#allocation15], 1
    %5394 = vsyncpa [#allocation18], 1
    %5395 = vsyncpa [#allocation4], 1
    %s5396 = scalar_lea.sflag [#allocation4], 1
    %5397 = vsyncpa %s5396, 1

</llo_original>
